<compile_context>
chip_gen: v6e
topology: v6e:2x2x1
jax: 0.10.0
libtpu: 0.0.40
codegen_flags: <defaults>
</compile_context>

<pallas_src>
import jax
import jax.numpy as jnp
from jax.experimental import pallas as pl
from jax.experimental.pallas import tpu as pltpu


def _round_up(x, m):
    return (x + m - 1) // m * m


# ----------------------------------------------------------------------------
# Pallas kernels
# ----------------------------------------------------------------------------
def conv_pool_relu_kernel(p_ref, w_ref, b_ref, o_ref, slab_ref):
    """Fused conv(as ONE matmul) -> max_pool(2x2) -> ReLU, channel-major output.

    p_ref:    (4, Kp, TP) bf16  im2col patches; axis 0 = 2x2 pool-window pos
    w_ref:    (Cp, Kp)    bf16  flattened conv weights (zero-padded)
    b_ref:    (Cp, 1)     f32   conv bias (zero-padded)
    o_ref:    (Cp, TP)    f32   pooled + ReLU'd activations (lane-dense in P)
    slab_ref: (Kp, 4*TP)  bf16  VMEM scratch for the single-matmul slab
    """
    tp = o_ref.shape[1]
    # Put the four pool-window positions side by side (128-aligned lane
    # offsets) so the whole window is covered by a single MXU matmul.
    for d in range(4):
        slab_ref[:, d * tp:(d + 1) * tp] = p_ref[d]
    s = jnp.dot(w_ref[...], slab_ref[...],
                preferred_element_type=jnp.float32)               # (Cp, 4*TP)
    # 2x2 max-pool = max over the four lane-aligned slices.
    m = jnp.maximum(jnp.maximum(s[:, 0 * tp:1 * tp], s[:, 1 * tp:2 * tp]),
                    jnp.maximum(s[:, 2 * tp:3 * tp], s[:, 3 * tp:4 * tp]))
    # bias is constant over the pool window -> add after the max; ReLU last.
    o_ref[...] = jnp.maximum(m + b_ref[...], 0.0)


def mlp_head_kernel(x_ref, w1_ref, b1_ref, w2_ref, b2_ref, o_ref):
    """Fused fc1 -> ReLU -> fc2 -> log_softmax (f32 accum / elementwise).

    x_ref:  (TN, 320) bf16, w1_ref: (320, Hp) bf16, b1_ref: (1, Hp) f32
    w2_ref: (Hp, NC)  bf16, b2_ref: (1, NC) f32,   o_ref:  (TN, NC) f32
    """
    h = jnp.dot(x_ref[...], w1_ref[...], preferred_element_type=jnp.float32)
    h = jnp.maximum(h + b1_ref[...], 0.0)
    z = jnp.dot(h.astype(jnp.bfloat16), w2_ref[...],
                preferred_element_type=jnp.float32) + b2_ref[...]
    zm = jnp.max(z, axis=-1, keepdims=True)
    e = jnp.exp(z - zm)
    o_ref[...] = z - zm - jnp.log(jnp.sum(e, axis=-1, keepdims=True))


# ----------------------------------------------------------------------------
# Host-side glue: im2col grouped by pool-window position (channel-major)
# ----------------------------------------------------------------------------
def _im2col_pool_cmajor(x_cm, ksize, hp, wp):
    """x_cm: (Cin, N, H, W) -> (4, Cin*K*K, N*hp*wp).

    Row order (ci, kh, kw) matches PyTorch weight.reshape(Cout, Cin*K*K);
    column order is (n, hp, wp)."""
    cin, n, _, _ = x_cm.shape
    p = n * hp * wp
    cols = []
    for ci in range(cin):
        for kh in range(ksize):
            for kw in range(ksize):
                win = x_cm[ci, :, kh:kh + 2 * hp, kw:kw + 2 * wp]   # (N,2hp,2wp)
                win = win.reshape(n, hp, 2, wp, 2).transpose(2, 4, 0, 1, 3)
                cols.append(win.reshape(4, p))                       # (4, P)
    return jnp.stack(cols, axis=1)                                   # (4,CKK,P)


# ----------------------------------------------------------------------------
# pallas_call wrappers
# ----------------------------------------------------------------------------
def conv_pool_relu_layer(x_cm, w_oihw, b, *, tp_max=512):
    """conv(k=5, valid) -> max_pool(2) -> relu on channel-major activations."""
    cin, n, h, w = x_cm.shape
    cout, _, ksize, _ = w_oihw.shape
    ho, wo = h - ksize + 1, w - ksize + 1
    hp, wp = ho // 2, wo // 2
    p = n * hp * wp
    ckk = cin * ksize * ksize

    kp = _round_up(ckk, 128)          # lane-friendly contraction dim
    cp = _round_up(cout, 8)           # sublane-friendly channel dim
    tp = min(tp_max, _round_up(p, 128))
    p_pad = _round_up(p, tp)

    patches = _im2col_pool_cmajor(x_cm, ksize, hp, wp)               # (4,CKK,P)
    patches = jnp.pad(patches, ((0, 0), (0, kp - ckk), (0, p_pad - p)))
    patches = patches.astype(jnp.bfloat16)
    w2d = jnp.pad(w_oihw.reshape(cout, ckk),
                  ((0, cp - cout), (0, kp - ckk))).astype(jnp.bfloat16)
    b2d = jnp.pad(b, (0, cp - cout)).reshape(cp, 1).astype(jnp.float32)

    out = pl.pallas_call(
        conv_pool_relu_kernel,
        out_shape=jax.ShapeDtypeStruct((cp, p_pad), jnp.float32),
        grid=(p_pad // tp,),
        in_specs=[
            pl.BlockSpec((4, kp, tp), lambda i: (0, 0, i)),
            pl.BlockSpec((cp, kp), lambda i: (0, 0)),
            pl.BlockSpec((cp, 1), lambda i: (0, 0)),
        ],
        out_specs=pl.BlockSpec((cp, tp), lambda i: (0, i)),
        scratch_shapes=[pltpu.VMEM((kp, 4 * tp), jnp.bfloat16)],
        compiler_params=pltpu.CompilerParams(
            dimension_semantics=("parallel",),
            vmem_limit_bytes=32 * 1024 * 1024),
    )(patches, w2d, b2d)

    # drop channel / pixel padding, stay channel-major: (Cout, N, Hp, Wp)
    return out[:cout, :p].reshape(cout, n, hp, wp)


def mlp_head(feat, w1, b1, w2, b2, *, tn_max=256):
    n, d = feat.shape                   # (N, 320)
    h_real = w1.shape[0]                # 50
    nc = w2.shape[0]                    # num_classes
    hpad = _round_up(h_real, 64)        # 50 -> 64

    tn = min(tn_max, _round_up(n, 8))
    n_pad = _round_up(n, tn)

    x = jnp.pad(feat, ((0, n_pad - n), (0, 0))).astype(jnp.bfloat16)
    w1p = jnp.pad(w1.T, ((0, 0), (0, hpad - h_real))).astype(jnp.bfloat16)
    b1p = jnp.pad(b1, (0, hpad - h_real)).reshape(1, hpad).astype(jnp.float32)
    w2p = jnp.pad(w2.T, ((0, hpad - h_real), (0, 0))).astype(jnp.bfloat16)
    b2p = b2.reshape(1, nc).astype(jnp.float32)

    out = pl.pallas_call(
        mlp_head_kernel,
        out_shape=jax.ShapeDtypeStruct((n_pad, nc), jnp.float32),
        grid=(n_pad // tn,),
        in_specs=[
            pl.BlockSpec((tn, d), lambda i: (i, 0)),
            pl.BlockSpec((d, hpad), lambda i: (0, 0)),
            pl.BlockSpec((1, hpad), lambda i: (0, 0)),
            pl.BlockSpec((hpad, nc), lambda i: (0, 0)),
            pl.BlockSpec((1, nc), lambda i: (0, 0)),
        ],
        out_specs=pl.BlockSpec((tn, nc), lambda i: (i, 0)),
        compiler_params=pltpu.CompilerParams(
            dimension_semantics=("parallel",)),
    )(x, w1p, b1p, w2p, b2p)
    return out[:n]


# ----------------------------------------------------------------------------
# Full forward pass (matches CNNMnist.forward semantics, eval mode)
# ----------------------------------------------------------------------------
def cnn_mnist_forward(x, params):
    n = x.shape[0]

    # conv1 (Cin -> 10, k=5) + max_pool(2) + relu : 28x28 -> 24x24 -> 12x12
    x_cm = jnp.transpose(x, (1, 0, 2, 3))                # channel-major (C,N,H,W)
    a1 = conv_pool_relu_layer(x_cm, params["conv1_w"], params["conv1_b"])
    # a1: (10, N, 12, 12) already channel-major -> no transpose before conv2

    # conv2_drop: Dropout2d is identity in eval mode (see TODO at top)

    # conv2 (10 -> 20, k=5) + max_pool(2) + relu : 12x12 -> 8x8 -> 4x4
    a2 = conv_pool_relu_layer(a1, params["conv2_w"], params["conv2_b"])
    # a2: (20, N, 4, 4)

    # x.view(-1, C*H*W): PyTorch flattens NCHW as (c, h, w)
    feat = jnp.transpose(a2, (1, 0, 2, 3)).reshape(n, -1)        # (N, 320)

    return mlp_head(feat, params["fc1_w"], params["fc1_b"],
                    params["fc2_w"], params["fc2_b"])


# ----------------------------------------------------------------------------
# Independent f32 XLA reference (for correctness check in __main__)
# ----------------------------------------------------------------------------
def reference_forward(x, params):
    n = x.shape[0]

    def conv(v, w, b):
        y = jax.lax.conv_general_dilated(
            v, w, window_strides=(1, 1), padding="VALID",
            dimension_numbers=("NCHW", "OIHW", "NCHW"))
        return y + b.reshape(1, -1, 1, 1)

    def maxpool2(v):
        return jax.lax.reduce_window(v, -jnp.inf, jax.lax.max,
                                     (1, 1, 2, 2), (1, 1, 2, 2), "VALID")

    h = jnp.maximum(maxpool2(conv(x, params["conv1_w"], params["conv1_b"])), 0.0)
    h = jnp.maximum(maxpool2(conv(h, params["conv2_w"], params["conv2_b"])), 0.0)
    feat = h.reshape(n, -1)
    h1 = jnp.maximum(feat @ params["fc1_w"].T + params["fc1_b"], 0.0)
    z = h1 @ params["fc2_w"].T + params["fc2_b"]
    return jax.nn.log_softmax(z, axis=1)


# ----------------------------------------------------------------------------
# Deterministic synthetic parameters + example run
# ----------------------------------------------------------------------------
def init_params(key, num_channels=1, num_classes=10):
    ks = jax.random.split(key, 8)
    s = 0.1
    return {
        "conv1_w": s * jax.random.normal(ks[0], (10, num_channels, 5, 5), jnp.float32),
        "conv1_b": s * jax.random.normal(ks[1], (10,), jnp.float32),
        "conv2_w": s * jax.random.normal(ks[2], (20, 10, 5, 5), jnp.float32),
        "conv2_b": s * jax.random.normal(ks[3], (20,), jnp.float32),
        "fc1_w": s * jax.random.normal(ks[4], (50, 320), jnp.float32),
        "fc1_b": s * jax.random.normal(ks[5], (50,), jnp.float32),
        "fc2_w": s * jax.random.normal(ks[6], (num_classes, 50), jnp.float32),
        "fc2_b": s * jax.random.normal(ks[7], (num_classes,), jnp.float32),
    }


if __name__ == "__main__":
    key = jax.random.PRNGKey(0)
    k_x, k_p = jax.random.split(key)

    # fc1 = Linear(320, 50) pins the input to (N, 1, 28, 28):
    # 28 -conv5-> 24 -pool2-> 12 -conv5-> 8 -pool2-> 4, and 20*4*4 = 320.
    # N=8 keeps the demo tiny while still exercising a multi-tile grid
    # (conv1: P = 8*144 = 1152 -> 3 tiles of 512 lanes).
    x = jax.random.normal(k_x, (8, 1, 28, 28), jnp.float32)
    params = init_params(k_p, num_channels=1, num_classes=10)

    logp = jax.jit(cnn_mnist_forward)(x, params)
    jax.block_until_ready(logp)

    assert logp.shape == (8, 10)
    # log_softmax rows must (log-)sum to ~0
    assert jnp.allclose(jnp.sum(jnp.exp(logp), axis=1), 1.0, atol=1e-4)
    # compare against an independent f32 XLA reference (Pallas path uses bf16
    # MXU operands -> loose tolerance)
    ref = reference_forward(x, params)
    max_err = float(jnp.max(jnp.abs(logp - ref)))
    assert max_err < 0.1, max_err

    print("KERNEL_OK")
</pallas_src>

<mosaic_0001>
module attributes {stable_mosaic.version = 11 : i64} {
  func.func @conv_pool_relu_kernel(%arg0: i32, %arg1: memref<4x128x512xbf16, #tpu.memory_space<vmem>>, %arg2: memref<16x128xbf16, #tpu.memory_space<vmem>>, %arg3: memref<16x1xf32, #tpu.memory_space<vmem>>, %arg4: memref<16x512xf32, #tpu.memory_space<vmem>>, %arg5: memref<128x2048xbf16, #tpu.memory_space<vmem>>) attributes {dimension_semantics = [#tpu.dimension_semantics<parallel>], iteration_bounds = array<i64: 3>, scalar_prefetch = 0 : i64, scratch_operands = 1 : i64, tpu.core_type = #tpu.core_type<tc>, window_params = [{transform_indices = @transform_0, window_bounds = array<i64: 4, 128, 512>}, {pipeline_mode = #tpu.pipeline_mode<synchronous>, transform_indices = @transform_1, window_bounds = array<i64: 16, 128>}, {pipeline_mode = #tpu.pipeline_mode<synchronous>, transform_indices = @transform_2, window_bounds = array<i64: 16, 1>}, {transform_indices = @transform_3, window_bounds = array<i64: 16, 512>}]} {
    %c0 = arith.constant 0 : index
    %c0_0 = arith.constant 0 : index
    %c0_1 = arith.constant 0 : index
    %0 = vector.load %arg1[%c0, %c0_0, %c0_1] : memref<4x128x512xbf16, #tpu.memory_space<vmem>>, vector<1x128x512xbf16>
    %1 = vector.shape_cast %0 : vector<1x128x512xbf16> to vector<128x512xbf16>
    %c0_2 = arith.constant 0 : index
    %c0_3 = arith.constant 0 : index
    %2 = vector.load %arg5[%c0_2, %c0_3] : memref<128x2048xbf16, #tpu.memory_space<vmem>>, vector<128x512xbf16>
    tpu.vector_store %arg5[%c0_2, %c0_3], %1 {strides = array<i32>} : memref<128x2048xbf16, #tpu.memory_space<vmem>>, vector<128x512xbf16>,
    %c1 = arith.constant 1 : index
    %c0_4 = arith.constant 0 : index
    %c0_5 = arith.constant 0 : index
    %3 = vector.load %arg1[%c1, %c0_4, %c0_5] : memref<4x128x512xbf16, #tpu.memory_space<vmem>>, vector<1x128x512xbf16>
    %4 = vector.shape_cast %3 : vector<1x128x512xbf16> to vector<128x512xbf16>
    %c0_6 = arith.constant 0 : index
    %c512 = arith.constant 512 : index
    %5 = vector.load %arg5[%c0_6, %c512] : memref<128x2048xbf16, #tpu.memory_space<vmem>>, vector<128x512xbf16>
    tpu.vector_store %arg5[%c0_6, %c512], %4 {strides = array<i32>} : memref<128x2048xbf16, #tpu.memory_space<vmem>>, vector<128x512xbf16>,
    %c2 = arith.constant 2 : index
    %c0_7 = arith.constant 0 : index
    %c0_8 = arith.constant 0 : index
    %6 = vector.load %arg1[%c2, %c0_7, %c0_8] : memref<4x128x512xbf16, #tpu.memory_space<vmem>>, vector<1x128x512xbf16>
    %7 = vector.shape_cast %6 : vector<1x128x512xbf16> to vector<128x512xbf16>
    %c0_9 = arith.constant 0 : index
    %c1024 = arith.constant 1024 : index
    %8 = vector.load %arg5[%c0_9, %c1024] : memref<128x2048xbf16, #tpu.memory_space<vmem>>, vector<128x512xbf16>
    tpu.vector_store %arg5[%c0_9, %c1024], %7 {strides = array<i32>} : memref<128x2048xbf16, #tpu.memory_space<vmem>>, vector<128x512xbf16>,
    %c3 = arith.constant 3 : index
    %c0_10 = arith.constant 0 : index
    %c0_11 = arith.constant 0 : index
    %9 = vector.load %arg1[%c3, %c0_10, %c0_11] : memref<4x128x512xbf16, #tpu.memory_space<vmem>>, vector<1x128x512xbf16>
    %10 = vector.shape_cast %9 : vector<1x128x512xbf16> to vector<128x512xbf16>
    %c0_12 = arith.constant 0 : index
    %c1536 = arith.constant 1536 : index
    %11 = vector.load %arg5[%c0_12, %c1536] : memref<128x2048xbf16, #tpu.memory_space<vmem>>, vector<128x512xbf16>
    tpu.vector_store %arg5[%c0_12, %c1536], %10 {strides = array<i32>} : memref<128x2048xbf16, #tpu.memory_space<vmem>>, vector<128x512xbf16>,
    %c0_13 = arith.constant 0 : index
    %c0_14 = arith.constant 0 : index
    %12 = vector.load %arg2[%c0_13, %c0_14] : memref<16x128xbf16, #tpu.memory_space<vmem>>, vector<16x128xbf16>
    %c0_15 = arith.constant 0 : index
    %c0_16 = arith.constant 0 : index
    %13 = vector.load %arg5[%c0_15, %c0_16] : memref<128x2048xbf16, #tpu.memory_space<vmem>>, vector<128x2048xbf16>
    %cst = arith.constant dense<0.000000e+00> : vector<16x2048xf32>
    %14 = tpu.matmul %12, %13, %cst {dimension_numbers = #tpu.dot_dimension_numbers<[1], [0], [0], [1], [0, 0, 1, 1], [], []>} : vector<16x128xbf16>, vector<128x2048xbf16>, vector<16x2048xf32> -> vector<16x2048xf32>
    %15 = vector.extract_strided_slice %14 {offsets = [0, 0], sizes = [16, 512], strides = [1, 1]} : vector<16x2048xf32> to vector<16x512xf32>
    %16 = vector.extract_strided_slice %14 {offsets = [0, 512], sizes = [16, 512], strides = [1, 1]} : vector<16x2048xf32> to vector<16x512xf32>
    %17 = arith.maximumf %15, %16 : vector<16x512xf32>
    %18 = vector.extract_strided_slice %14 {offsets = [0, 1024], sizes = [16, 512], strides = [1, 1]} : vector<16x2048xf32> to vector<16x512xf32>
    %19 = vector.extract_strided_slice %14 {offsets = [0, 1536], sizes = [16, 512], strides = [1, 1]} : vector<16x2048xf32> to vector<16x512xf32>
    %20 = arith.maximumf %18, %19 : vector<16x512xf32>
    %21 = arith.maximumf %17, %20 : vector<16x512xf32>
    %c0_17 = arith.constant 0 : index
    %c0_18 = arith.constant 0 : index
    %22 = vector.load %arg3[%c0_17, %c0_18] : memref<16x1xf32, #tpu.memory_space<vmem>>, vector<16x1xf32>
    %23 = vector.broadcast %22 : vector<16x1xf32> to vector<16x512xf32>
    %24 = arith.addf %21, %23 : vector<16x512xf32>
    %cst_19 = arith.constant 0.000000e+00 : f32
    %25 = vector.broadcast %cst_19 : f32 to vector<16x512xf32>
    %26 = arith.maximumf %24, %25 : vector<16x512xf32>
    %c0_20 = arith.constant 0 : index
    %c0_21 = arith.constant 0 : index
    %27 = vector.load %arg4[%c0_20, %c0_21] : memref<16x512xf32, #tpu.memory_space<vmem>>, vector<16x512xf32>
    tpu.vector_store %arg4[%c0_20, %c0_21], %26 {strides = array<i32>} : memref<16x512xf32, #tpu.memory_space<vmem>>, vector<16x512xf32>,
    return
  }
  func.func @transform_0(%arg0: i32) -> (i32, i32, i32) {
    %c0_i32 = arith.constant 0 : i32
    %c0_i32_0 = arith.constant 0 : i32
    %c0_i32_1 = arith.constant 0 : i32
    return %c0_i32, %c0_i32_0, %arg0 : i32, i32, i32
  }
  func.func @transform_1(%arg0: i32) -> (i32, i32) {
    %c0_i32 = arith.constant 0 : i32
    %c0_i32_0 = arith.constant 0 : i32
    %c0_i32_1 = arith.constant 0 : i32
    return %c0_i32, %c0_i32_0 : i32, i32
  }
  func.func @transform_2(%arg0: i32) -> (i32, i32) {
    %c0_i32 = arith.constant 0 : i32
    %c0_i32_0 = arith.constant 0 : i32
    %c0_i32_1 = arith.constant 0 : i32
    return %c0_i32, %c0_i32_0 : i32, i32
  }
  func.func @transform_3(%arg0: i32) -> (i32, i32) {
    %c0_i32 = arith.constant 0 : i32
    %c0_i32_0 = arith.constant 0 : i32
    return %c0_i32, %arg0 : i32, i32
  }
}

module attributes {stable_mosaic.version = 11 : i64} {
  func.func @conv_pool_relu_kernel(%arg0: i32, %arg1: memref<4x256x128xbf16, #tpu.memory_space<vmem>>, %arg2: memref<24x256xbf16, #tpu.memory_space<vmem>>, %arg3: memref<24x1xf32, #tpu.memory_space<vmem>>, %arg4: memref<24x128xf32, #tpu.memory_space<vmem>>, %arg5: memref<256x512xbf16, #tpu.memory_space<vmem>>) attributes {dimension_semantics = [#tpu.dimension_semantics<parallel>], iteration_bounds = array<i64: 1>, scalar_prefetch = 0 : i64, scratch_operands = 1 : i64, tpu.core_type = #tpu.core_type<tc>, window_params = [{transform_indices = @transform_0, window_bounds = array<i64: 4, 256, 128>}, {pipeline_mode = #tpu.pipeline_mode<synchronous>, transform_indices = @transform_1, window_bounds = array<i64: 24, 256>}, {pipeline_mode = #tpu.pipeline_mode<synchronous>, transform_indices = @transform_2, window_bounds = array<i64: 24, 1>}, {transform_indices = @transform_3, window_bounds = array<i64: 24, 128>}]} {
    %c0 = arith.constant 0 : index
    %c0_0 = arith.constant 0 : index
    %c0_1 = arith.constant 0 : index
    %0 = vector.load %arg1[%c0, %c0_0, %c0_1] : memref<4x256x128xbf16, #tpu.memory_space<vmem>>, vector<1x256x128xbf16>
    %1 = vector.shape_cast %0 : vector<1x256x128xbf16> to vector<256x128xbf16>
    %c0_2 = arith.constant 0 : index
    %c0_3 = arith.constant 0 : index
    %2 = vector.load %arg5[%c0_2, %c0_3] : memref<256x512xbf16, #tpu.memory_space<vmem>>, vector<256x128xbf16>
    tpu.vector_store %arg5[%c0_2, %c0_3], %1 {strides = array<i32>} : memref<256x512xbf16, #tpu.memory_space<vmem>>, vector<256x128xbf16>,
    %c1 = arith.constant 1 : index
    %c0_4 = arith.constant 0 : index
    %c0_5 = arith.constant 0 : index
    %3 = vector.load %arg1[%c1, %c0_4, %c0_5] : memref<4x256x128xbf16, #tpu.memory_space<vmem>>, vector<1x256x128xbf16>
    %4 = vector.shape_cast %3 : vector<1x256x128xbf16> to vector<256x128xbf16>
    %c0_6 = arith.constant 0 : index
    %c128 = arith.constant 128 : index
    %5 = vector.load %arg5[%c0_6, %c128] : memref<256x512xbf16, #tpu.memory_space<vmem>>, vector<256x128xbf16>
    tpu.vector_store %arg5[%c0_6, %c128], %4 {strides = array<i32>} : memref<256x512xbf16, #tpu.memory_space<vmem>>, vector<256x128xbf16>,
    %c2 = arith.constant 2 : index
    %c0_7 = arith.constant 0 : index
    %c0_8 = arith.constant 0 : index
    %6 = vector.load %arg1[%c2, %c0_7, %c0_8] : memref<4x256x128xbf16, #tpu.memory_space<vmem>>, vector<1x256x128xbf16>
    %7 = vector.shape_cast %6 : vector<1x256x128xbf16> to vector<256x128xbf16>
    %c0_9 = arith.constant 0 : index
    %c256 = arith.constant 256 : index
    %8 = vector.load %arg5[%c0_9, %c256] : memref<256x512xbf16, #tpu.memory_space<vmem>>, vector<256x128xbf16>
    tpu.vector_store %arg5[%c0_9, %c256], %7 {strides = array<i32>} : memref<256x512xbf16, #tpu.memory_space<vmem>>, vector<256x128xbf16>,
    %c3 = arith.constant 3 : index
    %c0_10 = arith.constant 0 : index
    %c0_11 = arith.constant 0 : index
    %9 = vector.load %arg1[%c3, %c0_10, %c0_11] : memref<4x256x128xbf16, #tpu.memory_space<vmem>>, vector<1x256x128xbf16>
    %10 = vector.shape_cast %9 : vector<1x256x128xbf16> to vector<256x128xbf16>
    %c0_12 = arith.constant 0 : index
    %c384 = arith.constant 384 : index
    %11 = vector.load %arg5[%c0_12, %c384] : memref<256x512xbf16, #tpu.memory_space<vmem>>, vector<256x128xbf16>
    tpu.vector_store %arg5[%c0_12, %c384], %10 {strides = array<i32>} : memref<256x512xbf16, #tpu.memory_space<vmem>>, vector<256x128xbf16>,
    %c0_13 = arith.constant 0 : index
    %c0_14 = arith.constant 0 : index
    %12 = vector.load %arg2[%c0_13, %c0_14] : memref<24x256xbf16, #tpu.memory_space<vmem>>, vector<24x256xbf16>
    %c0_15 = arith.constant 0 : index
    %c0_16 = arith.constant 0 : index
    %13 = vector.load %arg5[%c0_15, %c0_16] : memref<256x512xbf16, #tpu.memory_space<vmem>>, vector<256x512xbf16>
    %cst = arith.constant dense<0.000000e+00> : vector<24x512xf32>
    %14 = tpu.matmul %12, %13, %cst {dimension_numbers = #tpu.dot_dimension_numbers<[1], [0], [0], [1], [0, 0, 1, 1], [], []>} : vector<24x256xbf16>, vector<256x512xbf16>, vector<24x512xf32> -> vector<24x512xf32>
    %15 = vector.extract_strided_slice %14 {offsets = [0, 0], sizes = [24, 128], strides = [1, 1]} : vector<24x512xf32> to vector<24x128xf32>
    %16 = vector.extract_strided_slice %14 {offsets = [0, 128], sizes = [24, 128], strides = [1, 1]} : vector<24x512xf32> to vector<24x128xf32>
    %17 = arith.maximumf %15, %16 : vector<24x128xf32>
    %18 = vector.extract_strided_slice %14 {offsets = [0, 256], sizes = [24, 128], strides = [1, 1]} : vector<24x512xf32> to vector<24x128xf32>
    %19 = vector.extract_strided_slice %14 {offsets = [0, 384], sizes = [24, 128], strides = [1, 1]} : vector<24x512xf32> to vector<24x128xf32>
    %20 = arith.maximumf %18, %19 : vector<24x128xf32>
    %21 = arith.maximumf %17, %20 : vector<24x128xf32>
    %c0_17 = arith.constant 0 : index
    %c0_18 = arith.constant 0 : index
    %22 = vector.load %arg3[%c0_17, %c0_18] : memref<24x1xf32, #tpu.memory_space<vmem>>, vector<24x1xf32>
    %23 = vector.broadcast %22 : vector<24x1xf32> to vector<24x128xf32>
    %24 = arith.addf %21, %23 : vector<24x128xf32>
    %cst_19 = arith.constant 0.000000e+00 : f32
    %25 = vector.broadcast %cst_19 : f32 to vector<24x128xf32>
    %26 = arith.maximumf %24, %25 : vector<24x128xf32>
    %c0_20 = arith.constant 0 : index
    %c0_21 = arith.constant 0 : index
    %27 = vector.load %arg4[%c0_20, %c0_21] : memref<24x128xf32, #tpu.memory_space<vmem>>, vector<24x128xf32>
    tpu.vector_store %arg4[%c0_20, %c0_21], %26 {strides = array<i32>} : memref<24x128xf32, #tpu.memory_space<vmem>>, vector<24x128xf32>,
    return
  }
  func.func @transform_0(%arg0: i32) -> (i32, i32, i32) {
    %c0_i32 = arith.constant 0 : i32
    %c0_i32_0 = arith.constant 0 : i32
    %c0_i32_1 = arith.constant 0 : i32
    return %c0_i32, %c0_i32_0, %arg0 : i32, i32, i32
  }
  func.func @transform_1(%arg0: i32) -> (i32, i32) {
    %c0_i32 = arith.constant 0 : i32
    %c0_i32_0 = arith.constant 0 : i32
    %c0_i32_1 = arith.constant 0 : i32
    return %c0_i32, %c0_i32_0 : i32, i32
  }
  func.func @transform_2(%arg0: i32) -> (i32, i32) {
    %c0_i32 = arith.constant 0 : i32
    %c0_i32_0 = arith.constant 0 : i32
    %c0_i32_1 = arith.constant 0 : i32
    return %c0_i32, %c0_i32_0 : i32, i32
  }
  func.func @transform_3(%arg0: i32) -> (i32, i32) {
    %c0_i32 = arith.constant 0 : i32
    %c0_i32_0 = arith.constant 0 : i32
    return %c0_i32, %arg0 : i32, i32
  }
}

module attributes {stable_mosaic.version = 11 : i64} {
  func.func @mlp_head_kernel(%arg0: i32, %arg1: memref<8x320xbf16, #tpu.memory_space<vmem>>, %arg2: memref<320x64xbf16, #tpu.memory_space<vmem>>, %arg3: memref<1x64xf32, #tpu.memory_space<vmem>>, %arg4: memref<64x10xbf16, #tpu.memory_space<vmem>>, %arg5: memref<1x10xf32, #tpu.memory_space<vmem>>, %arg6: memref<8x10xf32, #tpu.memory_space<vmem>>) attributes {dimension_semantics = [#tpu.dimension_semantics<parallel>], iteration_bounds = array<i64: 1>, scalar_prefetch = 0 : i64, scratch_operands = 0 : i64, tpu.core_type = #tpu.core_type<tc>, window_params = [{transform_indices = @transform_0, window_bounds = array<i64: 8, 320>}, {pipeline_mode = #tpu.pipeline_mode<synchronous>, transform_indices = @transform_1, window_bounds = array<i64: 320, 64>}, {pipeline_mode = #tpu.pipeline_mode<synchronous>, transform_indices = @transform_2, window_bounds = array<i64: 1, 64>}, {pipeline_mode = #tpu.pipeline_mode<synchronous>, transform_indices = @transform_3, window_bounds = array<i64: 64, 10>}, {pipeline_mode = #tpu.pipeline_mode<synchronous>, transform_indices = @transform_4, window_bounds = array<i64: 1, 10>}, {transform_indices = @transform_5, window_bounds = array<i64: 8, 10>}]} {
    %c0 = arith.constant 0 : index
    %c0_0 = arith.constant 0 : index
    %0 = vector.load %arg1[%c0, %c0_0] : memref<8x320xbf16, #tpu.memory_space<vmem>>, vector<8x320xbf16>
    %c0_1 = arith.constant 0 : index
    %c0_2 = arith.constant 0 : index
    %1 = vector.load %arg2[%c0_1, %c0_2] : memref<320x64xbf16, #tpu.memory_space<vmem>>, vector<320x64xbf16>
    %cst = arith.constant dense<0.000000e+00> : vector<8x64xf32>
    %2 = tpu.matmul %0, %1, %cst {dimension_numbers = #tpu.dot_dimension_numbers<[1], [0], [0], [1], [0, 0, 1, 1], [], []>} : vector<8x320xbf16>, vector<320x64xbf16>, vector<8x64xf32> -> vector<8x64xf32>
    %c0_3 = arith.constant 0 : index
    %c0_4 = arith.constant 0 : index
    %3 = vector.load %arg3[%c0_3, %c0_4] : memref<1x64xf32, #tpu.memory_space<vmem>>, vector<1x64xf32>
    %4 = vector.broadcast %3 : vector<1x64xf32> to vector<8x64xf32>
    %5 = arith.addf %2, %4 : vector<8x64xf32>
    %cst_5 = arith.constant 0.000000e+00 : f32
    %6 = vector.broadcast %cst_5 : f32 to vector<8x64xf32>
    %7 = arith.maximumf %5, %6 : vector<8x64xf32>
    %8 = arith.truncf %7 : vector<8x64xf32> to vector<8x64xbf16>
    %c0_6 = arith.constant 0 : index
    %c0_7 = arith.constant 0 : index
    %9 = vector.load %arg4[%c0_6, %c0_7] : memref<64x10xbf16, #tpu.memory_space<vmem>>, vector<64x10xbf16>
    %cst_8 = arith.constant dense<0.000000e+00> : vector<8x10xf32>
    %10 = tpu.matmul %8, %9, %cst_8 {dimension_numbers = #tpu.dot_dimension_numbers<[1], [0], [0], [1], [0, 0, 1, 1], [], []>} : vector<8x64xbf16>, vector<64x10xbf16>, vector<8x10xf32> -> vector<8x10xf32>
    %c0_9 = arith.constant 0 : index
    %c0_10 = arith.constant 0 : index
    %11 = vector.load %arg5[%c0_9, %c0_10] : memref<1x10xf32, #tpu.memory_space<vmem>>, vector<1x10xf32>
    %12 = vector.broadcast %11 : vector<1x10xf32> to vector<8x10xf32>
    %13 = arith.addf %10, %12 : vector<8x10xf32>
    %cst_11 = arith.constant dense<0xFF800000> : vector<8xf32>
    %14 = vector.multi_reduction <maximumf>, %13, %cst_11 [1] : vector<8x10xf32> to vector<8xf32>
    %15 = vector.shape_cast %14 : vector<8xf32> to vector<8x1xf32>
    %16 = vector.broadcast %15 : vector<8x1xf32> to vector<8x10xf32>
    %17 = arith.subf %13, %16 : vector<8x10xf32>
    %18 = math.exp %17 : vector<8x10xf32>
    %19 = vector.broadcast %15 : vector<8x1xf32> to vector<8x10xf32>
    %20 = arith.subf %13, %19 : vector<8x10xf32>
    %cst_12 = arith.constant dense<0.000000e+00> : vector<8xf32>
    %21 = vector.multi_reduction <add>, %18, %cst_12 [1] : vector<8x10xf32> to vector<8xf32>
    %22 = vector.shape_cast %21 : vector<8xf32> to vector<8x1xf32>
    %23 = math.log %22 : vector<8x1xf32>
    %24 = vector.broadcast %23 : vector<8x1xf32> to vector<8x10xf32>
    %25 = arith.subf %20, %24 : vector<8x10xf32>
    %c0_13 = arith.constant 0 : index
    %c0_14 = arith.constant 0 : index
    %26 = vector.load %arg6[%c0_13, %c0_14] : memref<8x10xf32, #tpu.memory_space<vmem>>, vector<8x10xf32>
    tpu.vector_store %arg6[%c0_13, %c0_14], %25 {strides = array<i32>} : memref<8x10xf32, #tpu.memory_space<vmem>>, vector<8x10xf32>,
    return
  }
  func.func @transform_0(%arg0: i32) -> (i32, i32) {
    %c0_i32 = arith.constant 0 : i32
    %c0_i32_0 = arith.constant 0 : i32
    return %arg0, %c0_i32 : i32, i32
  }
  func.func @transform_1(%arg0: i32) -> (i32, i32) {
    %c0_i32 = arith.constant 0 : i32
    %c0_i32_0 = arith.constant 0 : i32
    %c0_i32_1 = arith.constant 0 : i32
    return %c0_i32, %c0_i32_0 : i32, i32
  }
  func.func @transform_2(%arg0: i32) -> (i32, i32) {
    %c0_i32 = arith.constant 0 : i32
    %c0_i32_0 = arith.constant 0 : i32
    %c0_i32_1 = arith.constant 0 : i32
    return %c0_i32, %c0_i32_0 : i32, i32
  }
  func.func @transform_3(%arg0: i32) -> (i32, i32) {
    %c0_i32 = arith.constant 0 : i32
    %c0_i32_0 = arith.constant 0 : i32
    %c0_i32_1 = arith.constant 0 : i32
    return %c0_i32, %c0_i32_0 : i32, i32
  }
  func.func @transform_4(%arg0: i32) -> (i32, i32) {
    %c0_i32 = arith.constant 0 : i32
    %c0_i32_0 = arith.constant 0 : i32
    %c0_i32_1 = arith.constant 0 : i32
    return %c0_i32, %c0_i32_0 : i32, i32
  }
  func.func @transform_5(%arg0: i32) -> (i32, i32) {
    %c0_i32 = arith.constant 0 : i32
    %c0_i32_0 = arith.constant 0 : i32
    return %arg0, %c0_i32 : i32, i32
  }
}

</mosaic_0001>

<llo_original>
// kernel: cnn_mnist_forward.3
$region0: #{cnn_mnist_forward.3}
  #allocation0 [shape = 'u32[]', space=smem, size = 0x4, offset = 0x4, fixed_abs, tag = 'smem constant byte address 0x4 - core index']
  #allocation1 [shape = 'u32[144,128]{1,0:T(1,128)}', space=vmem, size = 0x12000, scoped, tag = 'internal scratch']
  #allocation2 [shape = 'bf16[128,2048]{1,0:T(8,128)(2,1)}', space=vmem, size = 0x80000, scoped, tag = 'scratch operand']
  %s0 = inlined_call_operand.vmem [shape: bf16[4,128,1536], index: 0, kind: input, shape index: {}]
  %s1 = inlined_call_operand.vmem [shape: bf16[16,128], index: 1, kind: input, shape index: {}]
  %s2 = inlined_call_operand.vmem [shape: f32[16,1], index: 2, kind: input, shape index: {}]
  %s3 = inlined_call_operand.vmem [shape: f32[16,1536], index: 3, kind: output, shape index: {}]
  %s4 = sld [smem:[#allocation0]]
  $region87: #{cnn_mnist_forward.3} parent=0
    _
  %s6 = ssub.s32 1, %s4
  %s7 = scalar_select 0, %s6, %s4
  $region1: #{cnn_mnist_forward.3} parent=0
    #allocation3 [shape = 'u8[1048576]{0}', space=vmem, size = 0x100000, scoped, tag = 'input window, operand 0']
    #allocation4 [shape = 'u8[65536]{0}', space=vmem, size = 0x10000, scoped, tag = 'output window, operand 0']
    loop: start=0, step=1, limit=5
    $region2: #{cnn_mnist_forward.3} parent=1 // loop_pre_header
      _
    $region3: #{cnn_mnist_forward.3} parent=1 // loop_header
      %s9 = sphi 0, %s13
      %p10 = scmp.ge.s32.totalorder %s9, 5
      %s19 = sphi 0, %s21
      %s22 = sphi 0, %s19
      %s23 = sphi 0, %s22
      %s39 = sphi 0, %s23
      %s43 = sphi 0, %s43
      %s45 = sphi 0, %s43
      %s46 = sphi 0, %s45
      %s60 = sphi 0, %s46
      %s64 = sphi 0, %s64
      %s66 = sphi 0, %s64
      %s67 = sphi 0, %s66
      %s81 = sphi 0, %s67
      %s87 = sphi 0, %s89
      %s90 = sphi 0, %s87
      %s91 = sphi 0, %s90
      %s107 = sphi 0, %s91
    $region4: #{cnn_mnist_forward.3} parent=1 // loop_header_branch
      %12 = sbr.rel (%p10) target = $region8
    $region5: #{cnn_mnist_forward.3} parent=1 // loop_body
      %s14 = ssub.s32 %s9, 1
      %s15 = ssub.s32 %s9, 2
      %s16 = sadd.s32 %s9, 1
      %s17 = ssub.s32 %s9, %s16
      %p18 = scmp.eq.s32.totalorder %s17, 0
      %s20 = sadd.s32 %s19, 1
      %s21 = scalar_select %p18, %s19, %s20
      %p24 = pneg %p18
      %p25 = scmp.eq.s32.totalorder %s9, 2
      %p26 = por %p24, %p25
      %p27 = scmp.ne.s32.totalorder %s19, %s22
      %p28 = scmp.eq.s32.totalorder %s9, 0
      %p29 = por %p27, %p28
      %p30 = scmp.ne.s32.totalorder %s19, %s22
      %p31 = scmp.eq.s32.totalorder %s14, 2
      %p32 = por %p30, %p31
      %p33 = scmp.ne.s32.totalorder %s22, %s23
      %p34 = scmp.eq.s32.totalorder %s14, 0
      %p35 = por %p33, %p34
      %p36 = scmp.ne.s32.totalorder %s22, %s23
      %p37 = scmp.eq.s32.totalorder %s15, 2
      %p38 = por %p36, %p37
      %p40 = scmp.ne.s32.totalorder %s23, %s39
      %p41 = scmp.eq.s32.totalorder %s15, 0
      %p42 = por %p40, %p41
      %s44 = sadd.s32 %s43, 1
      %p47 = scmp.eq.s32.totalorder %s9, 2
      %p48 = scmp.ne.s32.totalorder %s43, %s45
      %p49 = scmp.eq.s32.totalorder %s9, 0
      %p50 = por %p48, %p49
      %p51 = scmp.ne.s32.totalorder %s43, %s45
      %p52 = scmp.eq.s32.totalorder %s14, 2
      %p53 = por %p51, %p52
      %p54 = scmp.ne.s32.totalorder %s45, %s46
      %p55 = scmp.eq.s32.totalorder %s14, 0
      %p56 = por %p54, %p55
      %p57 = scmp.ne.s32.totalorder %s45, %s46
      %p58 = scmp.eq.s32.totalorder %s15, 2
      %p59 = por %p57, %p58
      %p61 = scmp.ne.s32.totalorder %s46, %s60
      %p62 = scmp.eq.s32.totalorder %s15, 0
      %p63 = por %p61, %p62
      %s65 = sadd.s32 %s64, 1
      %p68 = scmp.eq.s32.totalorder %s9, 2
      %p69 = scmp.ne.s32.totalorder %s64, %s66
      %p70 = scmp.eq.s32.totalorder %s9, 0
      %p71 = por %p69, %p70
      %p72 = scmp.ne.s32.totalorder %s64, %s66
      %p73 = scmp.eq.s32.totalorder %s14, 2
      %p74 = por %p72, %p73
      %p75 = scmp.ne.s32.totalorder %s66, %s67
      %p76 = scmp.eq.s32.totalorder %s14, 0
      %p77 = por %p75, %p76
      %p78 = scmp.ne.s32.totalorder %s66, %s67
      %p79 = scmp.eq.s32.totalorder %s15, 2
      %p80 = por %p78, %p79
      %p82 = scmp.ne.s32.totalorder %s67, %s81
      %p83 = scmp.eq.s32.totalorder %s15, 0
      %p84 = por %p82, %p83
      %s85 = ssub.s32 %s9, %s16
      %p86 = scmp.eq.s32.totalorder %s85, 0
      %s88 = sadd.s32 %s87, 1
      %s89 = scalar_select %p86, %s87, %s88
      %p92 = pneg %p86
      %p93 = scmp.eq.s32.totalorder %s9, 2
      %p94 = por %p92, %p93
      %p95 = scmp.ne.s32.totalorder %s87, %s90
      %p96 = scmp.eq.s32.totalorder %s9, 0
      %p97 = por %p95, %p96
      %p98 = scmp.ne.s32.totalorder %s87, %s90
      %p99 = scmp.eq.s32.totalorder %s14, 2
      %p100 = por %p98, %p99
      %p101 = scmp.ne.s32.totalorder %s90, %s91
      %p102 = scmp.eq.s32.totalorder %s14, 0
      %p103 = por %p101, %p102
      %p104 = scmp.ne.s32.totalorder %s90, %s91
      %p105 = scmp.eq.s32.totalorder %s15, 2
      %p106 = por %p104, %p105
      %p108 = scmp.ne.s32.totalorder %s91, %s107
      %p109 = scmp.eq.s32.totalorder %s15, 0
      %p110 = por %p108, %p109
      %p111 = scmp.le.s32.totalorder 1, %s9
      %p112 = scmp.lt.s32.totalorder %s9, 4
      %p113 = pnand %p111, %p112
      %p114 = pneg %p113
      // Predicated region
      $region9: #{cnn_mnist_forward.3} parent=5 // pred_check
        _
      $region10: #{cnn_mnist_forward.3} parent=5 // pred_check_branch
        %116 = sbr.rel (%p113) target = $region12
      $region11: #{cnn_mnist_forward.3} parent=5 // pred_region
        %s117 = ssub.s32 %s9, 1
        // Predicated region
        $region13: #{cnn_mnist_forward.3} parent=11 // pred_check
          %p118 = pneg %p56
        $region14: #{cnn_mnist_forward.3} parent=11 // pred_check_branch
          %120 = sbr.rel (%p118) target = $region16
        $region15: #{cnn_mnist_forward.3} parent=11 // pred_region
          _
        $region16: #{cnn_mnist_forward.3} parent=11 // pred_fallthru
          _
        // Predicated region
        $region17: #{cnn_mnist_forward.3} parent=11 // pred_check
          %p121 = pneg %p77
        $region18: #{cnn_mnist_forward.3} parent=11 // pred_check_branch
          %123 = sbr.rel (%p121) target = $region20
        $region19: #{cnn_mnist_forward.3} parent=11 // pred_region
          _
        $region20: #{cnn_mnist_forward.3} parent=11 // pred_fallthru
          _
      $region12: #{cnn_mnist_forward.3} parent=5 // pred_fallthru
        _
      %p124 = scmp.lt.s32.totalorder %s9, 3
      // Predicated region
      $region21: #{cnn_mnist_forward.3} parent=5 // pred_check
        %p125 = pneg %p124
      $region22: #{cnn_mnist_forward.3} parent=5 // pred_check_branch
        %127 = sbr.rel (%p125) target = $region24
      $region23: #{cnn_mnist_forward.3} parent=5 // pred_region
        // Predicated region
        $region25: #{cnn_mnist_forward.3} parent=23 // pred_check
          %p128 = pneg %p29
        $region26: #{cnn_mnist_forward.3} parent=23 // pred_check_branch
          %130 = sbr.rel (%p128) target = $region28
        $region27: #{cnn_mnist_forward.3} parent=23 // pred_region
          %s131 = sand.u32 %s19, 1
          %s132 = sand.u32 %s19, 1
          %s133 = smul.addr %s132, 1024
          %s134 = scalar_lea.vmem [#allocation3], %s133
          %s135 = smul.u32 4, %s9
          %s136 = smul.addr %s135, 4
          %s137 = scalar_lea.vmem %s0, %s136
          // Predicated region
          $region29: #{cnn_mnist_forward.3} parent=27 // pred_check
            _
          $region30: #{cnn_mnist_forward.3} parent=27 // pred_check_branch
            %139 = sbr.rel (0) target = $region32
          $region31: #{cnn_mnist_forward.3} parent=27 // pred_region
            // Predicated region
            $region33: #{cnn_mnist_forward.3} parent=31 // pred_check
              _
            $region34: #{cnn_mnist_forward.3} parent=31 // pred_check_branch
              %141 = sbr.rel (0) target = $region36
            $region35: #{cnn_mnist_forward.3} parent=31 // pred_region
              loop: start=0, step=1, limit=1
              $region37: #{cnn_mnist_forward.3} parent=35 // loop_pre_header
                _
              $region38: #{cnn_mnist_forward.3} parent=35 // loop_header
                %s143 = sphi 0, %s147
                %p144 = scmp.ge.s32.totalorder %s143, 1
                %s148 = sphi %s137, %s137
                %s149 = sphi %s134, %s134
              $region39: #{cnn_mnist_forward.3} parent=35 // loop_header_branch
                %146 = sbr.rel (%p144) target = $region43
              $region40: #{cnn_mnist_forward.3} parent=35 // loop_body
                %v150 = vld [vmem:[%s148] sm:$0xff]
                %151 = vst [vmem:[%s149] sm:$0xff] %v150
                %v152 = vld [vmem:[%s148 + $0x8] sm:$0xff]
                %153 = vst [vmem:[%s149 + $0x8] sm:$0xff] %v152
                %v154 = vld [vmem:[%s148 + $0x30] sm:$0xff]
                %155 = vst [vmem:[%s149 + $0x10] sm:$0xff] %v154
                %v156 = vld [vmem:[%s148 + $0x38] sm:$0xff]
                %157 = vst [vmem:[%s149 + $0x18] sm:$0xff] %v156
                %v158 = vld [vmem:[%s148 + $0x60] sm:$0xff]
                %159 = vst [vmem:[%s149 + $0x20] sm:$0xff] %v158
                %v160 = vld [vmem:[%s148 + $0x68] sm:$0xff]
                %161 = vst [vmem:[%s149 + $0x28] sm:$0xff] %v160
                %v162 = vld [vmem:[%s148 + $0x90] sm:$0xff]
                %163 = vst [vmem:[%s149 + $0x30] sm:$0xff] %v162
                %v164 = vld [vmem:[%s148 + $0x98] sm:$0xff]
                %165 = vst [vmem:[%s149 + $0x38] sm:$0xff] %v164
                %v166 = vld [vmem:[%s148 + $0xc0] sm:$0xff]
                %167 = vst [vmem:[%s149 + $0x40] sm:$0xff] %v166
                %v168 = vld [vmem:[%s148 + $0xc8] sm:$0xff]
                %169 = vst [vmem:[%s149 + $0x48] sm:$0xff] %v168
                %v170 = vld [vmem:[%s148 + $0xf0] sm:$0xff]
                %171 = vst [vmem:[%s149 + $0x50] sm:$0xff] %v170
                %v172 = vld [vmem:[%s148 + $0xf8] sm:$0xff]
                %173 = vst [vmem:[%s149 + $0x58] sm:$0xff] %v172
                %v174 = vld [vmem:[%s148 + $0x120] sm:$0xff]
                %175 = vst [vmem:[%s149 + $0x60] sm:$0xff] %v174
                %v176 = vld [vmem:[%s148 + $0x128] sm:$0xff]
                %177 = vst [vmem:[%s149 + $0x68] sm:$0xff] %v176
                %v178 = vld [vmem:[%s148 + $0x150] sm:$0xff]
                %179 = vst [vmem:[%s149 + $0x70] sm:$0xff] %v178
                %v180 = vld [vmem:[%s148 + $0x158] sm:$0xff]
                %181 = vst [vmem:[%s149 + $0x78] sm:$0xff] %v180
                %v182 = vld [vmem:[%s148 + $0x180] sm:$0xff]
                %183 = vst [vmem:[%s149 + $0x80] sm:$0xff] %v182
                %v184 = vld [vmem:[%s148 + $0x188] sm:$0xff]
                %185 = vst [vmem:[%s149 + $0x88] sm:$0xff] %v184
                %v186 = vld [vmem:[%s148 + $0x1b0] sm:$0xff]
                %187 = vst [vmem:[%s149 + $0x90] sm:$0xff] %v186
                %v188 = vld [vmem:[%s148 + $0x1b8] sm:$0xff]
                %189 = vst [vmem:[%s149 + $0x98] sm:$0xff] %v188
                %v190 = vld [vmem:[%s148 + $0x1e0] sm:$0xff]
                %191 = vst [vmem:[%s149 + $0xa0] sm:$0xff] %v190
                %v192 = vld [vmem:[%s148 + $0x1e8] sm:$0xff]
                %193 = vst [vmem:[%s149 + $0xa8] sm:$0xff] %v192
                %v194 = vld [vmem:[%s148 + $0x210] sm:$0xff]
                %195 = vst [vmem:[%s149 + $0xb0] sm:$0xff] %v194
                %v196 = vld [vmem:[%s148 + $0x218] sm:$0xff]
                %197 = vst [vmem:[%s149 + $0xb8] sm:$0xff] %v196
                %v198 = vld [vmem:[%s148 + $0x240] sm:$0xff]
                %199 = vst [vmem:[%s149 + $0xc0] sm:$0xff] %v198
                %v200 = vld [vmem:[%s148 + $0x248] sm:$0xff]
                %201 = vst [vmem:[%s149 + $0xc8] sm:$0xff] %v200
                %v202 = vld [vmem:[%s148 + $0x270] sm:$0xff]
                %203 = vst [vmem:[%s149 + $0xd0] sm:$0xff] %v202
                %v204 = vld [vmem:[%s148 + $0x278] sm:$0xff]
                %205 = vst [vmem:[%s149 + $0xd8] sm:$0xff] %v204
                %v206 = vld [vmem:[%s148 + $0x2a0] sm:$0xff]
                %207 = vst [vmem:[%s149 + $0xe0] sm:$0xff] %v206
                %v208 = vld [vmem:[%s148 + $0x2a8] sm:$0xff]
                %209 = vst [vmem:[%s149 + $0xe8] sm:$0xff] %v208
                %v210 = vld [vmem:[%s148 + $0x2d0] sm:$0xff]
                %211 = vst [vmem:[%s149 + $0xf0] sm:$0xff] %v210
                %v212 = vld [vmem:[%s148 + $0x2d8] sm:$0xff]
                %213 = vst [vmem:[%s149 + $0xf8] sm:$0xff] %v212
                %v214 = vld [vmem:[%s148 + $0x300] sm:$0xff]
                %215 = vst [vmem:[%s149 + $0x100] sm:$0xff] %v214
                %v216 = vld [vmem:[%s148 + $0x308] sm:$0xff]
                %217 = vst [vmem:[%s149 + $0x108] sm:$0xff] %v216
                %v218 = vld [vmem:[%s148 + $0x330] sm:$0xff]
                %219 = vst [vmem:[%s149 + $0x110] sm:$0xff] %v218
                %v220 = vld [vmem:[%s148 + $0x338] sm:$0xff]
                %221 = vst [vmem:[%s149 + $0x118] sm:$0xff] %v220
                %v222 = vld [vmem:[%s148 + $0x360] sm:$0xff]
                %223 = vst [vmem:[%s149 + $0x120] sm:$0xff] %v222
                %v224 = vld [vmem:[%s148 + $0x368] sm:$0xff]
                %225 = vst [vmem:[%s149 + $0x128] sm:$0xff] %v224
                %v226 = vld [vmem:[%s148 + $0x390] sm:$0xff]
                %227 = vst [vmem:[%s149 + $0x130] sm:$0xff] %v226
                %v228 = vld [vmem:[%s148 + $0x398] sm:$0xff]
                %229 = vst [vmem:[%s149 + $0x138] sm:$0xff] %v228
                %v230 = vld [vmem:[%s148 + $0x3c0] sm:$0xff]
                %231 = vst [vmem:[%s149 + $0x140] sm:$0xff] %v230
                %v232 = vld [vmem:[%s148 + $0x3c8] sm:$0xff]
                %233 = vst [vmem:[%s149 + $0x148] sm:$0xff] %v232
                %v234 = vld [vmem:[%s148 + $0x3f0] sm:$0xff]
                %235 = vst [vmem:[%s149 + $0x150] sm:$0xff] %v234
                %v236 = vld [vmem:[%s148 + $0x3f8] sm:$0xff]
                %237 = vst [vmem:[%s149 + $0x158] sm:$0xff] %v236
                %v238 = vld [vmem:[%s148 + $0x420] sm:$0xff]
                %239 = vst [vmem:[%s149 + $0x160] sm:$0xff] %v238
                %v240 = vld [vmem:[%s148 + $0x428] sm:$0xff]
                %241 = vst [vmem:[%s149 + $0x168] sm:$0xff] %v240
                %v242 = vld [vmem:[%s148 + $0x450] sm:$0xff]
                %243 = vst [vmem:[%s149 + $0x170] sm:$0xff] %v242
                %v244 = vld [vmem:[%s148 + $0x458] sm:$0xff]
                %245 = vst [vmem:[%s149 + $0x178] sm:$0xff] %v244
                %v246 = vld [vmem:[%s148 + $0x480] sm:$0xff]
                %247 = vst [vmem:[%s149 + $0x180] sm:$0xff] %v246
                %v248 = vld [vmem:[%s148 + $0x488] sm:$0xff]
                %249 = vst [vmem:[%s149 + $0x188] sm:$0xff] %v248
                %v250 = vld [vmem:[%s148 + $0x4b0] sm:$0xff]
                %251 = vst [vmem:[%s149 + $0x190] sm:$0xff] %v250
                %v252 = vld [vmem:[%s148 + $0x4b8] sm:$0xff]
                %253 = vst [vmem:[%s149 + $0x198] sm:$0xff] %v252
                %v254 = vld [vmem:[%s148 + $0x4e0] sm:$0xff]
                %255 = vst [vmem:[%s149 + $0x1a0] sm:$0xff] %v254
                %v256 = vld [vmem:[%s148 + $0x4e8] sm:$0xff]
                %257 = vst [vmem:[%s149 + $0x1a8] sm:$0xff] %v256
                %v258 = vld [vmem:[%s148 + $0x510] sm:$0xff]
                %259 = vst [vmem:[%s149 + $0x1b0] sm:$0xff] %v258
                %v260 = vld [vmem:[%s148 + $0x518] sm:$0xff]
                %261 = vst [vmem:[%s149 + $0x1b8] sm:$0xff] %v260
                %v262 = vld [vmem:[%s148 + $0x540] sm:$0xff]
                %263 = vst [vmem:[%s149 + $0x1c0] sm:$0xff] %v262
                %v264 = vld [vmem:[%s148 + $0x548] sm:$0xff]
                %265 = vst [vmem:[%s149 + $0x1c8] sm:$0xff] %v264
                %v266 = vld [vmem:[%s148 + $0x570] sm:$0xff]
                %267 = vst [vmem:[%s149 + $0x1d0] sm:$0xff] %v266
                %v268 = vld [vmem:[%s148 + $0x578] sm:$0xff]
                %269 = vst [vmem:[%s149 + $0x1d8] sm:$0xff] %v268
                %v270 = vld [vmem:[%s148 + $0x5a0] sm:$0xff]
                %271 = vst [vmem:[%s149 + $0x1e0] sm:$0xff] %v270
                %v272 = vld [vmem:[%s148 + $0x5a8] sm:$0xff]
                %273 = vst [vmem:[%s149 + $0x1e8] sm:$0xff] %v272
                %v274 = vld [vmem:[%s148 + $0x5d0] sm:$0xff]
                %275 = vst [vmem:[%s149 + $0x1f0] sm:$0xff] %v274
                %v276 = vld [vmem:[%s148 + $0x5d8] sm:$0xff]
                %277 = vst [vmem:[%s149 + $0x1f8] sm:$0xff] %v276
                %v278 = vld [vmem:[%s148 + $0x600] sm:$0xff]
                %279 = vst [vmem:[%s149 + $0x200] sm:$0xff] %v278
                %v280 = vld [vmem:[%s148 + $0x608] sm:$0xff]
                %281 = vst [vmem:[%s149 + $0x208] sm:$0xff] %v280
                %v282 = vld [vmem:[%s148 + $0x630] sm:$0xff]
                %283 = vst [vmem:[%s149 + $0x210] sm:$0xff] %v282
                %v284 = vld [vmem:[%s148 + $0x638] sm:$0xff]
                %285 = vst [vmem:[%s149 + $0x218] sm:$0xff] %v284
                %v286 = vld [vmem:[%s148 + $0x660] sm:$0xff]
                %287 = vst [vmem:[%s149 + $0x220] sm:$0xff] %v286
                %v288 = vld [vmem:[%s148 + $0x668] sm:$0xff]
                %289 = vst [vmem:[%s149 + $0x228] sm:$0xff] %v288
                %v290 = vld [vmem:[%s148 + $0x690] sm:$0xff]
                %291 = vst [vmem:[%s149 + $0x230] sm:$0xff] %v290
                %v292 = vld [vmem:[%s148 + $0x698] sm:$0xff]
                %293 = vst [vmem:[%s149 + $0x238] sm:$0xff] %v292
                %v294 = vld [vmem:[%s148 + $0x6c0] sm:$0xff]
                %295 = vst [vmem:[%s149 + $0x240] sm:$0xff] %v294
                %v296 = vld [vmem:[%s148 + $0x6c8] sm:$0xff]
                %297 = vst [vmem:[%s149 + $0x248] sm:$0xff] %v296
                %v298 = vld [vmem:[%s148 + $0x6f0] sm:$0xff]
                %299 = vst [vmem:[%s149 + $0x250] sm:$0xff] %v298
                %v300 = vld [vmem:[%s148 + $0x6f8] sm:$0xff]
                %301 = vst [vmem:[%s149 + $0x258] sm:$0xff] %v300
                %v302 = vld [vmem:[%s148 + $0x720] sm:$0xff]
                %303 = vst [vmem:[%s149 + $0x260] sm:$0xff] %v302
                %v304 = vld [vmem:[%s148 + $0x728] sm:$0xff]
                %305 = vst [vmem:[%s149 + $0x268] sm:$0xff] %v304
                %v306 = vld [vmem:[%s148 + $0x750] sm:$0xff]
                %307 = vst [vmem:[%s149 + $0x270] sm:$0xff] %v306
                %v308 = vld [vmem:[%s148 + $0x758] sm:$0xff]
                %309 = vst [vmem:[%s149 + $0x278] sm:$0xff] %v308
                %v310 = vld [vmem:[%s148 + $0x780] sm:$0xff]
                %311 = vst [vmem:[%s149 + $0x280] sm:$0xff] %v310
                %v312 = vld [vmem:[%s148 + $0x788] sm:$0xff]
                %313 = vst [vmem:[%s149 + $0x288] sm:$0xff] %v312
                %v314 = vld [vmem:[%s148 + $0x7b0] sm:$0xff]
                %315 = vst [vmem:[%s149 + $0x290] sm:$0xff] %v314
                %v316 = vld [vmem:[%s148 + $0x7b8] sm:$0xff]
                %317 = vst [vmem:[%s149 + $0x298] sm:$0xff] %v316
                %v318 = vld [vmem:[%s148 + $0x7e0] sm:$0xff]
                %319 = vst [vmem:[%s149 + $0x2a0] sm:$0xff] %v318
                %v320 = vld [vmem:[%s148 + $0x7e8] sm:$0xff]
                %321 = vst [vmem:[%s149 + $0x2a8] sm:$0xff] %v320
                %v322 = vld [vmem:[%s148 + $0x810] sm:$0xff]
                %323 = vst [vmem:[%s149 + $0x2b0] sm:$0xff] %v322
                %v324 = vld [vmem:[%s148 + $0x818] sm:$0xff]
                %325 = vst [vmem:[%s149 + $0x2b8] sm:$0xff] %v324
                %v326 = vld [vmem:[%s148 + $0x840] sm:$0xff]
                %327 = vst [vmem:[%s149 + $0x2c0] sm:$0xff] %v326
                %v328 = vld [vmem:[%s148 + $0x848] sm:$0xff]
                %329 = vst [vmem:[%s149 + $0x2c8] sm:$0xff] %v328
                %v330 = vld [vmem:[%s148 + $0x870] sm:$0xff]
                %331 = vst [vmem:[%s149 + $0x2d0] sm:$0xff] %v330
                %v332 = vld [vmem:[%s148 + $0x878] sm:$0xff]
                %333 = vst [vmem:[%s149 + $0x2d8] sm:$0xff] %v332
                %v334 = vld [vmem:[%s148 + $0x8a0] sm:$0xff]
                %335 = vst [vmem:[%s149 + $0x2e0] sm:$0xff] %v334
                %v336 = vld [vmem:[%s148 + $0x8a8] sm:$0xff]
                %337 = vst [vmem:[%s149 + $0x2e8] sm:$0xff] %v336
                %v338 = vld [vmem:[%s148 + $0x8d0] sm:$0xff]
                %339 = vst [vmem:[%s149 + $0x2f0] sm:$0xff] %v338
                %v340 = vld [vmem:[%s148 + $0x8d8] sm:$0xff]
                %341 = vst [vmem:[%s149 + $0x2f8] sm:$0xff] %v340
                %v342 = vld [vmem:[%s148 + $0x900] sm:$0xff]
                %343 = vst [vmem:[%s149 + $0x300] sm:$0xff] %v342
                %v344 = vld [vmem:[%s148 + $0x908] sm:$0xff]
                %345 = vst [vmem:[%s149 + $0x308] sm:$0xff] %v344
                %v346 = vld [vmem:[%s148 + $0x930] sm:$0xff]
                %347 = vst [vmem:[%s149 + $0x310] sm:$0xff] %v346
                %v348 = vld [vmem:[%s148 + $0x938] sm:$0xff]
                %349 = vst [vmem:[%s149 + $0x318] sm:$0xff] %v348
                %v350 = vld [vmem:[%s148 + $0x960] sm:$0xff]
                %351 = vst [vmem:[%s149 + $0x320] sm:$0xff] %v350
                %v352 = vld [vmem:[%s148 + $0x968] sm:$0xff]
                %353 = vst [vmem:[%s149 + $0x328] sm:$0xff] %v352
                %v354 = vld [vmem:[%s148 + $0x990] sm:$0xff]
                %355 = vst [vmem:[%s149 + $0x330] sm:$0xff] %v354
                %v356 = vld [vmem:[%s148 + $0x998] sm:$0xff]
                %357 = vst [vmem:[%s149 + $0x338] sm:$0xff] %v356
                %v358 = vld [vmem:[%s148 + $0x9c0] sm:$0xff]
                %359 = vst [vmem:[%s149 + $0x340] sm:$0xff] %v358
                %v360 = vld [vmem:[%s148 + $0x9c8] sm:$0xff]
                %361 = vst [vmem:[%s149 + $0x348] sm:$0xff] %v360
                %v362 = vld [vmem:[%s148 + $0x9f0] sm:$0xff]
                %363 = vst [vmem:[%s149 + $0x350] sm:$0xff] %v362
                %v364 = vld [vmem:[%s148 + $0x9f8] sm:$0xff]
                %365 = vst [vmem:[%s149 + $0x358] sm:$0xff] %v364
                %v366 = vld [vmem:[%s148 + $0xa20] sm:$0xff]
                %367 = vst [vmem:[%s149 + $0x360] sm:$0xff] %v366
                %v368 = vld [vmem:[%s148 + $0xa28] sm:$0xff]
                %369 = vst [vmem:[%s149 + $0x368] sm:$0xff] %v368
                %v370 = vld [vmem:[%s148 + $0xa50] sm:$0xff]
                %371 = vst [vmem:[%s149 + $0x370] sm:$0xff] %v370
                %v372 = vld [vmem:[%s148 + $0xa58] sm:$0xff]
                %373 = vst [vmem:[%s149 + $0x378] sm:$0xff] %v372
                %v374 = vld [vmem:[%s148 + $0xa80] sm:$0xff]
                %375 = vst [vmem:[%s149 + $0x380] sm:$0xff] %v374
                %v376 = vld [vmem:[%s148 + $0xa88] sm:$0xff]
                %377 = vst [vmem:[%s149 + $0x388] sm:$0xff] %v376
                %v378 = vld [vmem:[%s148 + $0xab0] sm:$0xff]
                %379 = vst [vmem:[%s149 + $0x390] sm:$0xff] %v378
                %v380 = vld [vmem:[%s148 + $0xab8] sm:$0xff]
                %381 = vst [vmem:[%s149 + $0x398] sm:$0xff] %v380
                %v382 = vld [vmem:[%s148 + $0xae0] sm:$0xff]
                %383 = vst [vmem:[%s149 + $0x3a0] sm:$0xff] %v382
                %v384 = vld [vmem:[%s148 + $0xae8] sm:$0xff]
                %385 = vst [vmem:[%s149 + $0x3a8] sm:$0xff] %v384
                %v386 = vld [vmem:[%s148 + $0xb10] sm:$0xff]
                %387 = vst [vmem:[%s149 + $0x3b0] sm:$0xff] %v386
                %v388 = vld [vmem:[%s148 + $0xb18] sm:$0xff]
                %389 = vst [vmem:[%s149 + $0x3b8] sm:$0xff] %v388
                %v390 = vld [vmem:[%s148 + $0xb40] sm:$0xff]
                %391 = vst [vmem:[%s149 + $0x3c0] sm:$0xff] %v390
                %v392 = vld [vmem:[%s148 + $0xb48] sm:$0xff]
                %393 = vst [vmem:[%s149 + $0x3c8] sm:$0xff] %v392
                %v394 = vld [vmem:[%s148 + $0xb70] sm:$0xff]
                %395 = vst [vmem:[%s149 + $0x3d0] sm:$0xff] %v394
                %v396 = vld [vmem:[%s148 + $0xb78] sm:$0xff]
                %397 = vst [vmem:[%s149 + $0x3d8] sm:$0xff] %v396
                %v398 = vld [vmem:[%s148 + $0xba0] sm:$0xff]
                %399 = vst [vmem:[%s149 + $0x3e0] sm:$0xff] %v398
                %v400 = vld [vmem:[%s148 + $0xba8] sm:$0xff]
                %401 = vst [vmem:[%s149 + $0x3e8] sm:$0xff] %v400
                %v402 = vld [vmem:[%s148 + $0xbd0] sm:$0xff]
                %403 = vst [vmem:[%s149 + $0x3f0] sm:$0xff] %v402
                %v404 = vld [vmem:[%s148 + $0xbd8] sm:$0xff]
                %405 = vst [vmem:[%s149 + $0x3f8] sm:$0xff] %v404
              $region41: #{cnn_mnist_forward.3} parent=35 // loop_footer
                %s147 = sadd.s32 1, %s143
              $region42: #{cnn_mnist_forward.3} parent=35 // loop_footer_branch
                %142 = sbr.rel target = $region38
              $region43: #{cnn_mnist_forward.3} parent=35 // loop_exit
                _
            $region36: #{cnn_mnist_forward.3} parent=31 // pred_fallthru
              _
            // Predicated region
            $region44: #{cnn_mnist_forward.3} parent=31 // pred_check
              _
            $region45: #{cnn_mnist_forward.3} parent=31 // pred_check_branch
              %407 = sbr.rel target = $region47
            $region46: #{cnn_mnist_forward.3} parent=31 // pred_region
              _
            $region47: #{cnn_mnist_forward.3} parent=31 // pred_fallthru
              _
          $region32: #{cnn_mnist_forward.3} parent=27 // pred_fallthru
            _
          %408 = vnop
        $region28: #{cnn_mnist_forward.3} parent=23 // pred_fallthru
          _
      $region24: #{cnn_mnist_forward.3} parent=5 // pred_fallthru
        _
      %p409 = scmp.le.s32.totalorder 1, %s9
      %p410 = scmp.lt.s32.totalorder %s9, 4
      %p411 = pnand %p409, %p410
      %p412 = pneg %p411
      // Predicated region
      $region48: #{cnn_mnist_forward.3} parent=5 // pred_check
        _
      $region49: #{cnn_mnist_forward.3} parent=5 // pred_check_branch
        %414 = sbr.rel (%p411) target = $region51
      $region50: #{cnn_mnist_forward.3} parent=5 // pred_region
        %s415 = ssub.s32 %s9, 1
        %s416 = sand.u32 %s22, 1
        %s417 = sand.u32 %s22, 1
        %s418 = smul.addr %s417, 1024
        %s419 = scalar_lea.vmem [#allocation3], %s418
        // Predicated region
        $region52: #{cnn_mnist_forward.3} parent=50 // pred_check
          %p420 = pneg %p35
        $region53: #{cnn_mnist_forward.3} parent=50 // pred_check_branch
          %422 = sbr.rel (%p420) target = $region55
        $region54: #{cnn_mnist_forward.3} parent=50 // pred_region
          _
        $region55: #{cnn_mnist_forward.3} parent=50 // pred_fallthru
          _
        %s423 = sand.u32 %s22, 1
        %s424 = sand.u32 %s22, 1
        %s425 = smul.addr %s424, 1024
        %s426 = scalar_lea.vmem [#allocation3], %s425
        %p427 = pneg %p35
        %p428 = pneg %p32
        %p429 = pneg %p56
        %p430 = pneg %p53
        %p431 = pneg %p77
        %p432 = pneg %p74
        %p433 = pneg %p103
        %p434 = pneg %p100
        %s435 = sand.u32 %s90, 1
        %s436 = sand.u32 %s90, 1
        %s437 = smul.addr %s436, 64
        %s438 = scalar_lea.vmem [#allocation4], %s437
        %s439 = smul.u32 4, %s14
        %s440 = smul.u32 4, %s14
        %v442 = vld [vmem:[%s419] sm:$0xff]
        %v443 = vld [vmem:[%s419 + $0x8] sm:$0xff]
        %v444 = vld [vmem:[%s419 + $0x10] sm:$0xff]
        %v445 = vld [vmem:[%s419 + $0x18] sm:$0xff]
        %v446 = vld [vmem:[%s419 + $0x20] sm:$0xff]
        %v447 = vld [vmem:[%s419 + $0x28] sm:$0xff]
        %v448 = vld [vmem:[%s419 + $0x30] sm:$0xff]
        %v449 = vld [vmem:[%s419 + $0x38] sm:$0xff]
        %v450 = vld [vmem:[%s419 + $0x40] sm:$0xff]
        %v451 = vld [vmem:[%s419 + $0x48] sm:$0xff]
        %v452 = vld [vmem:[%s419 + $0x50] sm:$0xff]
        %v453 = vld [vmem:[%s419 + $0x58] sm:$0xff]
        %v454 = vld [vmem:[%s419 + $0x60] sm:$0xff]
        %v455 = vld [vmem:[%s419 + $0x68] sm:$0xff]
        %v456 = vld [vmem:[%s419 + $0x70] sm:$0xff]
        %v457 = vld [vmem:[%s419 + $0x78] sm:$0xff]
        %v458 = vld [vmem:[%s419 + $0x80] sm:$0xff]
        %v459 = vld [vmem:[%s419 + $0x88] sm:$0xff]
        %v460 = vld [vmem:[%s419 + $0x90] sm:$0xff]
        %v461 = vld [vmem:[%s419 + $0x98] sm:$0xff]
        %v462 = vld [vmem:[%s419 + $0xa0] sm:$0xff]
        %v463 = vld [vmem:[%s419 + $0xa8] sm:$0xff]
        %v464 = vld [vmem:[%s419 + $0xb0] sm:$0xff]
        %v465 = vld [vmem:[%s419 + $0xb8] sm:$0xff]
        %v466 = vld [vmem:[%s419 + $0xc0] sm:$0xff]
        %v467 = vld [vmem:[%s419 + $0xc8] sm:$0xff]
        %v468 = vld [vmem:[%s419 + $0xd0] sm:$0xff]
        %v469 = vld [vmem:[%s419 + $0xd8] sm:$0xff]
        %v470 = vld [vmem:[%s419 + $0xe0] sm:$0xff]
        %v471 = vld [vmem:[%s419 + $0xe8] sm:$0xff]
        %v472 = vld [vmem:[%s419 + $0xf0] sm:$0xff]
        %v473 = vld [vmem:[%s419 + $0xf8] sm:$0xff]
        %474 = vst [vmem:[#allocation2] sm:$0xff] %v442
        %475 = vst [vmem:[#allocation2 + $0x8] sm:$0xff] %v443
        %476 = vst [vmem:[#allocation2 + $0x40] sm:$0xff] %v444
        %477 = vst [vmem:[#allocation2 + $0x48] sm:$0xff] %v445
        %478 = vst [vmem:[#allocation2 + $0x80] sm:$0xff] %v446
        %479 = vst [vmem:[#allocation2 + $0x88] sm:$0xff] %v447
        %480 = vst [vmem:[#allocation2 + $0xc0] sm:$0xff] %v448
        %481 = vst [vmem:[#allocation2 + $0xc8] sm:$0xff] %v449
        %482 = vst [vmem:[#allocation2 + $0x100] sm:$0xff] %v450
        %483 = vst [vmem:[#allocation2 + $0x108] sm:$0xff] %v451
        %484 = vst [vmem:[#allocation2 + $0x140] sm:$0xff] %v452
        %485 = vst [vmem:[#allocation2 + $0x148] sm:$0xff] %v453
        %486 = vst [vmem:[#allocation2 + $0x180] sm:$0xff] %v454
        %487 = vst [vmem:[#allocation2 + $0x188] sm:$0xff] %v455
        %488 = vst [vmem:[#allocation2 + $0x1c0] sm:$0xff] %v456
        %489 = vst [vmem:[#allocation2 + $0x1c8] sm:$0xff] %v457
        %490 = vst [vmem:[#allocation2 + $0x200] sm:$0xff] %v458
        %491 = vst [vmem:[#allocation2 + $0x208] sm:$0xff] %v459
        %492 = vst [vmem:[#allocation2 + $0x240] sm:$0xff] %v460
        %493 = vst [vmem:[#allocation2 + $0x248] sm:$0xff] %v461
        %494 = vst [vmem:[#allocation2 + $0x280] sm:$0xff] %v462
        %495 = vst [vmem:[#allocation2 + $0x288] sm:$0xff] %v463
        %496 = vst [vmem:[#allocation2 + $0x2c0] sm:$0xff] %v464
        %497 = vst [vmem:[#allocation2 + $0x2c8] sm:$0xff] %v465
        %498 = vst [vmem:[#allocation2 + $0x300] sm:$0xff] %v466
        %499 = vst [vmem:[#allocation2 + $0x308] sm:$0xff] %v467
        %500 = vst [vmem:[#allocation2 + $0x340] sm:$0xff] %v468
        %501 = vst [vmem:[#allocation2 + $0x348] sm:$0xff] %v469
        %502 = vst [vmem:[#allocation2 + $0x380] sm:$0xff] %v470
        %503 = vst [vmem:[#allocation2 + $0x388] sm:$0xff] %v471
        %504 = vst [vmem:[#allocation2 + $0x3c0] sm:$0xff] %v472
        %505 = vst [vmem:[#allocation2 + $0x3c8] sm:$0xff] %v473
        %s506 = scalar_lea.vmem %s419, 256 [#allocation3]
        %v507 = vld [vmem:[%s506] sm:$0xff]
        %v508 = vld [vmem:[%s506 + $0x8] sm:$0xff]
        %v509 = vld [vmem:[%s506 + $0x10] sm:$0xff]
        %v510 = vld [vmem:[%s506 + $0x18] sm:$0xff]
        %v511 = vld [vmem:[%s506 + $0x20] sm:$0xff]
        %v512 = vld [vmem:[%s506 + $0x28] sm:$0xff]
        %v513 = vld [vmem:[%s506 + $0x30] sm:$0xff]
        %v514 = vld [vmem:[%s506 + $0x38] sm:$0xff]
        %v515 = vld [vmem:[%s506 + $0x40] sm:$0xff]
        %v516 = vld [vmem:[%s506 + $0x48] sm:$0xff]
        %v517 = vld [vmem:[%s506 + $0x50] sm:$0xff]
        %v518 = vld [vmem:[%s506 + $0x58] sm:$0xff]
        %v519 = vld [vmem:[%s506 + $0x60] sm:$0xff]
        %v520 = vld [vmem:[%s506 + $0x68] sm:$0xff]
        %v521 = vld [vmem:[%s506 + $0x70] sm:$0xff]
        %v522 = vld [vmem:[%s506 + $0x78] sm:$0xff]
        %v523 = vld [vmem:[%s506 + $0x80] sm:$0xff]
        %v524 = vld [vmem:[%s506 + $0x88] sm:$0xff]
        %v525 = vld [vmem:[%s506 + $0x90] sm:$0xff]
        %v526 = vld [vmem:[%s506 + $0x98] sm:$0xff]
        %v527 = vld [vmem:[%s506 + $0xa0] sm:$0xff]
        %v528 = vld [vmem:[%s506 + $0xa8] sm:$0xff]
        %v529 = vld [vmem:[%s506 + $0xb0] sm:$0xff]
        %v530 = vld [vmem:[%s506 + $0xb8] sm:$0xff]
        %v531 = vld [vmem:[%s506 + $0xc0] sm:$0xff]
        %v532 = vld [vmem:[%s506 + $0xc8] sm:$0xff]
        %v533 = vld [vmem:[%s506 + $0xd0] sm:$0xff]
        %v534 = vld [vmem:[%s506 + $0xd8] sm:$0xff]
        %v535 = vld [vmem:[%s506 + $0xe0] sm:$0xff]
        %v536 = vld [vmem:[%s506 + $0xe8] sm:$0xff]
        %v537 = vld [vmem:[%s506 + $0xf0] sm:$0xff]
        %v538 = vld [vmem:[%s506 + $0xf8] sm:$0xff]
        %539 = vst [vmem:[#allocation2 + $0x10] sm:$0xff] %v507
        %540 = vst [vmem:[#allocation2 + $0x18] sm:$0xff] %v508
        %541 = vst [vmem:[#allocation2 + $0x50] sm:$0xff] %v509
        %542 = vst [vmem:[#allocation2 + $0x58] sm:$0xff] %v510
        %543 = vst [vmem:[#allocation2 + $0x90] sm:$0xff] %v511
        %544 = vst [vmem:[#allocation2 + $0x98] sm:$0xff] %v512
        %545 = vst [vmem:[#allocation2 + $0xd0] sm:$0xff] %v513
        %546 = vst [vmem:[#allocation2 + $0xd8] sm:$0xff] %v514
        %547 = vst [vmem:[#allocation2 + $0x110] sm:$0xff] %v515
        %548 = vst [vmem:[#allocation2 + $0x118] sm:$0xff] %v516
        %549 = vst [vmem:[#allocation2 + $0x150] sm:$0xff] %v517
        %550 = vst [vmem:[#allocation2 + $0x158] sm:$0xff] %v518
        %551 = vst [vmem:[#allocation2 + $0x190] sm:$0xff] %v519
        %552 = vst [vmem:[#allocation2 + $0x198] sm:$0xff] %v520
        %553 = vst [vmem:[#allocation2 + $0x1d0] sm:$0xff] %v521
        %554 = vst [vmem:[#allocation2 + $0x1d8] sm:$0xff] %v522
        %555 = vst [vmem:[#allocation2 + $0x210] sm:$0xff] %v523
        %556 = vst [vmem:[#allocation2 + $0x218] sm:$0xff] %v524
        %557 = vst [vmem:[#allocation2 + $0x250] sm:$0xff] %v525
        %558 = vst [vmem:[#allocation2 + $0x258] sm:$0xff] %v526
        %559 = vst [vmem:[#allocation2 + $0x290] sm:$0xff] %v527
        %560 = vst [vmem:[#allocation2 + $0x298] sm:$0xff] %v528
        %561 = vst [vmem:[#allocation2 + $0x2d0] sm:$0xff] %v529
        %562 = vst [vmem:[#allocation2 + $0x2d8] sm:$0xff] %v530
        %563 = vst [vmem:[#allocation2 + $0x310] sm:$0xff] %v531
        %564 = vst [vmem:[#allocation2 + $0x318] sm:$0xff] %v532
        %565 = vst [vmem:[#allocation2 + $0x350] sm:$0xff] %v533
        %566 = vst [vmem:[#allocation2 + $0x358] sm:$0xff] %v534
        %567 = vst [vmem:[#allocation2 + $0x390] sm:$0xff] %v535
        %568 = vst [vmem:[#allocation2 + $0x398] sm:$0xff] %v536
        %569 = vst [vmem:[#allocation2 + $0x3d0] sm:$0xff] %v537
        %570 = vst [vmem:[#allocation2 + $0x3d8] sm:$0xff] %v538
        %s571 = scalar_lea.vmem %s419, 512 [#allocation3]
        %v572 = vld [vmem:[%s571] sm:$0xff]
        %v573 = vld [vmem:[%s571 + $0x8] sm:$0xff]
        %v574 = vld [vmem:[%s571 + $0x10] sm:$0xff]
        %v575 = vld [vmem:[%s571 + $0x18] sm:$0xff]
        %v576 = vld [vmem:[%s571 + $0x20] sm:$0xff]
        %v577 = vld [vmem:[%s571 + $0x28] sm:$0xff]
        %v578 = vld [vmem:[%s571 + $0x30] sm:$0xff]
        %v579 = vld [vmem:[%s571 + $0x38] sm:$0xff]
        %v580 = vld [vmem:[%s571 + $0x40] sm:$0xff]
        %v581 = vld [vmem:[%s571 + $0x48] sm:$0xff]
        %v582 = vld [vmem:[%s571 + $0x50] sm:$0xff]
        %v583 = vld [vmem:[%s571 + $0x58] sm:$0xff]
        %v584 = vld [vmem:[%s571 + $0x60] sm:$0xff]
        %v585 = vld [vmem:[%s571 + $0x68] sm:$0xff]
        %v586 = vld [vmem:[%s571 + $0x70] sm:$0xff]
        %v587 = vld [vmem:[%s571 + $0x78] sm:$0xff]
        %v588 = vld [vmem:[%s571 + $0x80] sm:$0xff]
        %v589 = vld [vmem:[%s571 + $0x88] sm:$0xff]
        %v590 = vld [vmem:[%s571 + $0x90] sm:$0xff]
        %v591 = vld [vmem:[%s571 + $0x98] sm:$0xff]
        %v592 = vld [vmem:[%s571 + $0xa0] sm:$0xff]
        %v593 = vld [vmem:[%s571 + $0xa8] sm:$0xff]
        %v594 = vld [vmem:[%s571 + $0xb0] sm:$0xff]
        %v595 = vld [vmem:[%s571 + $0xb8] sm:$0xff]
        %v596 = vld [vmem:[%s571 + $0xc0] sm:$0xff]
        %v597 = vld [vmem:[%s571 + $0xc8] sm:$0xff]
        %v598 = vld [vmem:[%s571 + $0xd0] sm:$0xff]
        %v599 = vld [vmem:[%s571 + $0xd8] sm:$0xff]
        %v600 = vld [vmem:[%s571 + $0xe0] sm:$0xff]
        %v601 = vld [vmem:[%s571 + $0xe8] sm:$0xff]
        %v602 = vld [vmem:[%s571 + $0xf0] sm:$0xff]
        %v603 = vld [vmem:[%s571 + $0xf8] sm:$0xff]
        %604 = vst [vmem:[#allocation2 + $0x20] sm:$0xff] %v572
        %605 = vst [vmem:[#allocation2 + $0x28] sm:$0xff] %v573
        %606 = vst [vmem:[#allocation2 + $0x60] sm:$0xff] %v574
        %607 = vst [vmem:[#allocation2 + $0x68] sm:$0xff] %v575
        %608 = vst [vmem:[#allocation2 + $0xa0] sm:$0xff] %v576
        %609 = vst [vmem:[#allocation2 + $0xa8] sm:$0xff] %v577
        %610 = vst [vmem:[#allocation2 + $0xe0] sm:$0xff] %v578
        %611 = vst [vmem:[#allocation2 + $0xe8] sm:$0xff] %v579
        %612 = vst [vmem:[#allocation2 + $0x120] sm:$0xff] %v580
        %613 = vst [vmem:[#allocation2 + $0x128] sm:$0xff] %v581
        %614 = vst [vmem:[#allocation2 + $0x160] sm:$0xff] %v582
        %615 = vst [vmem:[#allocation2 + $0x168] sm:$0xff] %v583
        %616 = vst [vmem:[#allocation2 + $0x1a0] sm:$0xff] %v584
        %617 = vst [vmem:[#allocation2 + $0x1a8] sm:$0xff] %v585
        %618 = vst [vmem:[#allocation2 + $0x1e0] sm:$0xff] %v586
        %619 = vst [vmem:[#allocation2 + $0x1e8] sm:$0xff] %v587
        %620 = vst [vmem:[#allocation2 + $0x220] sm:$0xff] %v588
        %621 = vst [vmem:[#allocation2 + $0x228] sm:$0xff] %v589
        %622 = vst [vmem:[#allocation2 + $0x260] sm:$0xff] %v590
        %623 = vst [vmem:[#allocation2 + $0x268] sm:$0xff] %v591
        %624 = vst [vmem:[#allocation2 + $0x2a0] sm:$0xff] %v592
        %625 = vst [vmem:[#allocation2 + $0x2a8] sm:$0xff] %v593
        %626 = vst [vmem:[#allocation2 + $0x2e0] sm:$0xff] %v594
        %627 = vst [vmem:[#allocation2 + $0x2e8] sm:$0xff] %v595
        %628 = vst [vmem:[#allocation2 + $0x320] sm:$0xff] %v596
        %629 = vst [vmem:[#allocation2 + $0x328] sm:$0xff] %v597
        %630 = vst [vmem:[#allocation2 + $0x360] sm:$0xff] %v598
        %631 = vst [vmem:[#allocation2 + $0x368] sm:$0xff] %v599
        %632 = vst [vmem:[#allocation2 + $0x3a0] sm:$0xff] %v600
        %633 = vst [vmem:[#allocation2 + $0x3a8] sm:$0xff] %v601
        %634 = vst [vmem:[#allocation2 + $0x3e0] sm:$0xff] %v602
        %635 = vst [vmem:[#allocation2 + $0x3e8] sm:$0xff] %v603
        %s636 = scalar_lea.vmem %s419, 768 [#allocation3]
        %v637 = vld [vmem:[%s636] sm:$0xff]
        %v638 = vld [vmem:[%s636 + $0x8] sm:$0xff]
        %v639 = vld [vmem:[%s636 + $0x10] sm:$0xff]
        %v640 = vld [vmem:[%s636 + $0x18] sm:$0xff]
        %v641 = vld [vmem:[%s636 + $0x20] sm:$0xff]
        %v642 = vld [vmem:[%s636 + $0x28] sm:$0xff]
        %v643 = vld [vmem:[%s636 + $0x30] sm:$0xff]
        %v644 = vld [vmem:[%s636 + $0x38] sm:$0xff]
        %v645 = vld [vmem:[%s636 + $0x40] sm:$0xff]
        %v646 = vld [vmem:[%s636 + $0x48] sm:$0xff]
        %v647 = vld [vmem:[%s636 + $0x50] sm:$0xff]
        %v648 = vld [vmem:[%s636 + $0x58] sm:$0xff]
        %v649 = vld [vmem:[%s636 + $0x60] sm:$0xff]
        %v650 = vld [vmem:[%s636 + $0x68] sm:$0xff]
        %v651 = vld [vmem:[%s636 + $0x70] sm:$0xff]
        %v652 = vld [vmem:[%s636 + $0x78] sm:$0xff]
        %v653 = vld [vmem:[%s636 + $0x80] sm:$0xff]
        %v654 = vld [vmem:[%s636 + $0x88] sm:$0xff]
        %v655 = vld [vmem:[%s636 + $0x90] sm:$0xff]
        %v656 = vld [vmem:[%s636 + $0x98] sm:$0xff]
        %v657 = vld [vmem:[%s636 + $0xa0] sm:$0xff]
        %v658 = vld [vmem:[%s636 + $0xa8] sm:$0xff]
        %v659 = vld [vmem:[%s636 + $0xb0] sm:$0xff]
        %v660 = vld [vmem:[%s636 + $0xb8] sm:$0xff]
        %v661 = vld [vmem:[%s636 + $0xc0] sm:$0xff]
        %v662 = vld [vmem:[%s636 + $0xc8] sm:$0xff]
        %v663 = vld [vmem:[%s636 + $0xd0] sm:$0xff]
        %v664 = vld [vmem:[%s636 + $0xd8] sm:$0xff]
        %v665 = vld [vmem:[%s636 + $0xe0] sm:$0xff]
        %v666 = vld [vmem:[%s636 + $0xe8] sm:$0xff]
        %v667 = vld [vmem:[%s636 + $0xf0] sm:$0xff]
        %v668 = vld [vmem:[%s636 + $0xf8] sm:$0xff]
        %669 = vst [vmem:[#allocation2 + $0x30] sm:$0xff] %v637
        %670 = vst [vmem:[#allocation2 + $0x38] sm:$0xff] %v638
        %671 = vst [vmem:[#allocation2 + $0x70] sm:$0xff] %v639
        %672 = vst [vmem:[#allocation2 + $0x78] sm:$0xff] %v640
        %673 = vst [vmem:[#allocation2 + $0xb0] sm:$0xff] %v641
        %674 = vst [vmem:[#allocation2 + $0xb8] sm:$0xff] %v642
        %675 = vst [vmem:[#allocation2 + $0xf0] sm:$0xff] %v643
        %676 = vst [vmem:[#allocation2 + $0xf8] sm:$0xff] %v644
        %677 = vst [vmem:[#allocation2 + $0x130] sm:$0xff] %v645
        %678 = vst [vmem:[#allocation2 + $0x138] sm:$0xff] %v646
        %679 = vst [vmem:[#allocation2 + $0x170] sm:$0xff] %v647
        %680 = vst [vmem:[#allocation2 + $0x178] sm:$0xff] %v648
        %681 = vst [vmem:[#allocation2 + $0x1b0] sm:$0xff] %v649
        %682 = vst [vmem:[#allocation2 + $0x1b8] sm:$0xff] %v650
        %683 = vst [vmem:[#allocation2 + $0x1f0] sm:$0xff] %v651
        %684 = vst [vmem:[#allocation2 + $0x1f8] sm:$0xff] %v652
        %685 = vst [vmem:[#allocation2 + $0x230] sm:$0xff] %v653
        %686 = vst [vmem:[#allocation2 + $0x238] sm:$0xff] %v654
        %687 = vst [vmem:[#allocation2 + $0x270] sm:$0xff] %v655
        %688 = vst [vmem:[#allocation2 + $0x278] sm:$0xff] %v656
        %689 = vst [vmem:[#allocation2 + $0x2b0] sm:$0xff] %v657
        %690 = vst [vmem:[#allocation2 + $0x2b8] sm:$0xff] %v658
        %691 = vst [vmem:[#allocation2 + $0x2f0] sm:$0xff] %v659
        %692 = vst [vmem:[#allocation2 + $0x2f8] sm:$0xff] %v660
        %693 = vst [vmem:[#allocation2 + $0x330] sm:$0xff] %v661
        %694 = vst [vmem:[#allocation2 + $0x338] sm:$0xff] %v662
        %695 = vst [vmem:[#allocation2 + $0x370] sm:$0xff] %v663
        %696 = vst [vmem:[#allocation2 + $0x378] sm:$0xff] %v664
        %697 = vst [vmem:[#allocation2 + $0x3b0] sm:$0xff] %v665
        %698 = vst [vmem:[#allocation2 + $0x3b8] sm:$0xff] %v666
        %699 = vst [vmem:[#allocation2 + $0x3f0] sm:$0xff] %v667
        %700 = vst [vmem:[#allocation2 + $0x3f8] sm:$0xff] %v668
        %v701 = vld [vmem:[%s1] sm:$0xf]
        %v702 = vld [vmem:[%s1 + $0x4] sm:$0xf]
        %v703 = vld [vmem:[#allocation2] sm:$0xff]
        %v704 = vld [vmem:[#allocation2 + $0x8] sm:$0xff]
        %v705 = vld [vmem:[#allocation2 + $0x10] sm:$0xff]
        %v706 = vld [vmem:[#allocation2 + $0x18] sm:$0xff]
        %v707 = vld [vmem:[#allocation2 + $0x20] sm:$0xff]
        %v708 = vld [vmem:[#allocation2 + $0x28] sm:$0xff]
        %v709 = vld [vmem:[#allocation2 + $0x30] sm:$0xff]
        %v710 = vld [vmem:[#allocation2 + $0x38] sm:$0xff]
        %v711 = vld [vmem:[#allocation2 + $0x40] sm:$0xff]
        %v712 = vld [vmem:[#allocation2 + $0x48] sm:$0xff]
        %v713 = vld [vmem:[#allocation2 + $0x50] sm:$0xff]
        %v714 = vld [vmem:[#allocation2 + $0x58] sm:$0xff]
        %v715 = vld [vmem:[#allocation2 + $0x60] sm:$0xff]
        %v716 = vld [vmem:[#allocation2 + $0x68] sm:$0xff]
        %v717 = vld [vmem:[#allocation2 + $0x70] sm:$0xff]
        %v718 = vld [vmem:[#allocation2 + $0x78] sm:$0xff]
        %v719 = vld [vmem:[#allocation2 + $0x80] sm:$0xff]
        %v720 = vld [vmem:[#allocation2 + $0x88] sm:$0xff]
        %v721 = vld [vmem:[#allocation2 + $0x90] sm:$0xff]
        %v722 = vld [vmem:[#allocation2 + $0x98] sm:$0xff]
        %v723 = vld [vmem:[#allocation2 + $0xa0] sm:$0xff]
        %v724 = vld [vmem:[#allocation2 + $0xa8] sm:$0xff]
        %v725 = vld [vmem:[#allocation2 + $0xb0] sm:$0xff]
        %v726 = vld [vmem:[#allocation2 + $0xb8] sm:$0xff]
        %v727 = vld [vmem:[#allocation2 + $0xc0] sm:$0xff]
        %v728 = vld [vmem:[#allocation2 + $0xc8] sm:$0xff]
        %v729 = vld [vmem:[#allocation2 + $0xd0] sm:$0xff]
        %v730 = vld [vmem:[#allocation2 + $0xd8] sm:$0xff]
        %v731 = vld [vmem:[#allocation2 + $0xe0] sm:$0xff]
        %v732 = vld [vmem:[#allocation2 + $0xe8] sm:$0xff]
        %v733 = vld [vmem:[#allocation2 + $0xf0] sm:$0xff]
        %v734 = vld [vmem:[#allocation2 + $0xf8] sm:$0xff]
        %v735 = vld [vmem:[#allocation2 + $0x100] sm:$0xff]
        %v736 = vld [vmem:[#allocation2 + $0x108] sm:$0xff]
        %v737 = vld [vmem:[#allocation2 + $0x110] sm:$0xff]
        %v738 = vld [vmem:[#allocation2 + $0x118] sm:$0xff]
        %v739 = vld [vmem:[#allocation2 + $0x120] sm:$0xff]
        %v740 = vld [vmem:[#allocation2 + $0x128] sm:$0xff]
        %v741 = vld [vmem:[#allocation2 + $0x130] sm:$0xff]
        %v742 = vld [vmem:[#allocation2 + $0x138] sm:$0xff]
        %v743 = vld [vmem:[#allocation2 + $0x140] sm:$0xff]
        %v744 = vld [vmem:[#allocation2 + $0x148] sm:$0xff]
        %v745 = vld [vmem:[#allocation2 + $0x150] sm:$0xff]
        %v746 = vld [vmem:[#allocation2 + $0x158] sm:$0xff]
        %v747 = vld [vmem:[#allocation2 + $0x160] sm:$0xff]
        %v748 = vld [vmem:[#allocation2 + $0x168] sm:$0xff]
        %v749 = vld [vmem:[#allocation2 + $0x170] sm:$0xff]
        %v750 = vld [vmem:[#allocation2 + $0x178] sm:$0xff]
        %v751 = vld [vmem:[#allocation2 + $0x180] sm:$0xff]
        %v752 = vld [vmem:[#allocation2 + $0x188] sm:$0xff]
        %v753 = vld [vmem:[#allocation2 + $0x190] sm:$0xff]
        %v754 = vld [vmem:[#allocation2 + $0x198] sm:$0xff]
        %v755 = vld [vmem:[#allocation2 + $0x1a0] sm:$0xff]
        %v756 = vld [vmem:[#allocation2 + $0x1a8] sm:$0xff]
        %v757 = vld [vmem:[#allocation2 + $0x1b0] sm:$0xff]
        %v758 = vld [vmem:[#allocation2 + $0x1b8] sm:$0xff]
        %v759 = vld [vmem:[#allocation2 + $0x1c0] sm:$0xff]
        %v760 = vld [vmem:[#allocation2 + $0x1c8] sm:$0xff]
        %v761 = vld [vmem:[#allocation2 + $0x1d0] sm:$0xff]
        %v762 = vld [vmem:[#allocation2 + $0x1d8] sm:$0xff]
        %v763 = vld [vmem:[#allocation2 + $0x1e0] sm:$0xff]
        %v764 = vld [vmem:[#allocation2 + $0x1e8] sm:$0xff]
        %v765 = vld [vmem:[#allocation2 + $0x1f0] sm:$0xff]
        %v766 = vld [vmem:[#allocation2 + $0x1f8] sm:$0xff]
        %v767 = vld [vmem:[#allocation2 + $0x200] sm:$0xff]
        %v768 = vld [vmem:[#allocation2 + $0x208] sm:$0xff]
        %v769 = vld [vmem:[#allocation2 + $0x210] sm:$0xff]
        %v770 = vld [vmem:[#allocation2 + $0x218] sm:$0xff]
        %v771 = vld [vmem:[#allocation2 + $0x220] sm:$0xff]
        %v772 = vld [vmem:[#allocation2 + $0x228] sm:$0xff]
        %v773 = vld [vmem:[#allocation2 + $0x230] sm:$0xff]
        %v774 = vld [vmem:[#allocation2 + $0x238] sm:$0xff]
        %v775 = vld [vmem:[#allocation2 + $0x240] sm:$0xff]
        %v776 = vld [vmem:[#allocation2 + $0x248] sm:$0xff]
        %v777 = vld [vmem:[#allocation2 + $0x250] sm:$0xff]
        %v778 = vld [vmem:[#allocation2 + $0x258] sm:$0xff]
        %v779 = vld [vmem:[#allocation2 + $0x260] sm:$0xff]
        %v780 = vld [vmem:[#allocation2 + $0x268] sm:$0xff]
        %v781 = vld [vmem:[#allocation2 + $0x270] sm:$0xff]
        %v782 = vld [vmem:[#allocation2 + $0x278] sm:$0xff]
        %v783 = vld [vmem:[#allocation2 + $0x280] sm:$0xff]
        %v784 = vld [vmem:[#allocation2 + $0x288] sm:$0xff]
        %v785 = vld [vmem:[#allocation2 + $0x290] sm:$0xff]
        %v786 = vld [vmem:[#allocation2 + $0x298] sm:$0xff]
        %v787 = vld [vmem:[#allocation2 + $0x2a0] sm:$0xff]
        %v788 = vld [vmem:[#allocation2 + $0x2a8] sm:$0xff]
        %v789 = vld [vmem:[#allocation2 + $0x2b0] sm:$0xff]
        %v790 = vld [vmem:[#allocation2 + $0x2b8] sm:$0xff]
        %v791 = vld [vmem:[#allocation2 + $0x2c0] sm:$0xff]
        %v792 = vld [vmem:[#allocation2 + $0x2c8] sm:$0xff]
        %v793 = vld [vmem:[#allocation2 + $0x2d0] sm:$0xff]
        %v794 = vld [vmem:[#allocation2 + $0x2d8] sm:$0xff]
        %v795 = vld [vmem:[#allocation2 + $0x2e0] sm:$0xff]
        %v796 = vld [vmem:[#allocation2 + $0x2e8] sm:$0xff]
        %v797 = vld [vmem:[#allocation2 + $0x2f0] sm:$0xff]
        %v798 = vld [vmem:[#allocation2 + $0x2f8] sm:$0xff]
        %v799 = vld [vmem:[#allocation2 + $0x300] sm:$0xff]
        %v800 = vld [vmem:[#allocation2 + $0x308] sm:$0xff]
        %v801 = vld [vmem:[#allocation2 + $0x310] sm:$0xff]
        %v802 = vld [vmem:[#allocation2 + $0x318] sm:$0xff]
        %v803 = vld [vmem:[#allocation2 + $0x320] sm:$0xff]
        %v804 = vld [vmem:[#allocation2 + $0x328] sm:$0xff]
        %v805 = vld [vmem:[#allocation2 + $0x330] sm:$0xff]
        %v806 = vld [vmem:[#allocation2 + $0x338] sm:$0xff]
        %v807 = vld [vmem:[#allocation2 + $0x340] sm:$0xff]
        %v808 = vld [vmem:[#allocation2 + $0x348] sm:$0xff]
        %v809 = vld [vmem:[#allocation2 + $0x350] sm:$0xff]
        %v810 = vld [vmem:[#allocation2 + $0x358] sm:$0xff]
        %v811 = vld [vmem:[#allocation2 + $0x360] sm:$0xff]
        %v812 = vld [vmem:[#allocation2 + $0x368] sm:$0xff]
        %v813 = vld [vmem:[#allocation2 + $0x370] sm:$0xff]
        %v814 = vld [vmem:[#allocation2 + $0x378] sm:$0xff]
        %v815 = vld [vmem:[#allocation2 + $0x380] sm:$0xff]
        %v816 = vld [vmem:[#allocation2 + $0x388] sm:$0xff]
        %v817 = vld [vmem:[#allocation2 + $0x390] sm:$0xff]
        %v818 = vld [vmem:[#allocation2 + $0x398] sm:$0xff]
        %v819 = vld [vmem:[#allocation2 + $0x3a0] sm:$0xff]
        %v820 = vld [vmem:[#allocation2 + $0x3a8] sm:$0xff]
        %v821 = vld [vmem:[#allocation2 + $0x3b0] sm:$0xff]
        %v822 = vld [vmem:[#allocation2 + $0x3b8] sm:$0xff]
        %v823 = vld [vmem:[#allocation2 + $0x3c0] sm:$0xff]
        %v824 = vld [vmem:[#allocation2 + $0x3c8] sm:$0xff]
        %v825 = vld [vmem:[#allocation2 + $0x3d0] sm:$0xff]
        %v826 = vld [vmem:[#allocation2 + $0x3d8] sm:$0xff]
        %v827 = vld [vmem:[#allocation2 + $0x3e0] sm:$0xff]
        %v828 = vld [vmem:[#allocation2 + $0x3e8] sm:$0xff]
        %v829 = vld [vmem:[#allocation2 + $0x3f0] sm:$0xff]
        %v830 = vld [vmem:[#allocation2 + $0x3f8] sm:$0xff]
        %v833 = vunpack.c.l.b16 %v701
        %v834 = vunpack.c.l.b16 %v702
        %v835 = vpack.c.b16 %v834, %v833
        %v965 = vunpack.c.l.b16 %v703
        %v966 = vunpack.c.h.b16 %v703
        %v967 = vunpack.c.l.b16 %v704
        %v968 = vunpack.c.h.b16 %v704
        %v969 = vunpack.c.l.b16 %v705
        %v970 = vunpack.c.h.b16 %v705
        %v971 = vunpack.c.l.b16 %v706
        %v972 = vunpack.c.h.b16 %v706
        %v973 = vunpack.c.l.b16 %v707
        %v974 = vunpack.c.h.b16 %v707
        %v975 = vunpack.c.l.b16 %v708
        %v976 = vunpack.c.h.b16 %v708
        %v977 = vunpack.c.l.b16 %v709
        %v978 = vunpack.c.h.b16 %v709
        %v979 = vunpack.c.l.b16 %v710
        %v980 = vunpack.c.h.b16 %v710
        %v981 = vunpack.c.l.b16 %v711
        %v982 = vunpack.c.h.b16 %v711
        %v983 = vunpack.c.l.b16 %v712
        %v984 = vunpack.c.h.b16 %v712
        %v985 = vunpack.c.l.b16 %v713
        %v986 = vunpack.c.h.b16 %v713
        %v987 = vunpack.c.l.b16 %v714
        %v988 = vunpack.c.h.b16 %v714
        %v989 = vunpack.c.l.b16 %v715
        %v990 = vunpack.c.h.b16 %v715
        %v991 = vunpack.c.l.b16 %v716
        %v992 = vunpack.c.h.b16 %v716
        %v993 = vunpack.c.l.b16 %v717
        %v994 = vunpack.c.h.b16 %v717
        %v995 = vunpack.c.l.b16 %v718
        %v996 = vunpack.c.h.b16 %v718
        %v997 = vunpack.c.l.b16 %v719
        %v998 = vunpack.c.h.b16 %v719
        %v999 = vunpack.c.l.b16 %v720
        %v1000 = vunpack.c.h.b16 %v720
        %v1001 = vunpack.c.l.b16 %v721
        %v1002 = vunpack.c.h.b16 %v721
        %v1003 = vunpack.c.l.b16 %v722
        %v1004 = vunpack.c.h.b16 %v722
        %v1005 = vunpack.c.l.b16 %v723
        %v1006 = vunpack.c.h.b16 %v723
        %v1007 = vunpack.c.l.b16 %v724
        %v1008 = vunpack.c.h.b16 %v724
        %v1009 = vunpack.c.l.b16 %v725
        %v1010 = vunpack.c.h.b16 %v725
        %v1011 = vunpack.c.l.b16 %v726
        %v1012 = vunpack.c.h.b16 %v726
        %v1013 = vunpack.c.l.b16 %v727
        %v1014 = vunpack.c.h.b16 %v727
        %v1015 = vunpack.c.l.b16 %v728
        %v1016 = vunpack.c.h.b16 %v728
        %v1017 = vunpack.c.l.b16 %v729
        %v1018 = vunpack.c.h.b16 %v729
        %v1019 = vunpack.c.l.b16 %v730
        %v1020 = vunpack.c.h.b16 %v730
        %v1021 = vunpack.c.l.b16 %v731
        %v1022 = vunpack.c.h.b16 %v731
        %v1023 = vunpack.c.l.b16 %v732
        %v1024 = vunpack.c.h.b16 %v732
        %v1025 = vunpack.c.l.b16 %v733
        %v1026 = vunpack.c.h.b16 %v733
        %v1027 = vunpack.c.l.b16 %v734
        %v1028 = vunpack.c.h.b16 %v734
        %v1029 = vunpack.c.l.b16 %v735
        %v1030 = vunpack.c.h.b16 %v735
        %v1031 = vunpack.c.l.b16 %v736
        %v1032 = vunpack.c.h.b16 %v736
        %v1033 = vunpack.c.l.b16 %v737
        %v1034 = vunpack.c.h.b16 %v737
        %v1035 = vunpack.c.l.b16 %v738
        %v1036 = vunpack.c.h.b16 %v738
        %v1037 = vunpack.c.l.b16 %v739
        %v1038 = vunpack.c.h.b16 %v739
        %v1039 = vunpack.c.l.b16 %v740
        %v1040 = vunpack.c.h.b16 %v740
        %v1041 = vunpack.c.l.b16 %v741
        %v1042 = vunpack.c.h.b16 %v741
        %v1043 = vunpack.c.l.b16 %v742
        %v1044 = vunpack.c.h.b16 %v742
        %v1045 = vunpack.c.l.b16 %v743
        %v1046 = vunpack.c.h.b16 %v743
        %v1047 = vunpack.c.l.b16 %v744
        %v1048 = vunpack.c.h.b16 %v744
        %v1049 = vunpack.c.l.b16 %v745
        %v1050 = vunpack.c.h.b16 %v745
        %v1051 = vunpack.c.l.b16 %v746
        %v1052 = vunpack.c.h.b16 %v746
        %v1053 = vunpack.c.l.b16 %v747
        %v1054 = vunpack.c.h.b16 %v747
        %v1055 = vunpack.c.l.b16 %v748
        %v1056 = vunpack.c.h.b16 %v748
        %v1057 = vunpack.c.l.b16 %v749
        %v1058 = vunpack.c.h.b16 %v749
        %v1059 = vunpack.c.l.b16 %v750
        %v1060 = vunpack.c.h.b16 %v750
        %v1061 = vunpack.c.l.b16 %v751
        %v1062 = vunpack.c.h.b16 %v751
        %v1063 = vunpack.c.l.b16 %v752
        %v1064 = vunpack.c.h.b16 %v752
        %v1065 = vunpack.c.l.b16 %v753
        %v1066 = vunpack.c.h.b16 %v753
        %v1067 = vunpack.c.l.b16 %v754
        %v1068 = vunpack.c.h.b16 %v754
        %v1069 = vunpack.c.l.b16 %v755
        %v1070 = vunpack.c.h.b16 %v755
        %v1071 = vunpack.c.l.b16 %v756
        %v1072 = vunpack.c.h.b16 %v756
        %v1073 = vunpack.c.l.b16 %v757
        %v1074 = vunpack.c.h.b16 %v757
        %v1075 = vunpack.c.l.b16 %v758
        %v1076 = vunpack.c.h.b16 %v758
        %v1077 = vunpack.c.l.b16 %v759
        %v1078 = vunpack.c.h.b16 %v759
        %v1079 = vunpack.c.l.b16 %v760
        %v1080 = vunpack.c.h.b16 %v760
        %v1081 = vunpack.c.l.b16 %v761
        %v1082 = vunpack.c.h.b16 %v761
        %v1083 = vunpack.c.l.b16 %v762
        %v1084 = vunpack.c.h.b16 %v762
        %v1085 = vunpack.c.l.b16 %v763
        %v1086 = vunpack.c.h.b16 %v763
        %v1087 = vunpack.c.l.b16 %v764
        %v1088 = vunpack.c.h.b16 %v764
        %v1089 = vunpack.c.l.b16 %v765
        %v1090 = vunpack.c.h.b16 %v765
        %v1091 = vunpack.c.l.b16 %v766
        %v1092 = vunpack.c.h.b16 %v766
        %v1093 = vunpack.c.l.b16 %v767
        %v1094 = vunpack.c.h.b16 %v767
        %v1095 = vunpack.c.l.b16 %v768
        %v1096 = vunpack.c.h.b16 %v768
        %v1097 = vunpack.c.l.b16 %v769
        %v1098 = vunpack.c.h.b16 %v769
        %v1099 = vunpack.c.l.b16 %v770
        %v1100 = vunpack.c.h.b16 %v770
        %v1101 = vunpack.c.l.b16 %v771
        %v1102 = vunpack.c.h.b16 %v771
        %v1103 = vunpack.c.l.b16 %v772
        %v1104 = vunpack.c.h.b16 %v772
        %v1105 = vunpack.c.l.b16 %v773
        %v1106 = vunpack.c.h.b16 %v773
        %v1107 = vunpack.c.l.b16 %v774
        %v1108 = vunpack.c.h.b16 %v774
        %v1109 = vunpack.c.l.b16 %v775
        %v1110 = vunpack.c.h.b16 %v775
        %v1111 = vunpack.c.l.b16 %v776
        %v1112 = vunpack.c.h.b16 %v776
        %v1113 = vunpack.c.l.b16 %v777
        %v1114 = vunpack.c.h.b16 %v777
        %v1115 = vunpack.c.l.b16 %v778
        %v1116 = vunpack.c.h.b16 %v778
        %v1117 = vunpack.c.l.b16 %v779
        %v1118 = vunpack.c.h.b16 %v779
        %v1119 = vunpack.c.l.b16 %v780
        %v1120 = vunpack.c.h.b16 %v780
        %v1121 = vunpack.c.l.b16 %v781
        %v1122 = vunpack.c.h.b16 %v781
        %v1123 = vunpack.c.l.b16 %v782
        %v1124 = vunpack.c.h.b16 %v782
        %v1125 = vunpack.c.l.b16 %v783
        %v1126 = vunpack.c.h.b16 %v783
        %v1127 = vunpack.c.l.b16 %v784
        %v1128 = vunpack.c.h.b16 %v784
        %v1129 = vunpack.c.l.b16 %v785
        %v1130 = vunpack.c.h.b16 %v785
        %v1131 = vunpack.c.l.b16 %v786
        %v1132 = vunpack.c.h.b16 %v786
        %v1133 = vunpack.c.l.b16 %v787
        %v1134 = vunpack.c.h.b16 %v787
        %v1135 = vunpack.c.l.b16 %v788
        %v1136 = vunpack.c.h.b16 %v788
        %v1137 = vunpack.c.l.b16 %v789
        %v1138 = vunpack.c.h.b16 %v789
        %v1139 = vunpack.c.l.b16 %v790
        %v1140 = vunpack.c.h.b16 %v790
        %v1141 = vunpack.c.l.b16 %v791
        %v1142 = vunpack.c.h.b16 %v791
        %v1143 = vunpack.c.l.b16 %v792
        %v1144 = vunpack.c.h.b16 %v792
        %v1145 = vunpack.c.l.b16 %v793
        %v1146 = vunpack.c.h.b16 %v793
        %v1147 = vunpack.c.l.b16 %v794
        %v1148 = vunpack.c.h.b16 %v794
        %v1149 = vunpack.c.l.b16 %v795
        %v1150 = vunpack.c.h.b16 %v795
        %v1151 = vunpack.c.l.b16 %v796
        %v1152 = vunpack.c.h.b16 %v796
        %v1153 = vunpack.c.l.b16 %v797
        %v1154 = vunpack.c.h.b16 %v797
        %v1155 = vunpack.c.l.b16 %v798
        %v1156 = vunpack.c.h.b16 %v798
        %v1157 = vunpack.c.l.b16 %v799
        %v1158 = vunpack.c.h.b16 %v799
        %v1159 = vunpack.c.l.b16 %v800
        %v1160 = vunpack.c.h.b16 %v800
        %v1161 = vunpack.c.l.b16 %v801
        %v1162 = vunpack.c.h.b16 %v801
        %v1163 = vunpack.c.l.b16 %v802
        %v1164 = vunpack.c.h.b16 %v802
        %v1165 = vunpack.c.l.b16 %v803
        %v1166 = vunpack.c.h.b16 %v803
        %v1167 = vunpack.c.l.b16 %v804
        %v1168 = vunpack.c.h.b16 %v804
        %v1169 = vunpack.c.l.b16 %v805
        %v1170 = vunpack.c.h.b16 %v805
        %v1171 = vunpack.c.l.b16 %v806
        %v1172 = vunpack.c.h.b16 %v806
        %v1173 = vunpack.c.l.b16 %v807
        %v1174 = vunpack.c.h.b16 %v807
        %v1175 = vunpack.c.l.b16 %v808
        %v1176 = vunpack.c.h.b16 %v808
        %v1177 = vunpack.c.l.b16 %v809
        %v1178 = vunpack.c.h.b16 %v809
        %v1179 = vunpack.c.l.b16 %v810
        %v1180 = vunpack.c.h.b16 %v810
        %v1181 = vunpack.c.l.b16 %v811
        %v1182 = vunpack.c.h.b16 %v811
        %v1183 = vunpack.c.l.b16 %v812
        %v1184 = vunpack.c.h.b16 %v812
        %v1185 = vunpack.c.l.b16 %v813
        %v1186 = vunpack.c.h.b16 %v813
        %v1187 = vunpack.c.l.b16 %v814
        %v1188 = vunpack.c.h.b16 %v814
        %v1189 = vunpack.c.l.b16 %v815
        %v1190 = vunpack.c.h.b16 %v815
        %v1191 = vunpack.c.l.b16 %v816
        %v1192 = vunpack.c.h.b16 %v816
        %v1193 = vunpack.c.l.b16 %v817
        %v1194 = vunpack.c.h.b16 %v817
        %v1195 = vunpack.c.l.b16 %v818
        %v1196 = vunpack.c.h.b16 %v818
        %v1197 = vunpack.c.l.b16 %v819
        %v1198 = vunpack.c.h.b16 %v819
        %v1199 = vunpack.c.l.b16 %v820
        %v1200 = vunpack.c.h.b16 %v820
        %v1201 = vunpack.c.l.b16 %v821
        %v1202 = vunpack.c.h.b16 %v821
        %v1203 = vunpack.c.l.b16 %v822
        %v1204 = vunpack.c.h.b16 %v822
        %v1205 = vunpack.c.l.b16 %v823
        %v1206 = vunpack.c.h.b16 %v823
        %v1207 = vunpack.c.l.b16 %v824
        %v1208 = vunpack.c.h.b16 %v824
        %v1209 = vunpack.c.l.b16 %v825
        %v1210 = vunpack.c.h.b16 %v825
        %v1211 = vunpack.c.l.b16 %v826
        %v1212 = vunpack.c.h.b16 %v826
        %v1213 = vunpack.c.l.b16 %v827
        %v1214 = vunpack.c.h.b16 %v827
        %v1215 = vunpack.c.l.b16 %v828
        %v1216 = vunpack.c.h.b16 %v828
        %v1217 = vunpack.c.l.b16 %v829
        %v1218 = vunpack.c.h.b16 %v829
        %v1219 = vunpack.c.l.b16 %v830
        %v1220 = vunpack.c.h.b16 %v830
        %v1221 = vpack.c.b16 %v981, %v965
        %v1222 = vpack.c.b16 %v982, %v966
        %v1223 = vpack.c.b16 %v983, %v967
        %v1224 = vpack.c.b16 %v984, %v968
        %v1225 = vpack.c.b16 %v985, %v969
        %v1226 = vpack.c.b16 %v986, %v970
        %v1227 = vpack.c.b16 %v987, %v971
        %v1228 = vpack.c.b16 %v988, %v972
        %v1229 = vpack.c.b16 %v989, %v973
        %v1230 = vpack.c.b16 %v990, %v974
        %v1231 = vpack.c.b16 %v991, %v975
        %v1232 = vpack.c.b16 %v992, %v976
        %v1233 = vpack.c.b16 %v993, %v977
        %v1234 = vpack.c.b16 %v994, %v978
        %v1235 = vpack.c.b16 %v995, %v979
        %v1236 = vpack.c.b16 %v996, %v980
        %v1237 = vpack.c.b16 %v1013, %v997
        %v1238 = vpack.c.b16 %v1014, %v998
        %v1239 = vpack.c.b16 %v1015, %v999
        %v1240 = vpack.c.b16 %v1016, %v1000
        %v1241 = vpack.c.b16 %v1017, %v1001
        %v1242 = vpack.c.b16 %v1018, %v1002
        %v1243 = vpack.c.b16 %v1019, %v1003
        %v1244 = vpack.c.b16 %v1020, %v1004
        %v1245 = vpack.c.b16 %v1021, %v1005
        %v1246 = vpack.c.b16 %v1022, %v1006
        %v1247 = vpack.c.b16 %v1023, %v1007
        %v1248 = vpack.c.b16 %v1024, %v1008
        %v1249 = vpack.c.b16 %v1025, %v1009
        %v1250 = vpack.c.b16 %v1026, %v1010
        %v1251 = vpack.c.b16 %v1027, %v1011
        %v1252 = vpack.c.b16 %v1028, %v1012
        %v1253 = vpack.c.b16 %v1045, %v1029
        %v1254 = vpack.c.b16 %v1046, %v1030
        %v1255 = vpack.c.b16 %v1047, %v1031
        %v1256 = vpack.c.b16 %v1048, %v1032
        %v1257 = vpack.c.b16 %v1049, %v1033
        %v1258 = vpack.c.b16 %v1050, %v1034
        %v1259 = vpack.c.b16 %v1051, %v1035
        %v1260 = vpack.c.b16 %v1052, %v1036
        %v1261 = vpack.c.b16 %v1053, %v1037
        %v1262 = vpack.c.b16 %v1054, %v1038
        %v1263 = vpack.c.b16 %v1055, %v1039
        %v1264 = vpack.c.b16 %v1056, %v1040
        %v1265 = vpack.c.b16 %v1057, %v1041
        %v1266 = vpack.c.b16 %v1058, %v1042
        %v1267 = vpack.c.b16 %v1059, %v1043
        %v1268 = vpack.c.b16 %v1060, %v1044
        %v1269 = vpack.c.b16 %v1077, %v1061
        %v1270 = vpack.c.b16 %v1078, %v1062
        %v1271 = vpack.c.b16 %v1079, %v1063
        %v1272 = vpack.c.b16 %v1080, %v1064
        %v1273 = vpack.c.b16 %v1081, %v1065
        %v1274 = vpack.c.b16 %v1082, %v1066
        %v1275 = vpack.c.b16 %v1083, %v1067
        %v1276 = vpack.c.b16 %v1084, %v1068
        %v1277 = vpack.c.b16 %v1085, %v1069
        %v1278 = vpack.c.b16 %v1086, %v1070
        %v1279 = vpack.c.b16 %v1087, %v1071
        %v1280 = vpack.c.b16 %v1088, %v1072
        %v1281 = vpack.c.b16 %v1089, %v1073
        %v1282 = vpack.c.b16 %v1090, %v1074
        %v1283 = vpack.c.b16 %v1091, %v1075
        %v1284 = vpack.c.b16 %v1092, %v1076
        %v1285 = vpack.c.b16 %v1109, %v1093
        %v1286 = vpack.c.b16 %v1110, %v1094
        %v1287 = vpack.c.b16 %v1111, %v1095
        %v1288 = vpack.c.b16 %v1112, %v1096
        %v1289 = vpack.c.b16 %v1113, %v1097
        %v1290 = vpack.c.b16 %v1114, %v1098
        %v1291 = vpack.c.b16 %v1115, %v1099
        %v1292 = vpack.c.b16 %v1116, %v1100
        %v1293 = vpack.c.b16 %v1117, %v1101
        %v1294 = vpack.c.b16 %v1118, %v1102
        %v1295 = vpack.c.b16 %v1119, %v1103
        %v1296 = vpack.c.b16 %v1120, %v1104
        %v1297 = vpack.c.b16 %v1121, %v1105
        %v1298 = vpack.c.b16 %v1122, %v1106
        %v1299 = vpack.c.b16 %v1123, %v1107
        %v1300 = vpack.c.b16 %v1124, %v1108
        %v1301 = vpack.c.b16 %v1141, %v1125
        %v1302 = vpack.c.b16 %v1142, %v1126
        %v1303 = vpack.c.b16 %v1143, %v1127
        %v1304 = vpack.c.b16 %v1144, %v1128
        %v1305 = vpack.c.b16 %v1145, %v1129
        %v1306 = vpack.c.b16 %v1146, %v1130
        %v1307 = vpack.c.b16 %v1147, %v1131
        %v1308 = vpack.c.b16 %v1148, %v1132
        %v1309 = vpack.c.b16 %v1149, %v1133
        %v1310 = vpack.c.b16 %v1150, %v1134
        %v1311 = vpack.c.b16 %v1151, %v1135
        %v1312 = vpack.c.b16 %v1152, %v1136
        %v1313 = vpack.c.b16 %v1153, %v1137
        %v1314 = vpack.c.b16 %v1154, %v1138
        %v1315 = vpack.c.b16 %v1155, %v1139
        %v1316 = vpack.c.b16 %v1156, %v1140
        %v1317 = vpack.c.b16 %v1173, %v1157
        %v1318 = vpack.c.b16 %v1174, %v1158
        %v1319 = vpack.c.b16 %v1175, %v1159
        %v1320 = vpack.c.b16 %v1176, %v1160
        %v1321 = vpack.c.b16 %v1177, %v1161
        %v1322 = vpack.c.b16 %v1178, %v1162
        %v1323 = vpack.c.b16 %v1179, %v1163
        %v1324 = vpack.c.b16 %v1180, %v1164
        %v1325 = vpack.c.b16 %v1181, %v1165
        %v1326 = vpack.c.b16 %v1182, %v1166
        %v1327 = vpack.c.b16 %v1183, %v1167
        %v1328 = vpack.c.b16 %v1184, %v1168
        %v1329 = vpack.c.b16 %v1185, %v1169
        %v1330 = vpack.c.b16 %v1186, %v1170
        %v1331 = vpack.c.b16 %v1187, %v1171
        %v1332 = vpack.c.b16 %v1188, %v1172
        %v1333 = vpack.c.b16 %v1205, %v1189
        %v1334 = vpack.c.b16 %v1206, %v1190
        %v1335 = vpack.c.b16 %v1207, %v1191
        %v1336 = vpack.c.b16 %v1208, %v1192
        %v1337 = vpack.c.b16 %v1209, %v1193
        %v1338 = vpack.c.b16 %v1210, %v1194
        %v1339 = vpack.c.b16 %v1211, %v1195
        %v1340 = vpack.c.b16 %v1212, %v1196
        %v1341 = vpack.c.b16 %v1213, %v1197
        %v1342 = vpack.c.b16 %v1214, %v1198
        %v1343 = vpack.c.b16 %v1215, %v1199
        %v1344 = vpack.c.b16 %v1216, %v1200
        %v1345 = vpack.c.b16 %v1217, %v1201
        %v1346 = vpack.c.b16 %v1218, %v1202
        %v1347 = vpack.c.b16 %v1219, %v1203
        %v1348 = vpack.c.b16 %v1220, %v1204
        %1477 = vmatprep.subr.bf16.mxu0 %v1334
        %1478 = vmatpush1.bf16.msra.mxu0 %v1333
        %1479 = vmatprep.subr.bf16.mxu0 %v1318
        %1480 = vmatpush1.bf16.msra.mxu0 %v1317
        %1481 = vmatprep.subr.bf16.mxu0 %v1302
        %1482 = vmatpush1.bf16.msra.mxu0 %v1301
        %1483 = vmatprep.subr.bf16.mxu0 %v1286
        %1484 = vmatpush1.bf16.msra.mxu0 %v1285
        %1485 = vmatprep.subr.bf16.mxu0 %v1270
        %1486 = vmatpush1.bf16.msra.mxu0 %v1269
        %1487 = vmatprep.subr.bf16.mxu0 %v1254
        %1488 = vmatpush1.bf16.msra.mxu0 %v1253
        %1489 = vmatprep.subr.bf16.mxu0 %v1238
        %1490 = vmatpush1.bf16.msra.mxu0 %v1237
        %1491 = vmatprep.subr.bf16.mxu0 %v1222
        %1492 = vmatpush1.bf16.msra.mxu0 %v1221
        %1493 = vmatprep.subr.bf16.mxu0 0
        %1494 = vmatpush2.bf16.msra.mxu0 0
        %1495 = vmatprep.subr.bf16.mxu0 0
        %1496 = vmatpush2.bf16.msra.mxu0 0
        %1497 = vmatprep.subr.bf16.mxu0 0
        %1498 = vmatpush2.bf16.msra.mxu0 0
        %1499 = vmatprep.subr.bf16.mxu0 0
        %1500 = vmatpush2.bf16.msra.mxu0 0
        %1501 = vmatprep.subr.bf16.mxu0 0
        %1502 = vmatpush2.bf16.msra.mxu0 0
        %1503 = vmatprep.subr.bf16.mxu0 0
        %1504 = vmatpush2.bf16.msra.mxu0 0
        %1505 = vmatprep.subr.bf16.mxu0 0
        %1506 = vmatpush2.bf16.msra.mxu0 0
        %1507 = vmatprep.subr.bf16.mxu0 0
        %1508 = vmatpush2.bf16.msra.mxu0 0
        %1509 = vmatprep.mubr.bf16.mxu0 0
        %1510 = vmatmul.mubr.bf16.gmra.mxu0 %v835
        %v1511 = vpop.f32.mrf.mxu0
        %v1512 = vadd.f32 0.0, %v1511
        %v1513 = vpop.f32.mrf.mxu0
        %v1514 = vadd.f32 0.0, %v1513
        %v1515 = vpop.f32.mrf.mxu0
        %v1516 = vadd.f32 0.0, %v1515
        %v1517 = vpop.f32.mrf.mxu0
        %v1518 = vadd.f32 0.0, %v1517
        %1519 = vdwg.mxu0
        %1520 = vmatprep.subr.bf16.mxu0 %v1336
        %1521 = vmatpush1.bf16.msra.mxu0 %v1335
        %1522 = vmatprep.subr.bf16.mxu0 %v1320
        %1523 = vmatpush1.bf16.msra.mxu0 %v1319
        %1524 = vmatprep.subr.bf16.mxu0 %v1304
        %1525 = vmatpush1.bf16.msra.mxu0 %v1303
        %1526 = vmatprep.subr.bf16.mxu0 %v1288
        %1527 = vmatpush1.bf16.msra.mxu0 %v1287
        %1528 = vmatprep.subr.bf16.mxu0 %v1272
        %1529 = vmatpush1.bf16.msra.mxu0 %v1271
        %1530 = vmatprep.subr.bf16.mxu0 %v1256
        %1531 = vmatpush1.bf16.msra.mxu0 %v1255
        %1532 = vmatprep.subr.bf16.mxu0 %v1240
        %1533 = vmatpush1.bf16.msra.mxu0 %v1239
        %1534 = vmatprep.subr.bf16.mxu0 %v1224
        %1535 = vmatpush1.bf16.msra.mxu0 %v1223
        %1536 = vmatprep.subr.bf16.mxu0 0
        %1537 = vmatpush2.bf16.msra.mxu0 0
        %1538 = vmatprep.subr.bf16.mxu0 0
        %1539 = vmatpush2.bf16.msra.mxu0 0
        %1540 = vmatprep.subr.bf16.mxu0 0
        %1541 = vmatpush2.bf16.msra.mxu0 0
        %1542 = vmatprep.subr.bf16.mxu0 0
        %1543 = vmatpush2.bf16.msra.mxu0 0
        %1544 = vmatprep.subr.bf16.mxu0 0
        %1545 = vmatpush2.bf16.msra.mxu0 0
        %1546 = vmatprep.subr.bf16.mxu0 0
        %1547 = vmatpush2.bf16.msra.mxu0 0
        %1548 = vmatprep.subr.bf16.mxu0 0
        %1549 = vmatpush2.bf16.msra.mxu0 0
        %1550 = vmatprep.subr.bf16.mxu0 0
        %1551 = vmatpush2.bf16.msra.mxu0 0
        %1552 = vmatprep.mubr.bf16.mxu0 0
        %1553 = vmatmul.mubr.bf16.gmra.mxu0 %v835
        %v1554 = vpop.f32.mrf.mxu0
        %v1555 = vadd.f32 0.0, %v1554
        %v1556 = vpop.f32.mrf.mxu0
        %v1557 = vadd.f32 0.0, %v1556
        %v1558 = vpop.f32.mrf.mxu0
        %v1559 = vadd.f32 0.0, %v1558
        %v1560 = vpop.f32.mrf.mxu0
        %v1561 = vadd.f32 0.0, %v1560
        %1562 = vdwg.mxu0
        %1563 = vmatprep.subr.bf16.mxu0 %v1338
        %1564 = vmatpush1.bf16.msra.mxu0 %v1337
        %1565 = vmatprep.subr.bf16.mxu0 %v1322
        %1566 = vmatpush1.bf16.msra.mxu0 %v1321
        %1567 = vmatprep.subr.bf16.mxu0 %v1306
        %1568 = vmatpush1.bf16.msra.mxu0 %v1305
        %1569 = vmatprep.subr.bf16.mxu0 %v1290
        %1570 = vmatpush1.bf16.msra.mxu0 %v1289
        %1571 = vmatprep.subr.bf16.mxu0 %v1274
        %1572 = vmatpush1.bf16.msra.mxu0 %v1273
        %1573 = vmatprep.subr.bf16.mxu0 %v1258
        %1574 = vmatpush1.bf16.msra.mxu0 %v1257
        %1575 = vmatprep.subr.bf16.mxu0 %v1242
        %1576 = vmatpush1.bf16.msra.mxu0 %v1241
        %1577 = vmatprep.subr.bf16.mxu0 %v1226
        %1578 = vmatpush1.bf16.msra.mxu0 %v1225
        %1579 = vmatprep.subr.bf16.mxu0 0
        %1580 = vmatpush2.bf16.msra.mxu0 0
        %1581 = vmatprep.subr.bf16.mxu0 0
        %1582 = vmatpush2.bf16.msra.mxu0 0
        %1583 = vmatprep.subr.bf16.mxu0 0
        %1584 = vmatpush2.bf16.msra.mxu0 0
        %1585 = vmatprep.subr.bf16.mxu0 0
        %1586 = vmatpush2.bf16.msra.mxu0 0
        %1587 = vmatprep.subr.bf16.mxu0 0
        %1588 = vmatpush2.bf16.msra.mxu0 0
        %1589 = vmatprep.subr.bf16.mxu0 0
        %1590 = vmatpush2.bf16.msra.mxu0 0
        %1591 = vmatprep.subr.bf16.mxu0 0
        %1592 = vmatpush2.bf16.msra.mxu0 0
        %1593 = vmatprep.subr.bf16.mxu0 0
        %1594 = vmatpush2.bf16.msra.mxu0 0
        %1595 = vmatprep.mubr.bf16.mxu0 0
        %1596 = vmatmul.mubr.bf16.gmra.mxu0 %v835
        %v1597 = vpop.f32.mrf.mxu0
        %v1598 = vadd.f32 0.0, %v1597
        %v1599 = vpop.f32.mrf.mxu0
        %v1600 = vadd.f32 0.0, %v1599
        %v1601 = vpop.f32.mrf.mxu0
        %v1602 = vadd.f32 0.0, %v1601
        %v1603 = vpop.f32.mrf.mxu0
        %v1604 = vadd.f32 0.0, %v1603
        %1605 = vdwg.mxu0
        %1606 = vmatprep.subr.bf16.mxu0 %v1340
        %1607 = vmatpush1.bf16.msra.mxu0 %v1339
        %1608 = vmatprep.subr.bf16.mxu0 %v1324
        %1609 = vmatpush1.bf16.msra.mxu0 %v1323
        %1610 = vmatprep.subr.bf16.mxu0 %v1308
        %1611 = vmatpush1.bf16.msra.mxu0 %v1307
        %1612 = vmatprep.subr.bf16.mxu0 %v1292
        %1613 = vmatpush1.bf16.msra.mxu0 %v1291
        %1614 = vmatprep.subr.bf16.mxu0 %v1276
        %1615 = vmatpush1.bf16.msra.mxu0 %v1275
        %1616 = vmatprep.subr.bf16.mxu0 %v1260
        %1617 = vmatpush1.bf16.msra.mxu0 %v1259
        %1618 = vmatprep.subr.bf16.mxu0 %v1244
        %1619 = vmatpush1.bf16.msra.mxu0 %v1243
        %1620 = vmatprep.subr.bf16.mxu0 %v1228
        %1621 = vmatpush1.bf16.msra.mxu0 %v1227
        %1622 = vmatprep.subr.bf16.mxu0 0
        %1623 = vmatpush2.bf16.msra.mxu0 0
        %1624 = vmatprep.subr.bf16.mxu0 0
        %1625 = vmatpush2.bf16.msra.mxu0 0
        %1626 = vmatprep.subr.bf16.mxu0 0
        %1627 = vmatpush2.bf16.msra.mxu0 0
        %1628 = vmatprep.subr.bf16.mxu0 0
        %1629 = vmatpush2.bf16.msra.mxu0 0
        %1630 = vmatprep.subr.bf16.mxu0 0
        %1631 = vmatpush2.bf16.msra.mxu0 0
        %1632 = vmatprep.subr.bf16.mxu0 0
        %1633 = vmatpush2.bf16.msra.mxu0 0
        %1634 = vmatprep.subr.bf16.mxu0 0
        %1635 = vmatpush2.bf16.msra.mxu0 0
        %1636 = vmatprep.subr.bf16.mxu0 0
        %1637 = vmatpush2.bf16.msra.mxu0 0
        %1638 = vmatprep.mubr.bf16.mxu0 0
        %1639 = vmatmul.mubr.bf16.gmra.mxu0 %v835
        %v1640 = vpop.f32.mrf.mxu0
        %v1641 = vadd.f32 0.0, %v1640
        %v1642 = vpop.f32.mrf.mxu0
        %v1643 = vadd.f32 0.0, %v1642
        %v1644 = vpop.f32.mrf.mxu0
        %v1645 = vadd.f32 0.0, %v1644
        %v1646 = vpop.f32.mrf.mxu0
        %v1647 = vadd.f32 0.0, %v1646
        %1648 = vdwg.mxu0
        %1649 = vmatprep.subr.bf16.mxu0 %v1342
        %1650 = vmatpush1.bf16.msra.mxu0 %v1341
        %1651 = vmatprep.subr.bf16.mxu0 %v1326
        %1652 = vmatpush1.bf16.msra.mxu0 %v1325
        %1653 = vmatprep.subr.bf16.mxu0 %v1310
        %1654 = vmatpush1.bf16.msra.mxu0 %v1309
        %1655 = vmatprep.subr.bf16.mxu0 %v1294
        %1656 = vmatpush1.bf16.msra.mxu0 %v1293
        %1657 = vmatprep.subr.bf16.mxu0 %v1278
        %1658 = vmatpush1.bf16.msra.mxu0 %v1277
        %1659 = vmatprep.subr.bf16.mxu0 %v1262
        %1660 = vmatpush1.bf16.msra.mxu0 %v1261
        %1661 = vmatprep.subr.bf16.mxu0 %v1246
        %1662 = vmatpush1.bf16.msra.mxu0 %v1245
        %1663 = vmatprep.subr.bf16.mxu0 %v1230
        %1664 = vmatpush1.bf16.msra.mxu0 %v1229
        %1665 = vmatprep.subr.bf16.mxu0 0
        %1666 = vmatpush2.bf16.msra.mxu0 0
        %1667 = vmatprep.subr.bf16.mxu0 0
        %1668 = vmatpush2.bf16.msra.mxu0 0
        %1669 = vmatprep.subr.bf16.mxu0 0
        %1670 = vmatpush2.bf16.msra.mxu0 0
        %1671 = vmatprep.subr.bf16.mxu0 0
        %1672 = vmatpush2.bf16.msra.mxu0 0
        %1673 = vmatprep.subr.bf16.mxu0 0
        %1674 = vmatpush2.bf16.msra.mxu0 0
        %1675 = vmatprep.subr.bf16.mxu0 0
        %1676 = vmatpush2.bf16.msra.mxu0 0
        %1677 = vmatprep.subr.bf16.mxu0 0
        %1678 = vmatpush2.bf16.msra.mxu0 0
        %1679 = vmatprep.subr.bf16.mxu0 0
        %1680 = vmatpush2.bf16.msra.mxu0 0
        %1681 = vmatprep.mubr.bf16.mxu0 0
        %1682 = vmatmul.mubr.bf16.gmra.mxu0 %v835
        %v1683 = vpop.f32.mrf.mxu0
        %v1684 = vadd.f32 0.0, %v1683
        %v1685 = vpop.f32.mrf.mxu0
        %v1686 = vadd.f32 0.0, %v1685
        %v1687 = vpop.f32.mrf.mxu0
        %v1688 = vadd.f32 0.0, %v1687
        %v1689 = vpop.f32.mrf.mxu0
        %v1690 = vadd.f32 0.0, %v1689
        %1691 = vdwg.mxu0
        %1692 = vmatprep.subr.bf16.mxu0 %v1344
        %1693 = vmatpush1.bf16.msra.mxu0 %v1343
        %1694 = vmatprep.subr.bf16.mxu0 %v1328
        %1695 = vmatpush1.bf16.msra.mxu0 %v1327
        %1696 = vmatprep.subr.bf16.mxu0 %v1312
        %1697 = vmatpush1.bf16.msra.mxu0 %v1311
        %1698 = vmatprep.subr.bf16.mxu0 %v1296
        %1699 = vmatpush1.bf16.msra.mxu0 %v1295
        %1700 = vmatprep.subr.bf16.mxu0 %v1280
        %1701 = vmatpush1.bf16.msra.mxu0 %v1279
        %1702 = vmatprep.subr.bf16.mxu0 %v1264
        %1703 = vmatpush1.bf16.msra.mxu0 %v1263
        %1704 = vmatprep.subr.bf16.mxu0 %v1248
        %1705 = vmatpush1.bf16.msra.mxu0 %v1247
        %1706 = vmatprep.subr.bf16.mxu0 %v1232
        %1707 = vmatpush1.bf16.msra.mxu0 %v1231
        %1708 = vmatprep.subr.bf16.mxu0 0
        %1709 = vmatpush2.bf16.msra.mxu0 0
        %1710 = vmatprep.subr.bf16.mxu0 0
        %1711 = vmatpush2.bf16.msra.mxu0 0
        %1712 = vmatprep.subr.bf16.mxu0 0
        %1713 = vmatpush2.bf16.msra.mxu0 0
        %1714 = vmatprep.subr.bf16.mxu0 0
        %1715 = vmatpush2.bf16.msra.mxu0 0
        %1716 = vmatprep.subr.bf16.mxu0 0
        %1717 = vmatpush2.bf16.msra.mxu0 0
        %1718 = vmatprep.subr.bf16.mxu0 0
        %1719 = vmatpush2.bf16.msra.mxu0 0
        %1720 = vmatprep.subr.bf16.mxu0 0
        %1721 = vmatpush2.bf16.msra.mxu0 0
        %1722 = vmatprep.subr.bf16.mxu0 0
        %1723 = vmatpush2.bf16.msra.mxu0 0
        %1724 = vmatprep.mubr.bf16.mxu0 0
        %1725 = vmatmul.mubr.bf16.gmra.mxu0 %v835
        %v1726 = vpop.f32.mrf.mxu0
        %v1727 = vadd.f32 0.0, %v1726
        %v1728 = vpop.f32.mrf.mxu0
        %v1729 = vadd.f32 0.0, %v1728
        %v1730 = vpop.f32.mrf.mxu0
        %v1731 = vadd.f32 0.0, %v1730
        %v1732 = vpop.f32.mrf.mxu0
        %v1733 = vadd.f32 0.0, %v1732
        %1734 = vdwg.mxu0
        %1735 = vmatprep.subr.bf16.mxu0 %v1346
        %1736 = vmatpush1.bf16.msra.mxu0 %v1345
        %1737 = vmatprep.subr.bf16.mxu0 %v1330
        %1738 = vmatpush1.bf16.msra.mxu0 %v1329
        %1739 = vmatprep.subr.bf16.mxu0 %v1314
        %1740 = vmatpush1.bf16.msra.mxu0 %v1313
        %1741 = vmatprep.subr.bf16.mxu0 %v1298
        %1742 = vmatpush1.bf16.msra.mxu0 %v1297
        %1743 = vmatprep.subr.bf16.mxu0 %v1282
        %1744 = vmatpush1.bf16.msra.mxu0 %v1281
        %1745 = vmatprep.subr.bf16.mxu0 %v1266
        %1746 = vmatpush1.bf16.msra.mxu0 %v1265
        %1747 = vmatprep.subr.bf16.mxu0 %v1250
        %1748 = vmatpush1.bf16.msra.mxu0 %v1249
        %1749 = vmatprep.subr.bf16.mxu0 %v1234
        %1750 = vmatpush1.bf16.msra.mxu0 %v1233
        %1751 = vmatprep.subr.bf16.mxu0 0
        %1752 = vmatpush2.bf16.msra.mxu0 0
        %1753 = vmatprep.subr.bf16.mxu0 0
        %1754 = vmatpush2.bf16.msra.mxu0 0
        %1755 = vmatprep.subr.bf16.mxu0 0
        %1756 = vmatpush2.bf16.msra.mxu0 0
        %1757 = vmatprep.subr.bf16.mxu0 0
        %1758 = vmatpush2.bf16.msra.mxu0 0
        %1759 = vmatprep.subr.bf16.mxu0 0
        %1760 = vmatpush2.bf16.msra.mxu0 0
        %1761 = vmatprep.subr.bf16.mxu0 0
        %1762 = vmatpush2.bf16.msra.mxu0 0
        %1763 = vmatprep.subr.bf16.mxu0 0
        %1764 = vmatpush2.bf16.msra.mxu0 0
        %1765 = vmatprep.subr.bf16.mxu0 0
        %1766 = vmatpush2.bf16.msra.mxu0 0
        %1767 = vmatprep.mubr.bf16.mxu0 0
        %1768 = vmatmul.mubr.bf16.gmra.mxu0 %v835
        %v1769 = vpop.f32.mrf.mxu0
        %v1770 = vadd.f32 0.0, %v1769
        %v1771 = vpop.f32.mrf.mxu0
        %v1772 = vadd.f32 0.0, %v1771
        %v1773 = vpop.f32.mrf.mxu0
        %v1774 = vadd.f32 0.0, %v1773
        %v1775 = vpop.f32.mrf.mxu0
        %v1776 = vadd.f32 0.0, %v1775
        %1777 = vdwg.mxu0
        %1778 = vmatprep.subr.bf16.mxu0 %v1348
        %1779 = vmatpush1.bf16.msra.mxu0 %v1347
        %1780 = vmatprep.subr.bf16.mxu0 %v1332
        %1781 = vmatpush1.bf16.msra.mxu0 %v1331
        %1782 = vmatprep.subr.bf16.mxu0 %v1316
        %1783 = vmatpush1.bf16.msra.mxu0 %v1315
        %1784 = vmatprep.subr.bf16.mxu0 %v1300
        %1785 = vmatpush1.bf16.msra.mxu0 %v1299
        %1786 = vmatprep.subr.bf16.mxu0 %v1284
        %1787 = vmatpush1.bf16.msra.mxu0 %v1283
        %1788 = vmatprep.subr.bf16.mxu0 %v1268
        %1789 = vmatpush1.bf16.msra.mxu0 %v1267
        %1790 = vmatprep.subr.bf16.mxu0 %v1252
        %1791 = vmatpush1.bf16.msra.mxu0 %v1251
        %1792 = vmatprep.subr.bf16.mxu0 %v1236
        %1793 = vmatpush1.bf16.msra.mxu0 %v1235
        %1794 = vmatprep.subr.bf16.mxu0 0
        %1795 = vmatpush2.bf16.msra.mxu0 0
        %1796 = vmatprep.subr.bf16.mxu0 0
        %1797 = vmatpush2.bf16.msra.mxu0 0
        %1798 = vmatprep.subr.bf16.mxu0 0
        %1799 = vmatpush2.bf16.msra.mxu0 0
        %1800 = vmatprep.subr.bf16.mxu0 0
        %1801 = vmatpush2.bf16.msra.mxu0 0
        %1802 = vmatprep.subr.bf16.mxu0 0
        %1803 = vmatpush2.bf16.msra.mxu0 0
        %1804 = vmatprep.subr.bf16.mxu0 0
        %1805 = vmatpush2.bf16.msra.mxu0 0
        %1806 = vmatprep.subr.bf16.mxu0 0
        %1807 = vmatpush2.bf16.msra.mxu0 0
        %1808 = vmatprep.subr.bf16.mxu0 0
        %1809 = vmatpush2.bf16.msra.mxu0 0
        %1810 = vmatprep.mubr.bf16.mxu0 0
        %1811 = vmatmul.mubr.bf16.gmra.mxu0 %v835
        %v1812 = vpop.f32.mrf.mxu0
        %v1813 = vadd.f32 0.0, %v1812
        %v1814 = vpop.f32.mrf.mxu0
        %v1815 = vadd.f32 0.0, %v1814
        %v1816 = vpop.f32.mrf.mxu0
        %v1817 = vadd.f32 0.0, %v1816
        %v1818 = vpop.f32.mrf.mxu0
        %v1819 = vadd.f32 0.0, %v1818
        %1820 = vdwg.mxu0
        %v1821 = vmax.f32 %v1512, %v1598
        %v1822 = vmax.f32 %v1514, %v1600
        %v1823 = vmax.f32 %v1555, %v1641
        %v1824 = vmax.f32 %v1557, %v1643
        %v1825 = vmax.f32 %v1516, %v1602
        %v1826 = vmax.f32 %v1518, %v1604
        %v1827 = vmax.f32 %v1559, %v1645
        %v1828 = vmax.f32 %v1561, %v1647
        %v1829 = vmax.f32 %v1684, %v1770
        %v1830 = vmax.f32 %v1686, %v1772
        %v1831 = vmax.f32 %v1727, %v1813
        %v1832 = vmax.f32 %v1729, %v1815
        %v1833 = vmax.f32 %v1688, %v1774
        %v1834 = vmax.f32 %v1690, %v1776
        %v1835 = vmax.f32 %v1731, %v1817
        %v1836 = vmax.f32 %v1733, %v1819
        %v1837 = vmax.f32 %v1821, %v1829
        %v1838 = vmax.f32 %v1822, %v1830
        %v1839 = vmax.f32 %v1823, %v1831
        %v1840 = vmax.f32 %v1824, %v1832
        %v1841 = vmax.f32 %v1825, %v1833
        %v1842 = vmax.f32 %v1826, %v1834
        %v1843 = vmax.f32 %v1827, %v1835
        %v1844 = vmax.f32 %v1828, %v1836
        %v1845 = vld [vmem:[%s2] sm:$0xff]
        %v1846 = vld [vmem:[%s2 + $0x8] sm:$0xff]
        %1848 = vset.pattern.permute.xlu0 0
        %1849 = vperm.xlu0 %1848, %v1845
        %v1850 = vpop.permute.xlu0 %1849
        %1853 = vset.pattern.permute.xlu0 0
        %1854 = vperm.xlu0 %1853, %v1846
        %v1855 = vpop.permute.xlu0 %1854
        %v1857 = vadd.f32 %v1837, %v1850
        %v1858 = vadd.f32 %v1838, %v1850
        %v1859 = vadd.f32 %v1839, %v1850
        %v1860 = vadd.f32 %v1840, %v1850
        %v1861 = vadd.f32 %v1841, %v1855
        %v1862 = vadd.f32 %v1842, %v1855
        %v1863 = vadd.f32 %v1843, %v1855
        %v1864 = vadd.f32 %v1844, %v1855
        %v1865 = vmax.f32 %v1857, 0.0
        %v1866 = vmax.f32 %v1858, 0.0
        %v1867 = vmax.f32 %v1859, 0.0
        %v1868 = vmax.f32 %v1860, 0.0
        %v1869 = vmax.f32 %v1861, 0.0
        %v1870 = vmax.f32 %v1862, 0.0
        %v1871 = vmax.f32 %v1863, 0.0
        %v1872 = vmax.f32 %v1864, 0.0
        %1873 = vst [vmem:[%s438] sm:$0xff] %v1865
        %1874 = vst [vmem:[%s438 + $0x8] sm:$0xff] %v1866
        %1875 = vst [vmem:[%s438 + $0x10] sm:$0xff] %v1867
        %1876 = vst [vmem:[%s438 + $0x18] sm:$0xff] %v1868
        %1877 = vst [vmem:[%s438 + $0x20] sm:$0xff] %v1869
        %1878 = vst [vmem:[%s438 + $0x28] sm:$0xff] %v1870
        %1879 = vst [vmem:[%s438 + $0x30] sm:$0xff] %v1871
        %1880 = vst [vmem:[%s438 + $0x38] sm:$0xff] %v1872
        %s1881 = sand.u32 %s90, 1
        %s1882 = sand.u32 %s90, 1
        %s1883 = smul.addr %s1882, 64
        %s1884 = scalar_lea.vmem [#allocation4], %s1883
        // Predicated region
        $region56: #{cnn_mnist_forward.3} parent=50 // pred_check
          %p1885 = pneg %p100
        $region57: #{cnn_mnist_forward.3} parent=50 // pred_check_branch
          %1887 = sbr.rel (%p1885) target = $region59
        $region58: #{cnn_mnist_forward.3} parent=50 // pred_region
          %s1888 = smul.u32 4, %s14
          %s1889 = smul.addr %s1888, 8
          %s1890 = scalar_lea.vmem %s3, %s1889
          // Predicated region
          $region60: #{cnn_mnist_forward.3} parent=58 // pred_check
            _
          $region61: #{cnn_mnist_forward.3} parent=58 // pred_check_branch
            %1892 = sbr.rel (0) target = $region63
          $region62: #{cnn_mnist_forward.3} parent=58 // pred_region
            // Predicated region
            $region64: #{cnn_mnist_forward.3} parent=62 // pred_check
              _
            $region65: #{cnn_mnist_forward.3} parent=62 // pred_check_branch
              %1894 = sbr.rel (0) target = $region67
            $region66: #{cnn_mnist_forward.3} parent=62 // pred_region
              loop: start=0, step=1, limit=1
              $region68: #{cnn_mnist_forward.3} parent=66 // loop_pre_header
                _
              $region69: #{cnn_mnist_forward.3} parent=66 // loop_header
                %s1896 = sphi 0, %s1900
                %p1897 = scmp.ge.s32.totalorder %s1896, 1
                %s1901 = sphi %s1884, %s1884
                %s1902 = sphi %s1890, %s1890
              $region70: #{cnn_mnist_forward.3} parent=66 // loop_header_branch
                %1899 = sbr.rel (%p1897) target = $region74
              $region71: #{cnn_mnist_forward.3} parent=66 // loop_body
                %v1903 = vld [vmem:[%s1901] sm:$0xff]
                %1904 = vst [vmem:[%s1902] sm:$0xff] %v1903
                %v1905 = vld [vmem:[%s1901 + $0x8] sm:$0xff]
                %1906 = vst [vmem:[%s1902 + $0x8] sm:$0xff] %v1905
                %v1907 = vld [vmem:[%s1901 + $0x10] sm:$0xff]
                %1908 = vst [vmem:[%s1902 + $0x10] sm:$0xff] %v1907
                %v1909 = vld [vmem:[%s1901 + $0x18] sm:$0xff]
                %1910 = vst [vmem:[%s1902 + $0x18] sm:$0xff] %v1909
                %v1911 = vld [vmem:[%s1901 + $0x20] sm:$0xff]
                %1912 = vst [vmem:[%s1902 + $0x60] sm:$0xff] %v1911
                %v1913 = vld [vmem:[%s1901 + $0x28] sm:$0xff]
                %1914 = vst [vmem:[%s1902 + $0x68] sm:$0xff] %v1913
                %v1915 = vld [vmem:[%s1901 + $0x30] sm:$0xff]
                %1916 = vst [vmem:[%s1902 + $0x70] sm:$0xff] %v1915
                %v1917 = vld [vmem:[%s1901 + $0x38] sm:$0xff]
                %1918 = vst [vmem:[%s1902 + $0x78] sm:$0xff] %v1917
              $region72: #{cnn_mnist_forward.3} parent=66 // loop_footer
                %s1900 = sadd.s32 1, %s1896
              $region73: #{cnn_mnist_forward.3} parent=66 // loop_footer_branch
                %1895 = sbr.rel target = $region69
              $region74: #{cnn_mnist_forward.3} parent=66 // loop_exit
                _
            $region67: #{cnn_mnist_forward.3} parent=62 // pred_fallthru
              _
            // Predicated region
            $region75: #{cnn_mnist_forward.3} parent=62 // pred_check
              _
            $region76: #{cnn_mnist_forward.3} parent=62 // pred_check_branch
              %1920 = sbr.rel target = $region78
            $region77: #{cnn_mnist_forward.3} parent=62 // pred_region
              _
            $region78: #{cnn_mnist_forward.3} parent=62 // pred_fallthru
              _
          $region63: #{cnn_mnist_forward.3} parent=58 // pred_fallthru
            _
          %1921 = vnop
        $region59: #{cnn_mnist_forward.3} parent=50 // pred_fallthru
          _
      $region51: #{cnn_mnist_forward.3} parent=5 // pred_fallthru
        _
      %p1922 = scmp.le.s32.totalorder 2, %s9
      // Predicated region
      $region79: #{cnn_mnist_forward.3} parent=5 // pred_check
        %p1923 = pneg %p1922
      $region80: #{cnn_mnist_forward.3} parent=5 // pred_check_branch
        %1925 = sbr.rel (%p1923) target = $region82
      $region81: #{cnn_mnist_forward.3} parent=5 // pred_region
        %s1926 = ssub.s32 %s9, 2
        // Predicated region
        $region83: #{cnn_mnist_forward.3} parent=81 // pred_check
          %p1927 = pneg %p106
        $region84: #{cnn_mnist_forward.3} parent=81 // pred_check_branch
          %1929 = sbr.rel (%p1927) target = $region86
        $region85: #{cnn_mnist_forward.3} parent=81 // pred_region
          %s1930 = sand.u32 %s91, 1
          %s1931 = sand.u32 %s91, 1
          %s1932 = smul.addr %s1931, 64
          %s1933 = scalar_lea.vmem [#allocation4], %s1932
        $region86: #{cnn_mnist_forward.3} parent=81 // pred_fallthru
          _
      $region82: #{cnn_mnist_forward.3} parent=5 // pred_fallthru
        _
    $region6: #{cnn_mnist_forward.3} parent=1 // loop_footer
      %s13 = sadd.s32 1, %s9
    $region7: #{cnn_mnist_forward.3} parent=1 // loop_footer_branch
      %8 = sbr.rel target = $region3
    $region8: #{cnn_mnist_forward.3} parent=1 // loop_exit
      _

// kernel: cnn_mnist_forward.4
$region0: #{cnn_mnist_forward.4}
  #allocation0 [shape = 'u32[]', space=smem, size = 0x4, offset = 0x4, fixed_abs, tag = 'smem constant byte address 0x4 - core index']
  #allocation1 [shape = 'u32[144,128]{1,0:T(1,128)}', space=vmem, size = 0x12000, scoped, tag = 'internal scratch']
  #allocation2 [shape = 'bf16[256,512]{1,0:T(8,128)(2,1)}', space=vmem, size = 0x40000, scoped, tag = 'scratch operand']
  %s0 = inlined_call_operand.vmem [shape: bf16[4,256,128], index: 0, kind: input, shape index: {}]
  %s1 = inlined_call_operand.vmem [shape: bf16[24,256], index: 1, kind: input, shape index: {}]
  %s2 = inlined_call_operand.vmem [shape: f32[24,1], index: 2, kind: input, shape index: {}]
  %s3 = inlined_call_operand.vmem [shape: f32[24,128], index: 3, kind: output, shape index: {}]
  %s4 = sld [smem:[#allocation0]]
  $region22: #{cnn_mnist_forward.4} parent=0
    _
  %s6 = ssub.s32 1, %s4
  %s7 = scalar_select 0, %s6, %s4
  // Predicated region
  $region2: #{cnn_mnist_forward.4} parent=0 // pred_check
    _
  $region3: #{cnn_mnist_forward.4} parent=0 // pred_check_branch
    %9 = sbr.rel (0) target = $region5
  $region4: #{cnn_mnist_forward.4} parent=0 // pred_region
    _
  $region5: #{cnn_mnist_forward.4} parent=0 // pred_fallthru
    _
  // Predicated region
  $region6: #{cnn_mnist_forward.4} parent=0 // pred_check
    _
  $region7: #{cnn_mnist_forward.4} parent=0 // pred_check_branch
    %11 = sbr.rel (0) target = $region9
  $region8: #{cnn_mnist_forward.4} parent=0 // pred_region
    _
  $region9: #{cnn_mnist_forward.4} parent=0 // pred_fallthru
    _
  // Predicated region
  $region10: #{cnn_mnist_forward.4} parent=0 // pred_check
    _
  $region11: #{cnn_mnist_forward.4} parent=0 // pred_check_branch
    %13 = sbr.rel (0) target = $region13
  $region12: #{cnn_mnist_forward.4} parent=0 // pred_region
    _
  $region13: #{cnn_mnist_forward.4} parent=0 // pred_fallthru
    _
  %v14 = vld [vmem:[%s0] sm:$0xf]
  %v15 = vld [vmem:[%s0 + $0x4] sm:$0xf]
  %v16 = vld [vmem:[%s0 + $0x8] sm:$0xf]
  %v17 = vld [vmem:[%s0 + $0xc] sm:$0xf]
  %v18 = vld [vmem:[%s0 + $0x10] sm:$0xf]
  %v19 = vld [vmem:[%s0 + $0x14] sm:$0xf]
  %v20 = vld [vmem:[%s0 + $0x18] sm:$0xf]
  %v21 = vld [vmem:[%s0 + $0x1c] sm:$0xf]
  %v22 = vld [vmem:[%s0 + $0x20] sm:$0xf]
  %v23 = vld [vmem:[%s0 + $0x24] sm:$0xf]
  %v24 = vld [vmem:[%s0 + $0x28] sm:$0xf]
  %v25 = vld [vmem:[%s0 + $0x2c] sm:$0xf]
  %v26 = vld [vmem:[%s0 + $0x30] sm:$0xf]
  %v27 = vld [vmem:[%s0 + $0x34] sm:$0xf]
  %v28 = vld [vmem:[%s0 + $0x38] sm:$0xf]
  %v29 = vld [vmem:[%s0 + $0x3c] sm:$0xf]
  %v30 = vld [vmem:[%s0 + $0x40] sm:$0xf]
  %v31 = vld [vmem:[%s0 + $0x44] sm:$0xf]
  %v32 = vld [vmem:[%s0 + $0x48] sm:$0xf]
  %v33 = vld [vmem:[%s0 + $0x4c] sm:$0xf]
  %v34 = vld [vmem:[%s0 + $0x50] sm:$0xf]
  %v35 = vld [vmem:[%s0 + $0x54] sm:$0xf]
  %v36 = vld [vmem:[%s0 + $0x58] sm:$0xf]
  %v37 = vld [vmem:[%s0 + $0x5c] sm:$0xf]
  %v38 = vld [vmem:[%s0 + $0x60] sm:$0xf]
  %v39 = vld [vmem:[%s0 + $0x64] sm:$0xf]
  %v40 = vld [vmem:[%s0 + $0x68] sm:$0xf]
  %v41 = vld [vmem:[%s0 + $0x6c] sm:$0xf]
  %v42 = vld [vmem:[%s0 + $0x70] sm:$0xf]
  %v43 = vld [vmem:[%s0 + $0x74] sm:$0xf]
  %v44 = vld [vmem:[%s0 + $0x78] sm:$0xf]
  %v45 = vld [vmem:[%s0 + $0x7c] sm:$0xf]
  %46 = vst [vmem:[#allocation2] sm:$0xf] %v14
  %47 = vst [vmem:[#allocation2 + $0x10] sm:$0xf] %v15
  %48 = vst [vmem:[#allocation2 + $0x20] sm:$0xf] %v16
  %49 = vst [vmem:[#allocation2 + $0x30] sm:$0xf] %v17
  %50 = vst [vmem:[#allocation2 + $0x40] sm:$0xf] %v18
  %51 = vst [vmem:[#allocation2 + $0x50] sm:$0xf] %v19
  %52 = vst [vmem:[#allocation2 + $0x60] sm:$0xf] %v20
  %53 = vst [vmem:[#allocation2 + $0x70] sm:$0xf] %v21
  %54 = vst [vmem:[#allocation2 + $0x80] sm:$0xf] %v22
  %55 = vst [vmem:[#allocation2 + $0x90] sm:$0xf] %v23
  %56 = vst [vmem:[#allocation2 + $0xa0] sm:$0xf] %v24
  %57 = vst [vmem:[#allocation2 + $0xb0] sm:$0xf] %v25
  %58 = vst [vmem:[#allocation2 + $0xc0] sm:$0xf] %v26
  %59 = vst [vmem:[#allocation2 + $0xd0] sm:$0xf] %v27
  %60 = vst [vmem:[#allocation2 + $0xe0] sm:$0xf] %v28
  %61 = vst [vmem:[#allocation2 + $0xf0] sm:$0xf] %v29
  %62 = vst [vmem:[#allocation2 + $0x100] sm:$0xf] %v30
  %63 = vst [vmem:[#allocation2 + $0x110] sm:$0xf] %v31
  %64 = vst [vmem:[#allocation2 + $0x120] sm:$0xf] %v32
  %65 = vst [vmem:[#allocation2 + $0x130] sm:$0xf] %v33
  %66 = vst [vmem:[#allocation2 + $0x140] sm:$0xf] %v34
  %67 = vst [vmem:[#allocation2 + $0x150] sm:$0xf] %v35
  %68 = vst [vmem:[#allocation2 + $0x160] sm:$0xf] %v36
  %69 = vst [vmem:[#allocation2 + $0x170] sm:$0xf] %v37
  %70 = vst [vmem:[#allocation2 + $0x180] sm:$0xf] %v38
  %71 = vst [vmem:[#allocation2 + $0x190] sm:$0xf] %v39
  %72 = vst [vmem:[#allocation2 + $0x1a0] sm:$0xf] %v40
  %73 = vst [vmem:[#allocation2 + $0x1b0] sm:$0xf] %v41
  %74 = vst [vmem:[#allocation2 + $0x1c0] sm:$0xf] %v42
  %75 = vst [vmem:[#allocation2 + $0x1d0] sm:$0xf] %v43
  %76 = vst [vmem:[#allocation2 + $0x1e0] sm:$0xf] %v44
  %77 = vst [vmem:[#allocation2 + $0x1f0] sm:$0xf] %v45
  %s78 = scalar_lea.vmem %s0, 128
  %v79 = vld [vmem:[%s78] sm:$0xf]
  %v80 = vld [vmem:[%s78 + $0x4] sm:$0xf]
  %v81 = vld [vmem:[%s78 + $0x8] sm:$0xf]
  %v82 = vld [vmem:[%s78 + $0xc] sm:$0xf]
  %v83 = vld [vmem:[%s78 + $0x10] sm:$0xf]
  %v84 = vld [vmem:[%s78 + $0x14] sm:$0xf]
  %v85 = vld [vmem:[%s78 + $0x18] sm:$0xf]
  %v86 = vld [vmem:[%s78 + $0x1c] sm:$0xf]
  %v87 = vld [vmem:[%s78 + $0x20] sm:$0xf]
  %v88 = vld [vmem:[%s78 + $0x24] sm:$0xf]
  %v89 = vld [vmem:[%s78 + $0x28] sm:$0xf]
  %v90 = vld [vmem:[%s78 + $0x2c] sm:$0xf]
  %v91 = vld [vmem:[%s78 + $0x30] sm:$0xf]
  %v92 = vld [vmem:[%s78 + $0x34] sm:$0xf]
  %v93 = vld [vmem:[%s78 + $0x38] sm:$0xf]
  %v94 = vld [vmem:[%s78 + $0x3c] sm:$0xf]
  %v95 = vld [vmem:[%s78 + $0x40] sm:$0xf]
  %v96 = vld [vmem:[%s78 + $0x44] sm:$0xf]
  %v97 = vld [vmem:[%s78 + $0x48] sm:$0xf]
  %v98 = vld [vmem:[%s78 + $0x4c] sm:$0xf]
  %v99 = vld [vmem:[%s78 + $0x50] sm:$0xf]
  %v100 = vld [vmem:[%s78 + $0x54] sm:$0xf]
  %v101 = vld [vmem:[%s78 + $0x58] sm:$0xf]
  %v102 = vld [vmem:[%s78 + $0x5c] sm:$0xf]
  %v103 = vld [vmem:[%s78 + $0x60] sm:$0xf]
  %v104 = vld [vmem:[%s78 + $0x64] sm:$0xf]
  %v105 = vld [vmem:[%s78 + $0x68] sm:$0xf]
  %v106 = vld [vmem:[%s78 + $0x6c] sm:$0xf]
  %v107 = vld [vmem:[%s78 + $0x70] sm:$0xf]
  %v108 = vld [vmem:[%s78 + $0x74] sm:$0xf]
  %v109 = vld [vmem:[%s78 + $0x78] sm:$0xf]
  %v110 = vld [vmem:[%s78 + $0x7c] sm:$0xf]
  %111 = vst [vmem:[#allocation2 + $0x4] sm:$0xf] %v79
  %112 = vst [vmem:[#allocation2 + $0x14] sm:$0xf] %v80
  %113 = vst [vmem:[#allocation2 + $0x24] sm:$0xf] %v81
  %114 = vst [vmem:[#allocation2 + $0x34] sm:$0xf] %v82
  %115 = vst [vmem:[#allocation2 + $0x44] sm:$0xf] %v83
  %116 = vst [vmem:[#allocation2 + $0x54] sm:$0xf] %v84
  %117 = vst [vmem:[#allocation2 + $0x64] sm:$0xf] %v85
  %118 = vst [vmem:[#allocation2 + $0x74] sm:$0xf] %v86
  %119 = vst [vmem:[#allocation2 + $0x84] sm:$0xf] %v87
  %120 = vst [vmem:[#allocation2 + $0x94] sm:$0xf] %v88
  %121 = vst [vmem:[#allocation2 + $0xa4] sm:$0xf] %v89
  %122 = vst [vmem:[#allocation2 + $0xb4] sm:$0xf] %v90
  %123 = vst [vmem:[#allocation2 + $0xc4] sm:$0xf] %v91
  %124 = vst [vmem:[#allocation2 + $0xd4] sm:$0xf] %v92
  %125 = vst [vmem:[#allocation2 + $0xe4] sm:$0xf] %v93
  %126 = vst [vmem:[#allocation2 + $0xf4] sm:$0xf] %v94
  %127 = vst [vmem:[#allocation2 + $0x104] sm:$0xf] %v95
  %128 = vst [vmem:[#allocation2 + $0x114] sm:$0xf] %v96
  %129 = vst [vmem:[#allocation2 + $0x124] sm:$0xf] %v97
  %130 = vst [vmem:[#allocation2 + $0x134] sm:$0xf] %v98
  %131 = vst [vmem:[#allocation2 + $0x144] sm:$0xf] %v99
  %132 = vst [vmem:[#allocation2 + $0x154] sm:$0xf] %v100
  %133 = vst [vmem:[#allocation2 + $0x164] sm:$0xf] %v101
  %134 = vst [vmem:[#allocation2 + $0x174] sm:$0xf] %v102
  %135 = vst [vmem:[#allocation2 + $0x184] sm:$0xf] %v103
  %136 = vst [vmem:[#allocation2 + $0x194] sm:$0xf] %v104
  %137 = vst [vmem:[#allocation2 + $0x1a4] sm:$0xf] %v105
  %138 = vst [vmem:[#allocation2 + $0x1b4] sm:$0xf] %v106
  %139 = vst [vmem:[#allocation2 + $0x1c4] sm:$0xf] %v107
  %140 = vst [vmem:[#allocation2 + $0x1d4] sm:$0xf] %v108
  %141 = vst [vmem:[#allocation2 + $0x1e4] sm:$0xf] %v109
  %142 = vst [vmem:[#allocation2 + $0x1f4] sm:$0xf] %v110
  %s143 = scalar_lea.vmem %s0, 256
  %v144 = vld [vmem:[%s143] sm:$0xf]
  %v145 = vld [vmem:[%s143 + $0x4] sm:$0xf]
  %v146 = vld [vmem:[%s143 + $0x8] sm:$0xf]
  %v147 = vld [vmem:[%s143 + $0xc] sm:$0xf]
  %v148 = vld [vmem:[%s143 + $0x10] sm:$0xf]
  %v149 = vld [vmem:[%s143 + $0x14] sm:$0xf]
  %v150 = vld [vmem:[%s143 + $0x18] sm:$0xf]
  %v151 = vld [vmem:[%s143 + $0x1c] sm:$0xf]
  %v152 = vld [vmem:[%s143 + $0x20] sm:$0xf]
  %v153 = vld [vmem:[%s143 + $0x24] sm:$0xf]
  %v154 = vld [vmem:[%s143 + $0x28] sm:$0xf]
  %v155 = vld [vmem:[%s143 + $0x2c] sm:$0xf]
  %v156 = vld [vmem:[%s143 + $0x30] sm:$0xf]
  %v157 = vld [vmem:[%s143 + $0x34] sm:$0xf]
  %v158 = vld [vmem:[%s143 + $0x38] sm:$0xf]
  %v159 = vld [vmem:[%s143 + $0x3c] sm:$0xf]
  %v160 = vld [vmem:[%s143 + $0x40] sm:$0xf]
  %v161 = vld [vmem:[%s143 + $0x44] sm:$0xf]
  %v162 = vld [vmem:[%s143 + $0x48] sm:$0xf]
  %v163 = vld [vmem:[%s143 + $0x4c] sm:$0xf]
  %v164 = vld [vmem:[%s143 + $0x50] sm:$0xf]
  %v165 = vld [vmem:[%s143 + $0x54] sm:$0xf]
  %v166 = vld [vmem:[%s143 + $0x58] sm:$0xf]
  %v167 = vld [vmem:[%s143 + $0x5c] sm:$0xf]
  %v168 = vld [vmem:[%s143 + $0x60] sm:$0xf]
  %v169 = vld [vmem:[%s143 + $0x64] sm:$0xf]
  %v170 = vld [vmem:[%s143 + $0x68] sm:$0xf]
  %v171 = vld [vmem:[%s143 + $0x6c] sm:$0xf]
  %v172 = vld [vmem:[%s143 + $0x70] sm:$0xf]
  %v173 = vld [vmem:[%s143 + $0x74] sm:$0xf]
  %v174 = vld [vmem:[%s143 + $0x78] sm:$0xf]
  %v175 = vld [vmem:[%s143 + $0x7c] sm:$0xf]
  %176 = vst [vmem:[#allocation2 + $0x8] sm:$0xf] %v144
  %177 = vst [vmem:[#allocation2 + $0x18] sm:$0xf] %v145
  %178 = vst [vmem:[#allocation2 + $0x28] sm:$0xf] %v146
  %179 = vst [vmem:[#allocation2 + $0x38] sm:$0xf] %v147
  %180 = vst [vmem:[#allocation2 + $0x48] sm:$0xf] %v148
  %181 = vst [vmem:[#allocation2 + $0x58] sm:$0xf] %v149
  %182 = vst [vmem:[#allocation2 + $0x68] sm:$0xf] %v150
  %183 = vst [vmem:[#allocation2 + $0x78] sm:$0xf] %v151
  %184 = vst [vmem:[#allocation2 + $0x88] sm:$0xf] %v152
  %185 = vst [vmem:[#allocation2 + $0x98] sm:$0xf] %v153
  %186 = vst [vmem:[#allocation2 + $0xa8] sm:$0xf] %v154
  %187 = vst [vmem:[#allocation2 + $0xb8] sm:$0xf] %v155
  %188 = vst [vmem:[#allocation2 + $0xc8] sm:$0xf] %v156
  %189 = vst [vmem:[#allocation2 + $0xd8] sm:$0xf] %v157
  %190 = vst [vmem:[#allocation2 + $0xe8] sm:$0xf] %v158
  %191 = vst [vmem:[#allocation2 + $0xf8] sm:$0xf] %v159
  %192 = vst [vmem:[#allocation2 + $0x108] sm:$0xf] %v160
  %193 = vst [vmem:[#allocation2 + $0x118] sm:$0xf] %v161
  %194 = vst [vmem:[#allocation2 + $0x128] sm:$0xf] %v162
  %195 = vst [vmem:[#allocation2 + $0x138] sm:$0xf] %v163
  %196 = vst [vmem:[#allocation2 + $0x148] sm:$0xf] %v164
  %197 = vst [vmem:[#allocation2 + $0x158] sm:$0xf] %v165
  %198 = vst [vmem:[#allocation2 + $0x168] sm:$0xf] %v166
  %199 = vst [vmem:[#allocation2 + $0x178] sm:$0xf] %v167
  %200 = vst [vmem:[#allocation2 + $0x188] sm:$0xf] %v168
  %201 = vst [vmem:[#allocation2 + $0x198] sm:$0xf] %v169
  %202 = vst [vmem:[#allocation2 + $0x1a8] sm:$0xf] %v170
  %203 = vst [vmem:[#allocation2 + $0x1b8] sm:$0xf] %v171
  %204 = vst [vmem:[#allocation2 + $0x1c8] sm:$0xf] %v172
  %205 = vst [vmem:[#allocation2 + $0x1d8] sm:$0xf] %v173
  %206 = vst [vmem:[#allocation2 + $0x1e8] sm:$0xf] %v174
  %207 = vst [vmem:[#allocation2 + $0x1f8] sm:$0xf] %v175
  %s208 = scalar_lea.vmem %s0, 384
  %v209 = vld [vmem:[%s208] sm:$0xf]
  %v210 = vld [vmem:[%s208 + $0x4] sm:$0xf]
  %v211 = vld [vmem:[%s208 + $0x8] sm:$0xf]
  %v212 = vld [vmem:[%s208 + $0xc] sm:$0xf]
  %v213 = vld [vmem:[%s208 + $0x10] sm:$0xf]
  %v214 = vld [vmem:[%s208 + $0x14] sm:$0xf]
  %v215 = vld [vmem:[%s208 + $0x18] sm:$0xf]
  %v216 = vld [vmem:[%s208 + $0x1c] sm:$0xf]
  %v217 = vld [vmem:[%s208 + $0x20] sm:$0xf]
  %v218 = vld [vmem:[%s208 + $0x24] sm:$0xf]
  %v219 = vld [vmem:[%s208 + $0x28] sm:$0xf]
  %v220 = vld [vmem:[%s208 + $0x2c] sm:$0xf]
  %v221 = vld [vmem:[%s208 + $0x30] sm:$0xf]
  %v222 = vld [vmem:[%s208 + $0x34] sm:$0xf]
  %v223 = vld [vmem:[%s208 + $0x38] sm:$0xf]
  %v224 = vld [vmem:[%s208 + $0x3c] sm:$0xf]
  %v225 = vld [vmem:[%s208 + $0x40] sm:$0xf]
  %v226 = vld [vmem:[%s208 + $0x44] sm:$0xf]
  %v227 = vld [vmem:[%s208 + $0x48] sm:$0xf]
  %v228 = vld [vmem:[%s208 + $0x4c] sm:$0xf]
  %v229 = vld [vmem:[%s208 + $0x50] sm:$0xf]
  %v230 = vld [vmem:[%s208 + $0x54] sm:$0xf]
  %v231 = vld [vmem:[%s208 + $0x58] sm:$0xf]
  %v232 = vld [vmem:[%s208 + $0x5c] sm:$0xf]
  %v233 = vld [vmem:[%s208 + $0x60] sm:$0xf]
  %v234 = vld [vmem:[%s208 + $0x64] sm:$0xf]
  %v235 = vld [vmem:[%s208 + $0x68] sm:$0xf]
  %v236 = vld [vmem:[%s208 + $0x6c] sm:$0xf]
  %v237 = vld [vmem:[%s208 + $0x70] sm:$0xf]
  %v238 = vld [vmem:[%s208 + $0x74] sm:$0xf]
  %v239 = vld [vmem:[%s208 + $0x78] sm:$0xf]
  %v240 = vld [vmem:[%s208 + $0x7c] sm:$0xf]
  %241 = vst [vmem:[#allocation2 + $0xc] sm:$0xf] %v209
  %242 = vst [vmem:[#allocation2 + $0x1c] sm:$0xf] %v210
  %243 = vst [vmem:[#allocation2 + $0x2c] sm:$0xf] %v211
  %244 = vst [vmem:[#allocation2 + $0x3c] sm:$0xf] %v212
  %245 = vst [vmem:[#allocation2 + $0x4c] sm:$0xf] %v213
  %246 = vst [vmem:[#allocation2 + $0x5c] sm:$0xf] %v214
  %247 = vst [vmem:[#allocation2 + $0x6c] sm:$0xf] %v215
  %248 = vst [vmem:[#allocation2 + $0x7c] sm:$0xf] %v216
  %249 = vst [vmem:[#allocation2 + $0x8c] sm:$0xf] %v217
  %250 = vst [vmem:[#allocation2 + $0x9c] sm:$0xf] %v218
  %251 = vst [vmem:[#allocation2 + $0xac] sm:$0xf] %v219
  %252 = vst [vmem:[#allocation2 + $0xbc] sm:$0xf] %v220
  %253 = vst [vmem:[#allocation2 + $0xcc] sm:$0xf] %v221
  %254 = vst [vmem:[#allocation2 + $0xdc] sm:$0xf] %v222
  %255 = vst [vmem:[#allocation2 + $0xec] sm:$0xf] %v223
  %256 = vst [vmem:[#allocation2 + $0xfc] sm:$0xf] %v224
  %257 = vst [vmem:[#allocation2 + $0x10c] sm:$0xf] %v225
  %258 = vst [vmem:[#allocation2 + $0x11c] sm:$0xf] %v226
  %259 = vst [vmem:[#allocation2 + $0x12c] sm:$0xf] %v227
  %260 = vst [vmem:[#allocation2 + $0x13c] sm:$0xf] %v228
  %261 = vst [vmem:[#allocation2 + $0x14c] sm:$0xf] %v229
  %262 = vst [vmem:[#allocation2 + $0x15c] sm:$0xf] %v230
  %263 = vst [vmem:[#allocation2 + $0x16c] sm:$0xf] %v231
  %264 = vst [vmem:[#allocation2 + $0x17c] sm:$0xf] %v232
  %265 = vst [vmem:[#allocation2 + $0x18c] sm:$0xf] %v233
  %266 = vst [vmem:[#allocation2 + $0x19c] sm:$0xf] %v234
  %267 = vst [vmem:[#allocation2 + $0x1ac] sm:$0xf] %v235
  %268 = vst [vmem:[#allocation2 + $0x1bc] sm:$0xf] %v236
  %269 = vst [vmem:[#allocation2 + $0x1cc] sm:$0xf] %v237
  %270 = vst [vmem:[#allocation2 + $0x1dc] sm:$0xf] %v238
  %271 = vst [vmem:[#allocation2 + $0x1ec] sm:$0xf] %v239
  %272 = vst [vmem:[#allocation2 + $0x1fc] sm:$0xf] %v240
  %v273 = vld [vmem:[%s1] sm:$0xff]
  %v274 = vld [vmem:[%s1 + $0x8] sm:$0xff]
  %v275 = vld [vmem:[%s1 + $0x10] sm:$0xff]
  %v276 = vld [vmem:[#allocation2] sm:$0xff]
  %v277 = vld [vmem:[#allocation2 + $0x8] sm:$0xff]
  %v278 = vld [vmem:[#allocation2 + $0x10] sm:$0xff]
  %v279 = vld [vmem:[#allocation2 + $0x18] sm:$0xff]
  %v280 = vld [vmem:[#allocation2 + $0x20] sm:$0xff]
  %v281 = vld [vmem:[#allocation2 + $0x28] sm:$0xff]
  %v282 = vld [vmem:[#allocation2 + $0x30] sm:$0xff]
  %v283 = vld [vmem:[#allocation2 + $0x38] sm:$0xff]
  %v284 = vld [vmem:[#allocation2 + $0x40] sm:$0xff]
  %v285 = vld [vmem:[#allocation2 + $0x48] sm:$0xff]
  %v286 = vld [vmem:[#allocation2 + $0x50] sm:$0xff]
  %v287 = vld [vmem:[#allocation2 + $0x58] sm:$0xff]
  %v288 = vld [vmem:[#allocation2 + $0x60] sm:$0xff]
  %v289 = vld [vmem:[#allocation2 + $0x68] sm:$0xff]
  %v290 = vld [vmem:[#allocation2 + $0x70] sm:$0xff]
  %v291 = vld [vmem:[#allocation2 + $0x78] sm:$0xff]
  %v292 = vld [vmem:[#allocation2 + $0x80] sm:$0xff]
  %v293 = vld [vmem:[#allocation2 + $0x88] sm:$0xff]
  %v294 = vld [vmem:[#allocation2 + $0x90] sm:$0xff]
  %v295 = vld [vmem:[#allocation2 + $0x98] sm:$0xff]
  %v296 = vld [vmem:[#allocation2 + $0xa0] sm:$0xff]
  %v297 = vld [vmem:[#allocation2 + $0xa8] sm:$0xff]
  %v298 = vld [vmem:[#allocation2 + $0xb0] sm:$0xff]
  %v299 = vld [vmem:[#allocation2 + $0xb8] sm:$0xff]
  %v300 = vld [vmem:[#allocation2 + $0xc0] sm:$0xff]
  %v301 = vld [vmem:[#allocation2 + $0xc8] sm:$0xff]
  %v302 = vld [vmem:[#allocation2 + $0xd0] sm:$0xff]
  %v303 = vld [vmem:[#allocation2 + $0xd8] sm:$0xff]
  %v304 = vld [vmem:[#allocation2 + $0xe0] sm:$0xff]
  %v305 = vld [vmem:[#allocation2 + $0xe8] sm:$0xff]
  %v306 = vld [vmem:[#allocation2 + $0xf0] sm:$0xff]
  %v307 = vld [vmem:[#allocation2 + $0xf8] sm:$0xff]
  %v308 = vld [vmem:[#allocation2 + $0x100] sm:$0xff]
  %v309 = vld [vmem:[#allocation2 + $0x108] sm:$0xff]
  %v310 = vld [vmem:[#allocation2 + $0x110] sm:$0xff]
  %v311 = vld [vmem:[#allocation2 + $0x118] sm:$0xff]
  %v312 = vld [vmem:[#allocation2 + $0x120] sm:$0xff]
  %v313 = vld [vmem:[#allocation2 + $0x128] sm:$0xff]
  %v314 = vld [vmem:[#allocation2 + $0x130] sm:$0xff]
  %v315 = vld [vmem:[#allocation2 + $0x138] sm:$0xff]
  %v316 = vld [vmem:[#allocation2 + $0x140] sm:$0xff]
  %v317 = vld [vmem:[#allocation2 + $0x148] sm:$0xff]
  %v318 = vld [vmem:[#allocation2 + $0x150] sm:$0xff]
  %v319 = vld [vmem:[#allocation2 + $0x158] sm:$0xff]
  %v320 = vld [vmem:[#allocation2 + $0x160] sm:$0xff]
  %v321 = vld [vmem:[#allocation2 + $0x168] sm:$0xff]
  %v322 = vld [vmem:[#allocation2 + $0x170] sm:$0xff]
  %v323 = vld [vmem:[#allocation2 + $0x178] sm:$0xff]
  %v324 = vld [vmem:[#allocation2 + $0x180] sm:$0xff]
  %v325 = vld [vmem:[#allocation2 + $0x188] sm:$0xff]
  %v326 = vld [vmem:[#allocation2 + $0x190] sm:$0xff]
  %v327 = vld [vmem:[#allocation2 + $0x198] sm:$0xff]
  %v328 = vld [vmem:[#allocation2 + $0x1a0] sm:$0xff]
  %v329 = vld [vmem:[#allocation2 + $0x1a8] sm:$0xff]
  %v330 = vld [vmem:[#allocation2 + $0x1b0] sm:$0xff]
  %v331 = vld [vmem:[#allocation2 + $0x1b8] sm:$0xff]
  %v332 = vld [vmem:[#allocation2 + $0x1c0] sm:$0xff]
  %v333 = vld [vmem:[#allocation2 + $0x1c8] sm:$0xff]
  %v334 = vld [vmem:[#allocation2 + $0x1d0] sm:$0xff]
  %v335 = vld [vmem:[#allocation2 + $0x1d8] sm:$0xff]
  %v336 = vld [vmem:[#allocation2 + $0x1e0] sm:$0xff]
  %v337 = vld [vmem:[#allocation2 + $0x1e8] sm:$0xff]
  %v338 = vld [vmem:[#allocation2 + $0x1f0] sm:$0xff]
  %v339 = vld [vmem:[#allocation2 + $0x1f8] sm:$0xff]
  %v343 = vunpack.c.l.b16 %v273
  %v344 = vunpack.c.h.b16 %v273
  %v345 = vunpack.c.l.b16 %v274
  %v346 = vunpack.c.h.b16 %v274
  %v347 = vunpack.c.l.b16 %v275
  %v348 = vunpack.c.h.b16 %v275
  %v349 = vpack.c.b16 %v345, %v343
  %v350 = vpack.c.b16 %v346, %v344
  %v351 = vpack.c.b16 %v347, %v347
  %v352 = vpack.c.b16 %v348, %v348
  %v421 = vunpack.c.l.b16 %v276
  %v422 = vunpack.c.h.b16 %v276
  %v423 = vunpack.c.l.b16 %v277
  %v424 = vunpack.c.h.b16 %v277
  %v425 = vunpack.c.l.b16 %v278
  %v426 = vunpack.c.h.b16 %v278
  %v427 = vunpack.c.l.b16 %v279
  %v428 = vunpack.c.h.b16 %v279
  %v429 = vunpack.c.l.b16 %v280
  %v430 = vunpack.c.h.b16 %v280
  %v431 = vunpack.c.l.b16 %v281
  %v432 = vunpack.c.h.b16 %v281
  %v433 = vunpack.c.l.b16 %v282
  %v434 = vunpack.c.h.b16 %v282
  %v435 = vunpack.c.l.b16 %v283
  %v436 = vunpack.c.h.b16 %v283
  %v437 = vunpack.c.l.b16 %v284
  %v438 = vunpack.c.h.b16 %v284
  %v439 = vunpack.c.l.b16 %v285
  %v440 = vunpack.c.h.b16 %v285
  %v441 = vunpack.c.l.b16 %v286
  %v442 = vunpack.c.h.b16 %v286
  %v443 = vunpack.c.l.b16 %v287
  %v444 = vunpack.c.h.b16 %v287
  %v445 = vunpack.c.l.b16 %v288
  %v446 = vunpack.c.h.b16 %v288
  %v447 = vunpack.c.l.b16 %v289
  %v448 = vunpack.c.h.b16 %v289
  %v449 = vunpack.c.l.b16 %v290
  %v450 = vunpack.c.h.b16 %v290
  %v451 = vunpack.c.l.b16 %v291
  %v452 = vunpack.c.h.b16 %v291
  %v453 = vunpack.c.l.b16 %v292
  %v454 = vunpack.c.h.b16 %v292
  %v455 = vunpack.c.l.b16 %v293
  %v456 = vunpack.c.h.b16 %v293
  %v457 = vunpack.c.l.b16 %v294
  %v458 = vunpack.c.h.b16 %v294
  %v459 = vunpack.c.l.b16 %v295
  %v460 = vunpack.c.h.b16 %v295
  %v461 = vunpack.c.l.b16 %v296
  %v462 = vunpack.c.h.b16 %v296
  %v463 = vunpack.c.l.b16 %v297
  %v464 = vunpack.c.h.b16 %v297
  %v465 = vunpack.c.l.b16 %v298
  %v466 = vunpack.c.h.b16 %v298
  %v467 = vunpack.c.l.b16 %v299
  %v468 = vunpack.c.h.b16 %v299
  %v469 = vunpack.c.l.b16 %v300
  %v470 = vunpack.c.h.b16 %v300
  %v471 = vunpack.c.l.b16 %v301
  %v472 = vunpack.c.h.b16 %v301
  %v473 = vunpack.c.l.b16 %v302
  %v474 = vunpack.c.h.b16 %v302
  %v475 = vunpack.c.l.b16 %v303
  %v476 = vunpack.c.h.b16 %v303
  %v477 = vunpack.c.l.b16 %v304
  %v478 = vunpack.c.h.b16 %v304
  %v479 = vunpack.c.l.b16 %v305
  %v480 = vunpack.c.h.b16 %v305
  %v481 = vunpack.c.l.b16 %v306
  %v482 = vunpack.c.h.b16 %v306
  %v483 = vunpack.c.l.b16 %v307
  %v484 = vunpack.c.h.b16 %v307
  %v485 = vunpack.c.l.b16 %v308
  %v486 = vunpack.c.h.b16 %v308
  %v487 = vunpack.c.l.b16 %v309
  %v488 = vunpack.c.h.b16 %v309
  %v489 = vunpack.c.l.b16 %v310
  %v490 = vunpack.c.h.b16 %v310
  %v491 = vunpack.c.l.b16 %v311
  %v492 = vunpack.c.h.b16 %v311
  %v493 = vunpack.c.l.b16 %v312
  %v494 = vunpack.c.h.b16 %v312
  %v495 = vunpack.c.l.b16 %v313
  %v496 = vunpack.c.h.b16 %v313
  %v497 = vunpack.c.l.b16 %v314
  %v498 = vunpack.c.h.b16 %v314
  %v499 = vunpack.c.l.b16 %v315
  %v500 = vunpack.c.h.b16 %v315
  %v501 = vunpack.c.l.b16 %v316
  %v502 = vunpack.c.h.b16 %v316
  %v503 = vunpack.c.l.b16 %v317
  %v504 = vunpack.c.h.b16 %v317
  %v505 = vunpack.c.l.b16 %v318
  %v506 = vunpack.c.h.b16 %v318
  %v507 = vunpack.c.l.b16 %v319
  %v508 = vunpack.c.h.b16 %v319
  %v509 = vunpack.c.l.b16 %v320
  %v510 = vunpack.c.h.b16 %v320
  %v511 = vunpack.c.l.b16 %v321
  %v512 = vunpack.c.h.b16 %v321
  %v513 = vunpack.c.l.b16 %v322
  %v514 = vunpack.c.h.b16 %v322
  %v515 = vunpack.c.l.b16 %v323
  %v516 = vunpack.c.h.b16 %v323
  %v517 = vunpack.c.l.b16 %v324
  %v518 = vunpack.c.h.b16 %v324
  %v519 = vunpack.c.l.b16 %v325
  %v520 = vunpack.c.h.b16 %v325
  %v521 = vunpack.c.l.b16 %v326
  %v522 = vunpack.c.h.b16 %v326
  %v523 = vunpack.c.l.b16 %v327
  %v524 = vunpack.c.h.b16 %v327
  %v525 = vunpack.c.l.b16 %v328
  %v526 = vunpack.c.h.b16 %v328
  %v527 = vunpack.c.l.b16 %v329
  %v528 = vunpack.c.h.b16 %v329
  %v529 = vunpack.c.l.b16 %v330
  %v530 = vunpack.c.h.b16 %v330
  %v531 = vunpack.c.l.b16 %v331
  %v532 = vunpack.c.h.b16 %v331
  %v533 = vunpack.c.l.b16 %v332
  %v534 = vunpack.c.h.b16 %v332
  %v535 = vunpack.c.l.b16 %v333
  %v536 = vunpack.c.h.b16 %v333
  %v537 = vunpack.c.l.b16 %v334
  %v538 = vunpack.c.h.b16 %v334
  %v539 = vunpack.c.l.b16 %v335
  %v540 = vunpack.c.h.b16 %v335
  %v541 = vunpack.c.l.b16 %v336
  %v542 = vunpack.c.h.b16 %v336
  %v543 = vunpack.c.l.b16 %v337
  %v544 = vunpack.c.h.b16 %v337
  %v545 = vunpack.c.l.b16 %v338
  %v546 = vunpack.c.h.b16 %v338
  %v547 = vunpack.c.l.b16 %v339
  %v548 = vunpack.c.h.b16 %v339
  %v549 = vpack.c.b16 %v425, %v421
  %v550 = vpack.c.b16 %v426, %v422
  %v551 = vpack.c.b16 %v427, %v423
  %v552 = vpack.c.b16 %v428, %v424
  %v553 = vpack.c.b16 %v433, %v429
  %v554 = vpack.c.b16 %v434, %v430
  %v555 = vpack.c.b16 %v435, %v431
  %v556 = vpack.c.b16 %v436, %v432
  %v557 = vpack.c.b16 %v441, %v437
  %v558 = vpack.c.b16 %v442, %v438
  %v559 = vpack.c.b16 %v443, %v439
  %v560 = vpack.c.b16 %v444, %v440
  %v561 = vpack.c.b16 %v449, %v445
  %v562 = vpack.c.b16 %v450, %v446
  %v563 = vpack.c.b16 %v451, %v447
  %v564 = vpack.c.b16 %v452, %v448
  %v565 = vpack.c.b16 %v457, %v453
  %v566 = vpack.c.b16 %v458, %v454
  %v567 = vpack.c.b16 %v459, %v455
  %v568 = vpack.c.b16 %v460, %v456
  %v569 = vpack.c.b16 %v465, %v461
  %v570 = vpack.c.b16 %v466, %v462
  %v571 = vpack.c.b16 %v467, %v463
  %v572 = vpack.c.b16 %v468, %v464
  %v573 = vpack.c.b16 %v473, %v469
  %v574 = vpack.c.b16 %v474, %v470
  %v575 = vpack.c.b16 %v475, %v471
  %v576 = vpack.c.b16 %v476, %v472
  %v577 = vpack.c.b16 %v481, %v477
  %v578 = vpack.c.b16 %v482, %v478
  %v579 = vpack.c.b16 %v483, %v479
  %v580 = vpack.c.b16 %v484, %v480
  %v581 = vpack.c.b16 %v489, %v485
  %v582 = vpack.c.b16 %v490, %v486
  %v583 = vpack.c.b16 %v491, %v487
  %v584 = vpack.c.b16 %v492, %v488
  %v585 = vpack.c.b16 %v497, %v493
  %v586 = vpack.c.b16 %v498, %v494
  %v587 = vpack.c.b16 %v499, %v495
  %v588 = vpack.c.b16 %v500, %v496
  %v589 = vpack.c.b16 %v505, %v501
  %v590 = vpack.c.b16 %v506, %v502
  %v591 = vpack.c.b16 %v507, %v503
  %v592 = vpack.c.b16 %v508, %v504
  %v593 = vpack.c.b16 %v513, %v509
  %v594 = vpack.c.b16 %v514, %v510
  %v595 = vpack.c.b16 %v515, %v511
  %v596 = vpack.c.b16 %v516, %v512
  %v597 = vpack.c.b16 %v521, %v517
  %v598 = vpack.c.b16 %v522, %v518
  %v599 = vpack.c.b16 %v523, %v519
  %v600 = vpack.c.b16 %v524, %v520
  %v601 = vpack.c.b16 %v529, %v525
  %v602 = vpack.c.b16 %v530, %v526
  %v603 = vpack.c.b16 %v531, %v527
  %v604 = vpack.c.b16 %v532, %v528
  %v605 = vpack.c.b16 %v537, %v533
  %v606 = vpack.c.b16 %v538, %v534
  %v607 = vpack.c.b16 %v539, %v535
  %v608 = vpack.c.b16 %v540, %v536
  %v609 = vpack.c.b16 %v545, %v541
  %v610 = vpack.c.b16 %v546, %v542
  %v611 = vpack.c.b16 %v547, %v543
  %v612 = vpack.c.b16 %v548, %v544
  %677 = vmatprep.subr.bf16.mxu0 %v578
  %678 = vmatpush1.bf16.msra.mxu0 %v577
  %679 = vmatprep.subr.bf16.mxu0 %v574
  %680 = vmatpush1.bf16.msra.mxu0 %v573
  %681 = vmatprep.subr.bf16.mxu0 %v570
  %682 = vmatpush1.bf16.msra.mxu0 %v569
  %683 = vmatprep.subr.bf16.mxu0 %v566
  %684 = vmatpush1.bf16.msra.mxu0 %v565
  %685 = vmatprep.subr.bf16.mxu0 %v562
  %686 = vmatpush1.bf16.msra.mxu0 %v561
  %687 = vmatprep.subr.bf16.mxu0 %v558
  %688 = vmatpush1.bf16.msra.mxu0 %v557
  %689 = vmatprep.subr.bf16.mxu0 %v554
  %690 = vmatpush1.bf16.msra.mxu0 %v553
  %691 = vmatprep.subr.bf16.mxu0 %v550
  %692 = vmatpush1.bf16.msra.mxu0 %v549
  %693 = vmatprep.subr.bf16.mxu0 %v610
  %694 = vmatpush2.bf16.msra.mxu0 %v609
  %695 = vmatprep.subr.bf16.mxu0 %v606
  %696 = vmatpush2.bf16.msra.mxu0 %v605
  %697 = vmatprep.subr.bf16.mxu0 %v602
  %698 = vmatpush2.bf16.msra.mxu0 %v601
  %699 = vmatprep.subr.bf16.mxu0 %v598
  %700 = vmatpush2.bf16.msra.mxu0 %v597
  %701 = vmatprep.subr.bf16.mxu0 %v594
  %702 = vmatpush2.bf16.msra.mxu0 %v593
  %703 = vmatprep.subr.bf16.mxu0 %v590
  %704 = vmatpush2.bf16.msra.mxu0 %v589
  %705 = vmatprep.subr.bf16.mxu0 %v586
  %706 = vmatpush2.bf16.msra.mxu0 %v585
  %707 = vmatprep.subr.bf16.mxu0 %v582
  %708 = vmatpush2.bf16.msra.mxu0 %v581
  %709 = vmatprep.mubr.bf16.mxu0 %v350
  %710 = vmatmul.mubr.bf16.gmra.mxu0 %v349
  %v711 = vpop.f32.mrf.mxu0
  %v712 = vadd.f32 0.0, %v711
  %v713 = vpop.f32.mrf.mxu0
  %v714 = vadd.f32 0.0, %v713
  %v715 = vpop.f32.mrf.mxu0
  %v716 = vadd.f32 0.0, %v715
  %v717 = vpop.f32.mrf.mxu0
  %v718 = vadd.f32 0.0, %v717
  %719 = vmatprep.mubr.bf16.mxu0 %v352
  %720 = vmatmul.mubr.bf16.gmra.mxu0 %v351
  %v721 = vpop.f32.mrf.mxu0
  %v722 = vadd.f32 0.0, %v721
  %v723 = vpop.f32.mrf.mxu0
  %v724 = vadd.f32 0.0, %v723
  %v725 = vpop.f32.mrf.mxu0
  %v726 = vpop.f32.mrf.mxu0
  %727 = vdwg.mxu0
  %728 = vmatprep.subr.bf16.mxu0 %v580
  %729 = vmatpush1.bf16.msra.mxu0 %v579
  %730 = vmatprep.subr.bf16.mxu0 %v576
  %731 = vmatpush1.bf16.msra.mxu0 %v575
  %732 = vmatprep.subr.bf16.mxu0 %v572
  %733 = vmatpush1.bf16.msra.mxu0 %v571
  %734 = vmatprep.subr.bf16.mxu0 %v568
  %735 = vmatpush1.bf16.msra.mxu0 %v567
  %736 = vmatprep.subr.bf16.mxu0 %v564
  %737 = vmatpush1.bf16.msra.mxu0 %v563
  %738 = vmatprep.subr.bf16.mxu0 %v560
  %739 = vmatpush1.bf16.msra.mxu0 %v559
  %740 = vmatprep.subr.bf16.mxu0 %v556
  %741 = vmatpush1.bf16.msra.mxu0 %v555
  %742 = vmatprep.subr.bf16.mxu0 %v552
  %743 = vmatpush1.bf16.msra.mxu0 %v551
  %744 = vmatprep.subr.bf16.mxu0 %v612
  %745 = vmatpush2.bf16.msra.mxu0 %v611
  %746 = vmatprep.subr.bf16.mxu0 %v608
  %747 = vmatpush2.bf16.msra.mxu0 %v607
  %748 = vmatprep.subr.bf16.mxu0 %v604
  %749 = vmatpush2.bf16.msra.mxu0 %v603
  %750 = vmatprep.subr.bf16.mxu0 %v600
  %751 = vmatpush2.bf16.msra.mxu0 %v599
  %752 = vmatprep.subr.bf16.mxu0 %v596
  %753 = vmatpush2.bf16.msra.mxu0 %v595
  %754 = vmatprep.subr.bf16.mxu0 %v592
  %755 = vmatpush2.bf16.msra.mxu0 %v591
  %756 = vmatprep.subr.bf16.mxu0 %v588
  %757 = vmatpush2.bf16.msra.mxu0 %v587
  %758 = vmatprep.subr.bf16.mxu0 %v584
  %759 = vmatpush2.bf16.msra.mxu0 %v583
  %760 = vmatprep.mubr.bf16.mxu0 %v350
  %761 = vmatmul.mubr.bf16.gmra.mxu0 %v349
  %v762 = vpop.f32.mrf.mxu0
  %v763 = vadd.f32 0.0, %v762
  %v764 = vpop.f32.mrf.mxu0
  %v765 = vadd.f32 0.0, %v764
  %v766 = vpop.f32.mrf.mxu0
  %v767 = vadd.f32 0.0, %v766
  %v768 = vpop.f32.mrf.mxu0
  %v769 = vadd.f32 0.0, %v768
  %770 = vmatprep.mubr.bf16.mxu0 %v352
  %771 = vmatmul.mubr.bf16.gmra.mxu0 %v351
  %v772 = vpop.f32.mrf.mxu0
  %v773 = vadd.f32 0.0, %v772
  %v774 = vpop.f32.mrf.mxu0
  %v775 = vadd.f32 0.0, %v774
  %v776 = vpop.f32.mrf.mxu0
  %v777 = vpop.f32.mrf.mxu0
  %778 = vdwg.mxu0
  %v779 = vmax.f32 %v712, %v714
  %v780 = vmax.f32 %v716, %v718
  %v781 = vmax.f32 %v722, %v724
  %v782 = vmax.f32 %v763, %v765
  %v783 = vmax.f32 %v767, %v769
  %v784 = vmax.f32 %v773, %v775
  %v785 = vmax.f32 %v779, %v782
  %v786 = vmax.f32 %v780, %v783
  %v787 = vmax.f32 %v781, %v784
  %v788 = vld [vmem:[%s2] sm:$0xff]
  %v789 = vld [vmem:[%s2 + $0x8] sm:$0xff]
  %v790 = vld [vmem:[%s2 + $0x10] sm:$0xff]
  %792 = vset.pattern.permute.xlu0 0
  %793 = vperm.xlu0 %792, %v788
  %v794 = vpop.permute.xlu0 %793
  %797 = vset.pattern.permute.xlu0 0
  %798 = vperm.xlu0 %797, %v789
  %v799 = vpop.permute.xlu0 %798
  %802 = vset.pattern.permute.xlu0 0
  %803 = vperm.xlu0 %802, %v790
  %v804 = vpop.permute.xlu0 %803
  %v806 = vadd.f32 %v785, %v794
  %v807 = vadd.f32 %v786, %v799
  %v808 = vadd.f32 %v787, %v804
  %v809 = vmax.f32 %v806, 0.0
  %v810 = vmax.f32 %v807, 0.0
  %v811 = vmax.f32 %v808, 0.0
  %812 = vst [vmem:[%s3] sm:$0xff] %v809
  %813 = vst [vmem:[%s3 + $0x8] sm:$0xff] %v810
  %814 = vst [vmem:[%s3 + $0x10] sm:$0xff] %v811
  // Predicated region
  $region14: #{cnn_mnist_forward.4} parent=0 // pred_check
    _
  $region15: #{cnn_mnist_forward.4} parent=0 // pred_check_branch
    %816 = sbr.rel (0) target = $region17
  $region16: #{cnn_mnist_forward.4} parent=0 // pred_region
    _
  $region17: #{cnn_mnist_forward.4} parent=0 // pred_fallthru
    _
  // Predicated region
  $region18: #{cnn_mnist_forward.4} parent=0 // pred_check
    _
  $region19: #{cnn_mnist_forward.4} parent=0 // pred_check_branch
    %818 = sbr.rel (0) target = $region21
  $region20: #{cnn_mnist_forward.4} parent=0 // pred_region
    _
  $region21: #{cnn_mnist_forward.4} parent=0 // pred_fallthru
    _

// kernel: cnn_mnist_forward.5
$region0: #{cnn_mnist_forward.5}
  #allocation0 [shape = 'u32[]', space=smem, size = 0x4, offset = 0x4, fixed_abs, tag = 'smem constant byte address 0x4 - core index']
  #allocation1 [shape = 'u32[144,128]{1,0:T(1,128)}', space=vmem, size = 0x12000, scoped, tag = 'internal scratch']
  %s0 = inlined_call_operand.vmem [shape: bf16[8,320], index: 0, kind: input, shape index: {}]
  %s1 = inlined_call_operand.vmem [shape: bf16[320,64], index: 1, kind: input, shape index: {}]
  %s2 = inlined_call_operand.vmem [shape: f32[1,64], index: 2, kind: input, shape index: {}]
  %s3 = inlined_call_operand.vmem [shape: bf16[64,10], index: 3, kind: input, shape index: {}]
  %s4 = inlined_call_operand.vmem [shape: f32[1,10], index: 4, kind: input, shape index: {}]
  %s5 = inlined_call_operand.hbm [shape: f32[8,10], index: 5, kind: output, shape index: {}]
  %s6 = sld [smem:[#allocation0]]
  $region30: #{cnn_mnist_forward.5} parent=0
    _
  %s8 = ssub.s32 1, %s6
  %s9 = scalar_select 0, %s8, %s6
  $region1: #{cnn_mnist_forward.5} parent=0
    #allocation2 [shape = 'u8[4096]{0}', space=vmem, size = 0x1000, scoped, tag = 'output window, operand 0, single buffered']
    #allocation3 [shape = 's32[1]{0}', space=sflag, size = 0x4, scoped, tag = 'scoped memory for cnn_mnist_forward.5']
    %10 = vsyncpa [#allocation3], 0
    // Predicated region
    $region2: #{cnn_mnist_forward.5} parent=1 // pred_check
      _
    $region3: #{cnn_mnist_forward.5} parent=1 // pred_check_branch
      %12 = sbr.rel (0) target = $region5
    $region4: #{cnn_mnist_forward.5} parent=1 // pred_region
      _
    $region5: #{cnn_mnist_forward.5} parent=1 // pred_fallthru
      _
    // Predicated region
    $region6: #{cnn_mnist_forward.5} parent=1 // pred_check
      _
    $region7: #{cnn_mnist_forward.5} parent=1 // pred_check_branch
      %14 = sbr.rel (0) target = $region9
    $region8: #{cnn_mnist_forward.5} parent=1 // pred_region
      _
    $region9: #{cnn_mnist_forward.5} parent=1 // pred_fallthru
      _
    // Predicated region
    $region10: #{cnn_mnist_forward.5} parent=1 // pred_check
      _
    $region11: #{cnn_mnist_forward.5} parent=1 // pred_check_branch
      %16 = sbr.rel (0) target = $region13
    $region12: #{cnn_mnist_forward.5} parent=1 // pred_region
      _
    $region13: #{cnn_mnist_forward.5} parent=1 // pred_fallthru
      _
    // Predicated region
    $region14: #{cnn_mnist_forward.5} parent=1 // pred_check
      _
    $region15: #{cnn_mnist_forward.5} parent=1 // pred_check_branch
      %18 = sbr.rel (0) target = $region17
    $region16: #{cnn_mnist_forward.5} parent=1 // pred_region
      _
    $region17: #{cnn_mnist_forward.5} parent=1 // pred_fallthru
      _
    // Predicated region
    $region18: #{cnn_mnist_forward.5} parent=1 // pred_check
      _
    $region19: #{cnn_mnist_forward.5} parent=1 // pred_check_branch
      %20 = sbr.rel (0) target = $region21
    $region20: #{cnn_mnist_forward.5} parent=1 // pred_region
      _
    $region21: #{cnn_mnist_forward.5} parent=1 // pred_fallthru
      _
    %v22 = vld [vmem:[%s0] sm:$0xff]
    %v23 = vld [vmem:[%s0 + $0x8] sm:$0xf]
    %v24 = vld [vmem:[%s1] sm:$0xf]
    %v25 = vld [vmem:[%s1 + $0x4] sm:$0xf]
    %v26 = vld [vmem:[%s1 + $0x8] sm:$0xf]
    %v27 = vld [vmem:[%s1 + $0xc] sm:$0xf]
    %v28 = vld [vmem:[%s1 + $0x10] sm:$0xf]
    %v29 = vld [vmem:[%s1 + $0x14] sm:$0xf]
    %v30 = vld [vmem:[%s1 + $0x18] sm:$0xf]
    %v31 = vld [vmem:[%s1 + $0x1c] sm:$0xf]
    %v32 = vld [vmem:[%s1 + $0x20] sm:$0xf]
    %v33 = vld [vmem:[%s1 + $0x24] sm:$0xf]
    %v34 = vld [vmem:[%s1 + $0x28] sm:$0xf]
    %v35 = vld [vmem:[%s1 + $0x2c] sm:$0xf]
    %v36 = vld [vmem:[%s1 + $0x30] sm:$0xf]
    %v37 = vld [vmem:[%s1 + $0x34] sm:$0xf]
    %v38 = vld [vmem:[%s1 + $0x38] sm:$0xf]
    %v39 = vld [vmem:[%s1 + $0x3c] sm:$0xf]
    %v40 = vld [vmem:[%s1 + $0x40] sm:$0xf]
    %v41 = vld [vmem:[%s1 + $0x44] sm:$0xf]
    %v42 = vld [vmem:[%s1 + $0x48] sm:$0xf]
    %v43 = vld [vmem:[%s1 + $0x4c] sm:$0xf]
    %v44 = vld [vmem:[%s1 + $0x50] sm:$0xf]
    %v45 = vld [vmem:[%s1 + $0x54] sm:$0xf]
    %v46 = vld [vmem:[%s1 + $0x58] sm:$0xf]
    %v47 = vld [vmem:[%s1 + $0x5c] sm:$0xf]
    %v48 = vld [vmem:[%s1 + $0x60] sm:$0xf]
    %v49 = vld [vmem:[%s1 + $0x64] sm:$0xf]
    %v50 = vld [vmem:[%s1 + $0x68] sm:$0xf]
    %v51 = vld [vmem:[%s1 + $0x6c] sm:$0xf]
    %v52 = vld [vmem:[%s1 + $0x70] sm:$0xf]
    %v53 = vld [vmem:[%s1 + $0x74] sm:$0xf]
    %v54 = vld [vmem:[%s1 + $0x78] sm:$0xf]
    %v55 = vld [vmem:[%s1 + $0x7c] sm:$0xf]
    %v56 = vld [vmem:[%s1 + $0x80] sm:$0xf]
    %v57 = vld [vmem:[%s1 + $0x84] sm:$0xf]
    %v58 = vld [vmem:[%s1 + $0x88] sm:$0xf]
    %v59 = vld [vmem:[%s1 + $0x8c] sm:$0xf]
    %v60 = vld [vmem:[%s1 + $0x90] sm:$0xf]
    %v61 = vld [vmem:[%s1 + $0x94] sm:$0xf]
    %v62 = vld [vmem:[%s1 + $0x98] sm:$0xf]
    %v63 = vld [vmem:[%s1 + $0x9c] sm:$0xf]
    %v64 = vld [vmem:[%s2] sm:$0x1]
    %v66 = vlaneseq
    %v67 = vshrl.u32 %v66, 7
    %v68 = vsub.s32 0, %v67
    %v69 = vrot.slane %v64, %v68
    %v73 = vunpack.c.l.b16 %v22
    %v74 = vunpack.c.h.b16 %v22
    %v75 = vunpack.c.l.b16 %v23
    %v76 = vpack.c.b16 %v73, %v73
    %v77 = vpack.c.b16 %v74, %v74
    %v78 = vpack.c.b16 %v75, %v75
    %v121 = vunpack.c.l.b16 %v24
    %v122 = vunpack.c.l.b16 %v25
    %v123 = vunpack.c.l.b16 %v26
    %v124 = vunpack.c.l.b16 %v27
    %v125 = vunpack.c.l.b16 %v28
    %v126 = vunpack.c.l.b16 %v29
    %v127 = vunpack.c.l.b16 %v30
    %v128 = vunpack.c.l.b16 %v31
    %v129 = vunpack.c.l.b16 %v32
    %v130 = vunpack.c.l.b16 %v33
    %v131 = vunpack.c.l.b16 %v34
    %v132 = vunpack.c.l.b16 %v35
    %v133 = vunpack.c.l.b16 %v36
    %v134 = vunpack.c.l.b16 %v37
    %v135 = vunpack.c.l.b16 %v38
    %v136 = vunpack.c.l.b16 %v39
    %v137 = vunpack.c.l.b16 %v40
    %v138 = vunpack.c.l.b16 %v41
    %v139 = vunpack.c.l.b16 %v42
    %v140 = vunpack.c.l.b16 %v43
    %v141 = vunpack.c.l.b16 %v44
    %v142 = vunpack.c.l.b16 %v45
    %v143 = vunpack.c.l.b16 %v46
    %v144 = vunpack.c.l.b16 %v47
    %v145 = vunpack.c.l.b16 %v48
    %v146 = vunpack.c.l.b16 %v49
    %v147 = vunpack.c.l.b16 %v50
    %v148 = vunpack.c.l.b16 %v51
    %v149 = vunpack.c.l.b16 %v52
    %v150 = vunpack.c.l.b16 %v53
    %v151 = vunpack.c.l.b16 %v54
    %v152 = vunpack.c.l.b16 %v55
    %v153 = vunpack.c.l.b16 %v56
    %v154 = vunpack.c.l.b16 %v57
    %v155 = vunpack.c.l.b16 %v58
    %v156 = vunpack.c.l.b16 %v59
    %v157 = vunpack.c.l.b16 %v60
    %v158 = vunpack.c.l.b16 %v61
    %v159 = vunpack.c.l.b16 %v62
    %v160 = vunpack.c.l.b16 %v63
    %v161 = vpack.c.b16 %v122, %v121
    %v162 = vpack.c.b16 %v124, %v123
    %v163 = vpack.c.b16 %v126, %v125
    %v164 = vpack.c.b16 %v128, %v127
    %v165 = vpack.c.b16 %v130, %v129
    %v166 = vpack.c.b16 %v132, %v131
    %v167 = vpack.c.b16 %v134, %v133
    %v168 = vpack.c.b16 %v136, %v135
    %v169 = vpack.c.b16 %v138, %v137
    %v170 = vpack.c.b16 %v140, %v139
    %v171 = vpack.c.b16 %v142, %v141
    %v172 = vpack.c.b16 %v144, %v143
    %v173 = vpack.c.b16 %v146, %v145
    %v174 = vpack.c.b16 %v148, %v147
    %v175 = vpack.c.b16 %v150, %v149
    %v176 = vpack.c.b16 %v152, %v151
    %v177 = vpack.c.b16 %v154, %v153
    %v178 = vpack.c.b16 %v156, %v155
    %v179 = vpack.c.b16 %v158, %v157
    %v180 = vpack.c.b16 %v160, %v159
    %vm201 = vcmask 523264
    %v203 = vsel %vm201, %v78, 0
    %205 = vmatprep.subr.bf16.mxu0 0
    %206 = vmatpush1.bf16.msra.mxu0 %v168
    %207 = vmatprep.subr.bf16.mxu0 0
    %208 = vmatpush1.bf16.msra.mxu0 %v167
    %209 = vmatprep.subr.bf16.mxu0 0
    %210 = vmatpush1.bf16.msra.mxu0 %v166
    %211 = vmatprep.subr.bf16.mxu0 0
    %212 = vmatpush1.bf16.msra.mxu0 %v165
    %213 = vmatprep.subr.bf16.mxu0 0
    %214 = vmatpush1.bf16.msra.mxu0 %v164
    %215 = vmatprep.subr.bf16.mxu0 0
    %216 = vmatpush1.bf16.msra.mxu0 %v163
    %217 = vmatprep.subr.bf16.mxu0 0
    %218 = vmatpush1.bf16.msra.mxu0 %v162
    %219 = vmatprep.subr.bf16.mxu0 0
    %220 = vmatpush1.bf16.msra.mxu0 %v161
    %221 = vmatprep.subr.bf16.mxu0 0
    %222 = vmatpush2.bf16.msra.mxu0 %v176
    %223 = vmatprep.subr.bf16.mxu0 0
    %224 = vmatpush2.bf16.msra.mxu0 %v175
    %225 = vmatprep.subr.bf16.mxu0 0
    %226 = vmatpush2.bf16.msra.mxu0 %v174
    %227 = vmatprep.subr.bf16.mxu0 0
    %228 = vmatpush2.bf16.msra.mxu0 %v173
    %229 = vmatprep.subr.bf16.mxu0 0
    %230 = vmatpush2.bf16.msra.mxu0 %v172
    %231 = vmatprep.subr.bf16.mxu0 0
    %232 = vmatpush2.bf16.msra.mxu0 %v171
    %233 = vmatprep.subr.bf16.mxu0 0
    %234 = vmatpush2.bf16.msra.mxu0 %v170
    %235 = vmatprep.subr.bf16.mxu0 0
    %236 = vmatpush2.bf16.msra.mxu0 %v169
    %237 = vmatprep.mubr.bf16.mxu0 %v77
    %238 = vmatmul.mubr.bf16.gmra.mxu0 %v76
    %v239 = vpop.f32.mrf.mxu0
    %v240 = vadd.f32 %v69, %v239
    %v241 = vpop.f32.mrf.mxu0
    %v242 = vpop.f32.mrf.mxu0
    %v243 = vpop.f32.mrf.mxu0
    %244 = vdwg.mxu0
    %245 = vmatprep.subr.bf16.mxu0 0
    %246 = vmatpush1.bf16.msra.mxu0 0
    %247 = vmatprep.subr.bf16.mxu0 0
    %248 = vmatpush1.bf16.msra.mxu0 0
    %249 = vmatprep.subr.bf16.mxu0 0
    %250 = vmatpush1.bf16.msra.mxu0 0
    %251 = vmatprep.subr.bf16.mxu0 0
    %252 = vmatpush1.bf16.msra.mxu0 0
    %253 = vmatprep.subr.bf16.mxu0 0
    %254 = vmatpush1.bf16.msra.mxu0 %v180
    %255 = vmatprep.subr.bf16.mxu0 0
    %256 = vmatpush1.bf16.msra.mxu0 %v179
    %257 = vmatprep.subr.bf16.mxu0 0
    %258 = vmatpush1.bf16.msra.mxu0 %v178
    %259 = vmatprep.subr.bf16.mxu0 0
    %260 = vmatpush1.bf16.msra.mxu0 %v177
    %261 = vmatprep.subr.bf16.mxu0 0
    %262 = vmatpush2.bf16.msra.mxu0 0
    %263 = vmatprep.subr.bf16.mxu0 0
    %264 = vmatpush2.bf16.msra.mxu0 0
    %265 = vmatprep.subr.bf16.mxu0 0
    %266 = vmatpush2.bf16.msra.mxu0 0
    %267 = vmatprep.subr.bf16.mxu0 0
    %268 = vmatpush2.bf16.msra.mxu0 0
    %269 = vmatprep.subr.bf16.mxu0 0
    %270 = vmatpush2.bf16.msra.mxu0 0
    %271 = vmatprep.subr.bf16.mxu0 0
    %272 = vmatpush2.bf16.msra.mxu0 0
    %273 = vmatprep.subr.bf16.mxu0 0
    %274 = vmatpush2.bf16.msra.mxu0 0
    %275 = vmatprep.subr.bf16.mxu0 0
    %276 = vmatpush2.bf16.msra.mxu0 0
    %277 = vmatprep.mubr.bf16.mxu0 0
    %278 = vmatmul.mubr.bf16.gmra.mxu0 %v203
    %v279 = vpop.f32.mrf.mxu0
    %v280 = vadd.f32 %v240, %v279
    %v281 = vpop.f32.mrf.mxu0
    %v282 = vpop.f32.mrf.mxu0
    %v283 = vpop.f32.mrf.mxu0
    %284 = vdwg.mxu0
    %v285 = vmax.f32 %v280, 0.0
    %v286 = vpack.c.bf16 %v285, %v285
    %v287 = vld [vmem:[%s3] sm:$0xf]
    %v288 = vld [vmem:[%s3 + $0x4] sm:$0xf]
    %v289 = vld [vmem:[%s3 + $0x8] sm:$0xf]
    %v290 = vld [vmem:[%s3 + $0xc] sm:$0xf]
    %v291 = vld [vmem:[%s3 + $0x10] sm:$0xf]
    %v292 = vld [vmem:[%s3 + $0x14] sm:$0xf]
    %v293 = vld [vmem:[%s3 + $0x18] sm:$0xf]
    %v294 = vld [vmem:[%s3 + $0x1c] sm:$0xf]
    %v295 = vld [vmem:[%s4] sm:$0x1]
    %v297 = vlaneseq
    %v298 = vshrl.u32 %v297, 7
    %v299 = vsub.s32 0, %v298
    %v300 = vrot.slane %v295, %v299
    %v310 = vunpack.c.l.b16 %v287
    %v311 = vunpack.c.l.b16 %v288
    %v312 = vunpack.c.l.b16 %v289
    %v313 = vunpack.c.l.b16 %v290
    %v314 = vunpack.c.l.b16 %v291
    %v315 = vunpack.c.l.b16 %v292
    %v316 = vunpack.c.l.b16 %v293
    %v317 = vunpack.c.l.b16 %v294
    %v318 = vpack.c.b16 %v311, %v310
    %v319 = vpack.c.b16 %v313, %v312
    %v320 = vpack.c.b16 %v315, %v314
    %v321 = vpack.c.b16 %v317, %v316
    %v327 = vsel %vm201, %v286, 0
    %329 = vmatprep.subr.bf16.mxu0 0
    %330 = vmatpush1.bf16.msra.mxu0 0
    %331 = vmatprep.subr.bf16.mxu0 0
    %332 = vmatpush1.bf16.msra.mxu0 0
    %333 = vmatprep.subr.bf16.mxu0 0
    %334 = vmatpush1.bf16.msra.mxu0 0
    %335 = vmatprep.subr.bf16.mxu0 0
    %336 = vmatpush1.bf16.msra.mxu0 0
    %337 = vmatprep.subr.bf16.mxu0 0
    %338 = vmatpush1.bf16.msra.mxu0 %v321
    %339 = vmatprep.subr.bf16.mxu0 0
    %340 = vmatpush1.bf16.msra.mxu0 %v320
    %341 = vmatprep.subr.bf16.mxu0 0
    %342 = vmatpush1.bf16.msra.mxu0 %v319
    %343 = vmatprep.subr.bf16.mxu0 0
    %344 = vmatpush1.bf16.msra.mxu0 %v318
    %345 = vmatprep.subr.bf16.mxu0 0
    %346 = vmatpush2.bf16.msra.mxu0 0
    %347 = vmatprep.subr.bf16.mxu0 0
    %348 = vmatpush2.bf16.msra.mxu0 0
    %349 = vmatprep.subr.bf16.mxu0 0
    %350 = vmatpush2.bf16.msra.mxu0 0
    %351 = vmatprep.subr.bf16.mxu0 0
    %352 = vmatpush2.bf16.msra.mxu0 0
    %353 = vmatprep.subr.bf16.mxu0 0
    %354 = vmatpush2.bf16.msra.mxu0 0
    %355 = vmatprep.subr.bf16.mxu0 0
    %356 = vmatpush2.bf16.msra.mxu0 0
    %357 = vmatprep.subr.bf16.mxu0 0
    %358 = vmatpush2.bf16.msra.mxu0 0
    %359 = vmatprep.subr.bf16.mxu0 0
    %360 = vmatpush2.bf16.msra.mxu0 0
    %361 = vmatprep.mubr.bf16.mxu0 0
    %362 = vmatmul.mubr.bf16.gmra.mxu0 %v327
    %v363 = vpop.f32.mrf.mxu0
    %v364 = vadd.f32 %v300, %v363
    %v365 = vpop.f32.mrf.mxu0
    %v366 = vpop.f32.mrf.mxu0
    %v367 = vpop.f32.mrf.mxu0
    %368 = vdwg.mxu0
    %vm369 = vcmask 80896
    %v370 = vsel %vm369, %v364, -inf
    %371 = vmax.xlane.f32.xlu0 %v370
    %v372 = vpop.xlane.xlu0 %371
    %v373 = vsub.f32 %v364, %v372
    %v374 = vmul.f32 %v373, 1.442695
    %v375 = vpow.pop %v374
    %v376 = vsel %vm369, %v375, 0.0
    %377 = vadd.xlane.f32.xlu0 %v376
    %v378 = vpop.xlane.xlu0 %377
    %v379 = vlog2.pop %v378
    %v380 = vmul.f32 %v379, 0.6931472
    %v381 = vsub.f32 %v373, %v380
    %382 = vst.msk [vmem:[#allocation2] sm:$0xff] %vm369, %v381
    // Predicated region
    $region22: #{cnn_mnist_forward.5} parent=1 // pred_check
      _
    $region23: #{cnn_mnist_forward.5} parent=1 // pred_check_branch
      %384 = sbr.rel (0) target = $region25
    $region24: #{cnn_mnist_forward.5} parent=1 // pred_region
      %s386 = ssub.s32 128, 128
      %387 = vsyncadd [#allocation3], %s386
      %s389 = sshll.u32 [#allocation2], 4
      %s390 = int_to_ptr.vmem [resolvable:$true] %s389
      %392 = dma.vmem_to_hbm [thread:$0]  %s390, 128, %s5, [#allocation3]
    $region25: #{cnn_mnist_forward.5} parent=1 // pred_fallthru
      _
    // Predicated region
    $region26: #{cnn_mnist_forward.5} parent=1 // pred_check
      _
    $region27: #{cnn_mnist_forward.5} parent=1 // pred_check_branch
      %394 = sbr.rel (0) target = $region29
    $region28: #{cnn_mnist_forward.5} parent=1 // pred_region
      %395 = dma.done [#allocation3], 128
    $region29: #{cnn_mnist_forward.5} parent=1 // pred_fallthru
      _
    %396 = vsyncpa [#allocation3], 1

</llo_original>
